<compile_context>
chip_gen: v7x
topology: tpu7x:2x2x1
jax: 0.10.0
libtpu: 0.0.40
codegen_flags: <defaults>
</compile_context>

<pallas_src>
import functools

import jax
import jax.numpy as jnp
from jax import lax
from jax.experimental import pallas as pl
from jax.experimental.pallas import tpu as pltpu

_LANE = 128
_ROW_PAD = 256  # node / hyperedge axes padded to >=256 so tiles never hit 128


@functools.lru_cache(maxsize=None)
def _vmem_limit_bytes():
    """Generation-dependent scoped-VMEM budget (~75% of physical VMEM)."""
    cap = 64 * 1024 * 1024  # conservative fallback (v7x physical size)
    try:
        cap = int(getattr(pltpu.get_tpu_info(), "vmem_capacity_bytes", cap))
    except Exception:
        pass
    return (cap * 3) // 4


def _round_up(x, m):
    return ((x + m - 1) // m) * m


def _pick_tile(dim_pad):
    for t in (512, 256, 128):
        if dim_pad % t == 0:
            return t
    return dim_pad


def _pad2(a, rows, cols):
    return jnp.pad(a, ((0, rows - a.shape[0]), (0, cols - a.shape[1])))


def _i8_to_bf16(t):
    # int8 (0/1) -> bf16 exactly; go via f32 (sitofp) for lowering safety.
    return t.astype(jnp.float32).astype(jnp.bfloat16)


# ---------------------------------------------------------------------------
# mlp: X @ W1 + b1 -> LeakyReLU(0.1), fused with per-tile BatchNorm partial
# statistics (column sum / sum-of-squares over the valid rows only).
# ---------------------------------------------------------------------------
def _mlp_bn_kernel(x_ref, w_ref, b_ref, h_ref, stats_ref, *, slope, n_valid, tn):
    y = jnp.dot(x_ref[...], w_ref[...], preferred_element_type=jnp.float32)
    y = y + b_ref[...]
    y = jnp.where(y > 0, y, slope * y)                      # LeakyReLU(0.1), f32
    h_ref[...] = y.astype(h_ref.dtype)

    d = y.shape[1]
    rows = pl.program_id(0) * tn + lax.broadcasted_iota(jnp.int32, y.shape, 0)
    ym = jnp.where(rows < n_valid, y, 0.0)                  # mask padded rows
    ps = jnp.sum(ym, axis=0, keepdims=True)                 # (1, d) column sum
    pq = jnp.sum(ym * ym, axis=0, keepdims=True)            # (1, d) sum of squares
    r = lax.broadcasted_iota(jnp.int32, (8, d), 0)
    st = jnp.where(r == 0, jnp.broadcast_to(ps, (8, d)),
                   jnp.where(r == 1, jnp.broadcast_to(pq, (8, d)),
                             jnp.zeros((8, d), jnp.float32)))
    stats_ref[...] = st[None]                               # (1, 8, d)


def mlp_linear_bn_stats(x, w, b, *, n_valid, out_dtype=jnp.bfloat16):
    n, k = x.shape
    d = w.shape[1]
    tn = _pick_tile(n)
    grid_n = n // tn
    kern = functools.partial(_mlp_bn_kernel, slope=0.1, n_valid=n_valid, tn=tn)
    return pl.pallas_call(
        kern,
        grid=(grid_n,),
        in_specs=[pl.BlockSpec((tn, k), lambda i: (i, 0)),
                  pl.BlockSpec((k, d), lambda i: (0, 0)),
                  pl.BlockSpec((1, d), lambda i: (0, 0))],
        out_specs=(pl.BlockSpec((tn, d), lambda i: (i, 0)),
                   pl.BlockSpec((1, 8, d), lambda i: (i, 0, 0))),
        out_shape=(jax.ShapeDtypeStruct((n, d), out_dtype),
                   jax.ShapeDtypeStruct((grid_n, 8, d), jnp.float32)),
        compiler_params=pltpu.CompilerParams(
            dimension_semantics=("parallel",),
            vmem_limit_bytes=_vmem_limit_bytes()),
        cost_estimate=pl.CostEstimate(
            flops=2 * n * k * d, transcendentals=0,
            bytes_accessed=2 * n * k + 2 * k * d + 2 * n * d),
    )(x, w, b)


# ---------------------------------------------------------------------------
# BatchNorm affine (per-column scale/shift) + bf16 cast; padded rows -> 0.
# ---------------------------------------------------------------------------
def _scale_shift_kernel(h_ref, s_ref, t_ref, o_ref, *, n_valid, tn):
    y = h_ref[...].astype(jnp.float32) * s_ref[...] + t_ref[...]
    rows = pl.program_id(0) * tn + lax.broadcasted_iota(jnp.int32, y.shape, 0)
    y = jnp.where(rows < n_valid, y, 0.0)       # keep padded node rows exactly 0
    o_ref[...] = y.astype(o_ref.dtype)


def scale_shift(h, s, t, *, n_valid, out_dtype):
    n, d = h.shape
    tn = _pick_tile(n)
    kern = functools.partial(_scale_shift_kernel, n_valid=n_valid, tn=tn)
    return pl.pallas_call(
        kern,
        grid=(n // tn,),
        in_specs=[pl.BlockSpec((tn, d), lambda i: (i, 0)),
                  pl.BlockSpec((1, d), lambda i: (0, 0)),
                  pl.BlockSpec((1, d), lambda i: (0, 0))],
        out_specs=pl.BlockSpec((tn, d), lambda i: (i, 0)),
        out_shape=jax.ShapeDtypeStruct((n, d), out_dtype),
        compiler_params=pltpu.CompilerParams(
            dimension_semantics=("parallel",),
            vmem_limit_bytes=_vmem_limit_bytes()),
    )(h, s, t)


# ---------------------------------------------------------------------------
# Head: y = leaky_relu(x) @ W2 + b2   (leaky slope 0.01, applied in bf16)
# ---------------------------------------------------------------------------
def _head_kernel(x_ref, w_ref, b_ref, o_ref, *, pre_slope):
    x = x_ref[...]
    if pre_slope is not None:
        x = jnp.where(x > 0, x, pre_slope * x)       # bf16 VPU elementwise
    y = jnp.dot(x.astype(w_ref.dtype), w_ref[...],
                preferred_element_type=jnp.float32) + b_ref[...]
    o_ref[...] = y.astype(o_ref.dtype)


def head_linear(x, w, b, *, out_dtype, pre_slope):
    n, k = x.shape
    o = w.shape[1]
    tn = _pick_tile(n)
    kern = functools.partial(_head_kernel, pre_slope=pre_slope)
    return pl.pallas_call(
        kern,
        grid=(n // tn,),
        in_specs=[pl.BlockSpec((tn, k), lambda i: (i, 0)),
                  pl.BlockSpec((k, o), lambda i: (0, 0)),
                  pl.BlockSpec((1, o), lambda i: (0, 0))],
        out_specs=pl.BlockSpec((tn, o), lambda i: (i, 0)),
        out_shape=jax.ShapeDtypeStruct((n, o), out_dtype),
        compiler_params=pltpu.CompilerParams(
            dimension_semantics=("parallel",),
            vmem_limit_bytes=_vmem_limit_bytes()),
        cost_estimate=pl.CostEstimate(
            flops=2 * n * k * o, transcendentals=0,
            bytes_accessed=2 * (n * k + k * o) + 4 * n * o),
    )(x, w, b)


# ---------------------------------------------------------------------------
# UniSAGE edge aggregation:  Xe[e] = (1/deg_e) * sum_{v in e} X[v]
#   Xe = (H^T @ X) * inv_de, H^T pre-transposed int8 in HBM, cast to bf16 in
#   the kernel.  grid = (edge tiles [parallel], node tiles [arbitrary]).
#   X is VMEM-resident (full-array block) when it fits the per-chip budget.
# ---------------------------------------------------------------------------
def _edge_agg_kernel(ht_ref, x_ref, invde_ref, xe_ref, acc_ref, *, tn, x_resident):
    j = pl.program_id(1)

    @pl.when(j == 0)
    def _():
        acc_ref[...] = jnp.zeros_like(acc_ref)

    ht = _i8_to_bf16(ht_ref[...])
    if x_resident:
        xt = x_ref[pl.ds(pl.multiple_of(j * tn, tn), tn), :]
    else:
        xt = x_ref[...]
    acc_ref[...] += jnp.dot(ht, xt, preferred_element_type=jnp.float32)

    @pl.when(j == pl.num_programs(1) - 1)
    def _():
        xe_ref[...] = (acc_ref[...] * invde_ref[...]).astype(xe_ref.dtype)


def edge_agg(ht_i8, x, inv_de, *, out_dtype=jnp.bfloat16):
    m, n = ht_i8.shape
    d = x.shape[1]
    tm, tn = _pick_tile(m), _pick_tile(n)
    vlim = _vmem_limit_bytes()
    x_resident = (2 * n * d * 2) <= (vlim // 3)      # double-buffered full X
    if x_resident:
        x_spec = pl.BlockSpec((n, d), lambda i, j: (0, 0))
        x_read = n * d * 2
    else:
        x_spec = pl.BlockSpec((tn, d), lambda i, j: (j, 0))
        x_read = (m // tm) * n * d * 2
    kern = functools.partial(_edge_agg_kernel, tn=tn, x_resident=x_resident)
    return pl.pallas_call(
        kern,
        grid=(m // tm, n // tn),
        in_specs=[pl.BlockSpec((tm, tn), lambda i, j: (i, j)),   # H^T row-major
                  x_spec,
                  pl.BlockSpec((tm, 1), lambda i, j: (i, 0))],
        out_specs=pl.BlockSpec((tm, d), lambda i, j: (i, 0)),
        out_shape=jax.ShapeDtypeStruct((m, d), out_dtype),
        scratch_shapes=[pltpu.VMEM((tm, d), jnp.float32)],
        compiler_params=pltpu.CompilerParams(
            dimension_semantics=("parallel", "arbitrary"),
            vmem_limit_bytes=vlim),
        cost_estimate=pl.CostEstimate(
            flops=2 * n * m * d, transcendentals=0,
            bytes_accessed=n * m + x_read + 2 * m * d + 4 * m),
    )(ht_i8, x, inv_de)


# ---------------------------------------------------------------------------
# UniSAGE node update:  Y = PReLU( (X + H @ Xe) @ W + b )
#   grid = (node tiles [parallel], edge tiles [arbitrary, contraction])
#   Xe is VMEM-resident (full-array block) when it fits.
# ---------------------------------------------------------------------------
def _node_update_kernel(alpha_ref, x_ref, h_ref, xe_ref, w_ref, b_ref,
                        y_ref, acc_ref, *, tm, xe_resident, apply_act):
    j = pl.program_id(1)

    @pl.when(j == 0)
    def _():
        acc_ref[...] = jnp.zeros_like(acc_ref)

    hb = _i8_to_bf16(h_ref[...])
    if xe_resident:
        xe = xe_ref[pl.ds(pl.multiple_of(j * tm, tm), tm), :]
    else:
        xe = xe_ref[...]
    acc_ref[...] += jnp.dot(hb, xe, preferred_element_type=jnp.float32)

    @pl.when(j == pl.num_programs(1) - 1)
    def _():
        z = (x_ref[...].astype(jnp.float32) + acc_ref[...]).astype(w_ref.dtype)
        y = jnp.dot(z, w_ref[...], preferred_element_type=jnp.float32) + b_ref[...]
        if apply_act:                            # PReLU, single learned alpha
            a = alpha_ref[0]
            y = jnp.where(y > 0, y, a * y)
        y_ref[...] = y.astype(y_ref.dtype)


def node_update(x, h_i8, xe, w, b, alpha, *, apply_act, out_dtype=jnp.bfloat16):
    n, m = h_i8.shape
    d = x.shape[1]
    tn, tm = _pick_tile(n), _pick_tile(m)
    vlim = _vmem_limit_bytes()
    xe_resident = (2 * m * d * 2) <= (vlim // 3)
    if xe_resident:
        xe_spec = pl.BlockSpec((m, d), lambda i, j: (0, 0))
        xe_read = m * d * 2
    else:
        xe_spec = pl.BlockSpec((tm, d), lambda i, j: (j, 0))
        xe_read = (n // tn) * m * d * 2
    kern = functools.partial(_node_update_kernel, tm=tm,
                             xe_resident=xe_resident, apply_act=apply_act)
    return pl.pallas_call(
        kern,
        grid=(n // tn, m // tm),
        in_specs=[pl.BlockSpec(memory_space=pltpu.MemorySpace.SMEM),  # alpha
                  pl.BlockSpec((tn, d), lambda i, j: (i, 0)),
                  pl.BlockSpec((tn, tm), lambda i, j: (i, j)),        # H int8
                  xe_spec,
                  pl.BlockSpec((d, d), lambda i, j: (0, 0)),
                  pl.BlockSpec((1, d), lambda i, j: (0, 0))],
        out_specs=pl.BlockSpec((tn, d), lambda i, j: (i, 0)),
        out_shape=jax.ShapeDtypeStruct((n, d), out_dtype),
        scratch_shapes=[pltpu.VMEM((tn, d), jnp.float32)],
        compiler_params=pltpu.CompilerParams(
            dimension_semantics=("parallel", "arbitrary"),
            vmem_limit_bytes=vlim),
        cost_estimate=pl.CostEstimate(
            flops=2 * n * m * d + 2 * n * d * d, transcendentals=0,
            bytes_accessed=n * m + xe_read + 4 * n * d + 2 * d * d),
    )(alpha, x, h_i8, xe, w, b)


# ---------------------------------------------------------------------------
# Full Predictor_uniSAGE.forward(H, he_rep, x) -> (loss, x_prime, enc)
# ---------------------------------------------------------------------------
def predictor_unisage_forward(H_dense, he_rep, x, params):
    n, in_dim = he_rep.shape
    m = H_dense.shape[1]
    hidden = params["W1"].shape[1]
    out_dim = params["W2"].shape[1]

    n_pad = _round_up(n, _ROW_PAD)
    m_pad = _round_up(m, _ROW_PAD)
    i_pad = _round_up(in_dim, _LANE)
    d_pad = _round_up(hidden, _LANE)
    o_pad = _round_up(out_dim, _LANE)

    # Incidence in HBM as int8 (0/1) plus a pre-transposed copy; both reused by
    # every layer, cast to bf16 tile-by-tile inside the kernels.
    h_i8 = _pad2(H_dense, n_pad, m_pad).astype(jnp.int8)
    ht_i8 = _pad2(H_dense.T, m_pad, n_pad).astype(jnp.int8)
    he_bf = _pad2(he_rep, n_pad, i_pad).astype(jnp.bfloat16)

    deg_e = jnp.maximum(jnp.sum(H_dense, axis=0), 1.0)
    inv_de = jnp.zeros((m_pad, 1), jnp.float32).at[:m, 0].set(1.0 / deg_e)

    w1 = _pad2(params["W1"].astype(jnp.bfloat16), i_pad, d_pad)
    b1 = _pad2(params["b1"].astype(jnp.float32).reshape(1, -1), 1, d_pad)

    # --- self.mlp: Linear -> LeakyReLU(0.1) -> BatchNorm1d -------------------
    # BN partial stats fused into the Pallas kernel; tiny cross-tile reduction
    # and the per-column scale/shift are XLA glue.
    h_pre, stats = mlp_linear_bn_stats(he_bf, w1, b1, n_valid=n)
    stats = jnp.sum(stats, axis=0)                       # (8, d_pad)
    mu = stats[0, :hidden] / n
    var = jnp.maximum(stats[1, :hidden] / n - mu * mu, 0.0)  # biased var (train)
    scale = params["gamma"].reshape(-1) * lax.rsqrt(var + 1e-5)
    shift = params["beta"].reshape(-1) - mu * scale
    scale_p = jnp.zeros((1, d_pad), jnp.float32).at[0, :hidden].set(scale)
    shift_p = jnp.zeros((1, d_pad), jnp.float32).at[0, :hidden].set(shift)
    X = scale_shift(h_pre, scale_p, shift_p, n_valid=n, out_dtype=jnp.bfloat16)

    # --- UniGNN (UniSAGE) layer stack ----------------------------------------
    alpha = jnp.asarray(params["alpha"], jnp.float32).reshape((1,))
    nl = len(params["Wl"])
    for l in range(nl):
        wl = _pad2(params["Wl"][l].astype(jnp.bfloat16), d_pad, d_pad)
        bl = _pad2(params["bl"][l].astype(jnp.float32).reshape(1, -1), 1, d_pad)
        xe = edge_agg(ht_i8, X, inv_de)                  # mean over edge members
        X = node_update(X, h_i8, xe, wl, bl, alpha,
                        apply_act=(l < nl - 1))          # sum over incident edges
    enc_pad = X

    # --- head: Linear(leaky_relu(enc)) + MSE ---------------------------------
    w2 = _pad2(params["W2"].astype(jnp.bfloat16), d_pad, o_pad)
    b2 = _pad2(params["b2"].astype(jnp.float32).reshape(1, -1), 1, o_pad)
    xp_pad = head_linear(enc_pad, w2, b2, out_dtype=jnp.float32,
                         pre_slope=0.01)                 # F.leaky_relu default
    x_prime = xp_pad[:n, :out_dim]
    enc = enc_pad[:n, :hidden].astype(jnp.float32)
    diff = x_prime - x
    loss = jnp.mean(diff * diff)                         # nn.MSELoss (mean)
    return loss, x_prime, enc


if __name__ == "__main__":
    key = jax.random.PRNGKey(0)
    N, M = 16, 8                        # nodes, hyperedges
    in_dim, hidden_dim, out_dim, num_layers = 8, 32, 8, 2

    ks = jax.random.split(key, 8 + num_layers)

    he_rep = jax.random.normal(ks[0], (N, in_dim), jnp.float32)
    x_tgt = jax.random.normal(ks[1], (N, out_dim), jnp.float32)

    # sparse incidence H -> dense [N, M]; (V, E) = H.indices() are its nonzeros
    H_dense = (jax.random.uniform(ks[2], (N, M)) < 0.3).astype(jnp.float32)
    H_dense = H_dense.at[jnp.arange(M) % N, jnp.arange(M)].set(1.0)  # no empty edge

    params = {
        "W1": 0.1 * jax.random.normal(ks[3], (in_dim, hidden_dim), jnp.float32),
        "b1": jnp.zeros((1, hidden_dim), jnp.float32),
        "gamma": jnp.ones((1, hidden_dim), jnp.float32),
        "beta": jnp.zeros((1, hidden_dim), jnp.float32),
        "Wl": [0.1 * jax.random.normal(ks[4 + l], (hidden_dim, hidden_dim), jnp.float32)
               for l in range(num_layers)],
        "bl": [jnp.zeros((1, hidden_dim), jnp.float32) for _ in range(num_layers)],
        "alpha": jnp.full((1,), 0.25, jnp.float32),       # PReLU default init
        "W2": 0.1 * jax.random.normal(ks[4 + num_layers], (hidden_dim, out_dim), jnp.float32),
        "b2": jnp.zeros((1, out_dim), jnp.float32),
    }

    fwd = jax.jit(predictor_unisage_forward)
    loss, x_prime, enc = fwd(H_dense, he_rep, x_tgt, params)
    jax.block_until_ready((loss, x_prime, enc))

    assert x_prime.shape == (N, out_dim)
    assert enc.shape == (N, hidden_dim)
    assert loss.shape == ()
    assert bool(jnp.isfinite(loss))

    print("KERNEL_OK")
</pallas_src>

<mosaic_0001>
module attributes {stable_mosaic.version = 11 : i64} {
  func.func @_scale_shift_kernel(%arg0: i32, %arg1: memref<256x128xbf16, #tpu.memory_space<vmem>>, %arg2: memref<1x128xf32, #tpu.memory_space<vmem>>, %arg3: memref<1x128xf32, #tpu.memory_space<vmem>>, %arg4: memref<256x128xbf16, #tpu.memory_space<vmem>>) attributes {dimension_semantics = [#tpu.dimension_semantics<parallel>], iteration_bounds = array<i64: 1>, scalar_prefetch = 0 : i64, scratch_operands = 0 : i64, tpu.core_type = #tpu.core_type<tc>, window_params = [{transform_indices = @transform_0, window_bounds = array<i64: 256, 128>}, {pipeline_mode = #tpu.pipeline_mode<synchronous>, transform_indices = @transform_1, window_bounds = array<i64: 1, 128>}, {pipeline_mode = #tpu.pipeline_mode<synchronous>, transform_indices = @transform_2, window_bounds = array<i64: 1, 128>}, {transform_indices = @transform_3, window_bounds = array<i64: 256, 128>}]} {
    %c0 = arith.constant 0 : index
    %c0_0 = arith.constant 0 : index
    %0 = vector.load %arg1[%c0, %c0_0] : memref<256x128xbf16, #tpu.memory_space<vmem>>, vector<256x128xbf16>
    %1 = arith.extf %0 : vector<256x128xbf16> to vector<256x128xf32>
    %c0_1 = arith.constant 0 : index
    %c0_2 = arith.constant 0 : index
    %2 = vector.load %arg2[%c0_1, %c0_2] : memref<1x128xf32, #tpu.memory_space<vmem>>, vector<1x128xf32>
    %3 = vector.broadcast %2 : vector<1x128xf32> to vector<256x128xf32>
    %4 = arith.mulf %1, %3 : vector<256x128xf32>
    %c0_3 = arith.constant 0 : index
    %c0_4 = arith.constant 0 : index
    %5 = vector.load %arg3[%c0_3, %c0_4] : memref<1x128xf32, #tpu.memory_space<vmem>>, vector<1x128xf32>
    %6 = vector.broadcast %5 : vector<1x128xf32> to vector<256x128xf32>
    %7 = arith.addf %4, %6 : vector<256x128xf32>
    %c256_i32 = arith.constant 256 : i32
    %8 = arith.muli %arg0, %c256_i32 : i32
    %9 = tpu.iota {dimensions = array<i32: 0>} : vector<256x128xi32>
    %10 = vector.broadcast %8 : i32 to vector<256x128xi32>
    %11 = arith.addi %10, %9 : vector<256x128xi32>
    %c16_i32 = arith.constant 16 : i32
    %12 = vector.broadcast %c16_i32 : i32 to vector<256x128xi32>
    %13 = arith.cmpi slt, %11, %12 : vector<256x128xi32>
    %cst = arith.constant 0.000000e+00 : f32
    %14 = vector.broadcast %cst : f32 to vector<256x128xf32>
    %15 = arith.select %13, %7, %14 : vector<256x128xi1>, vector<256x128xf32>
    %16 = arith.truncf %15 : vector<256x128xf32> to vector<256x128xbf16>
    %c0_5 = arith.constant 0 : index
    %c0_6 = arith.constant 0 : index
    %17 = vector.load %arg4[%c0_5, %c0_6] : memref<256x128xbf16, #tpu.memory_space<vmem>>, vector<256x128xbf16>
    tpu.vector_store %arg4[%c0_5, %c0_6], %16 {strides = array<i32>} : memref<256x128xbf16, #tpu.memory_space<vmem>>, vector<256x128xbf16>,
    return
  }
  func.func @transform_0(%arg0: i32) -> (i32, i32) {
    %c0_i32 = arith.constant 0 : i32
    %c0_i32_0 = arith.constant 0 : i32
    return %arg0, %c0_i32 : i32, i32
  }
  func.func @transform_1(%arg0: i32) -> (i32, i32) {
    %c0_i32 = arith.constant 0 : i32
    %c0_i32_0 = arith.constant 0 : i32
    %c0_i32_1 = arith.constant 0 : i32
    return %c0_i32, %c0_i32_0 : i32, i32
  }
  func.func @transform_2(%arg0: i32) -> (i32, i32) {
    %c0_i32 = arith.constant 0 : i32
    %c0_i32_0 = arith.constant 0 : i32
    %c0_i32_1 = arith.constant 0 : i32
    return %c0_i32, %c0_i32_0 : i32, i32
  }
  func.func @transform_3(%arg0: i32) -> (i32, i32) {
    %c0_i32 = arith.constant 0 : i32
    %c0_i32_0 = arith.constant 0 : i32
    return %arg0, %c0_i32 : i32, i32
  }
}

module attributes {stable_mosaic.version = 11 : i64} {
  func.func @_mlp_bn_kernel(%arg0: i32, %arg1: memref<256x128xbf16, #tpu.memory_space<vmem>>, %arg2: memref<128x128xbf16, #tpu.memory_space<vmem>>, %arg3: memref<1x128xf32, #tpu.memory_space<vmem>>, %arg4: memref<256x128xbf16, #tpu.memory_space<vmem>>, %arg5: memref<1x8x128xf32, #tpu.memory_space<vmem>>) attributes {dimension_semantics = [#tpu.dimension_semantics<parallel>], iteration_bounds = array<i64: 1>, scalar_prefetch = 0 : i64, scratch_operands = 0 : i64, tpu.core_type = #tpu.core_type<tc>, window_params = [{transform_indices = @transform_0, window_bounds = array<i64: 256, 128>}, {pipeline_mode = #tpu.pipeline_mode<synchronous>, transform_indices = @transform_1, window_bounds = array<i64: 128, 128>}, {pipeline_mode = #tpu.pipeline_mode<synchronous>, transform_indices = @transform_2, window_bounds = array<i64: 1, 128>}, {transform_indices = @transform_3, window_bounds = array<i64: 256, 128>}, {transform_indices = @transform_4, window_bounds = array<i64: 1, 8, 128>}]} {
    %c0 = arith.constant 0 : index
    %c0_0 = arith.constant 0 : index
    %0 = vector.load %arg1[%c0, %c0_0] : memref<256x128xbf16, #tpu.memory_space<vmem>>, vector<256x128xbf16>
    %c0_1 = arith.constant 0 : index
    %c0_2 = arith.constant 0 : index
    %1 = vector.load %arg2[%c0_1, %c0_2] : memref<128x128xbf16, #tpu.memory_space<vmem>>, vector<128x128xbf16>
    %cst = arith.constant dense<0.000000e+00> : vector<256x128xf32>
    %2 = tpu.matmul %0, %1, %cst {dimension_numbers = #tpu.dot_dimension_numbers<[1], [0], [0], [1], [0, 0, 1, 1], [], []>} : vector<256x128xbf16>, vector<128x128xbf16>, vector<256x128xf32> -> vector<256x128xf32>
    %c0_3 = arith.constant 0 : index
    %c0_4 = arith.constant 0 : index
    %3 = vector.load %arg3[%c0_3, %c0_4] : memref<1x128xf32, #tpu.memory_space<vmem>>, vector<1x128xf32>
    %4 = vector.broadcast %3 : vector<1x128xf32> to vector<256x128xf32>
    %5 = arith.addf %2, %4 : vector<256x128xf32>
    %cst_5 = arith.constant 0.000000e+00 : f32
    %6 = vector.broadcast %cst_5 : f32 to vector<256x128xf32>
    %7 = arith.cmpf ogt, %5, %6 : vector<256x128xf32>
    %cst_6 = arith.constant 1.000000e-01 : f32
    %8 = vector.broadcast %cst_6 : f32 to vector<256x128xf32>
    %9 = arith.mulf %8, %5 : vector<256x128xf32>
    %10 = arith.select %7, %5, %9 : vector<256x128xi1>, vector<256x128xf32>
    %11 = arith.truncf %10 : vector<256x128xf32> to vector<256x128xbf16>
    %c0_7 = arith.constant 0 : index
    %c0_8 = arith.constant 0 : index
    %12 = vector.load %arg4[%c0_7, %c0_8] : memref<256x128xbf16, #tpu.memory_space<vmem>>, vector<256x128xbf16>
    tpu.vector_store %arg4[%c0_7, %c0_8], %11 {strides = array<i32>} : memref<256x128xbf16, #tpu.memory_space<vmem>>, vector<256x128xbf16>,
    %c256_i32 = arith.constant 256 : i32
    %13 = arith.muli %arg0, %c256_i32 : i32
    %14 = tpu.iota {dimensions = array<i32: 0>} : vector<256x128xi32>
    %15 = vector.broadcast %13 : i32 to vector<256x128xi32>
    %16 = arith.addi %15, %14 : vector<256x128xi32>
    %c16_i32 = arith.constant 16 : i32
    %17 = vector.broadcast %c16_i32 : i32 to vector<256x128xi32>
    %18 = arith.cmpi slt, %16, %17 : vector<256x128xi32>
    %cst_9 = arith.constant 0.000000e+00 : f32
    %19 = vector.broadcast %cst_9 : f32 to vector<256x128xf32>
    %20 = arith.select %18, %10, %19 : vector<256x128xi1>, vector<256x128xf32>
    %cst_10 = arith.constant dense<0.000000e+00> : vector<128xf32>
    %21 = vector.multi_reduction <add>, %20, %cst_10 [0] : vector<256x128xf32> to vector<128xf32>
    %22 = vector.shape_cast %21 : vector<128xf32> to vector<1x128xf32>
    %23 = arith.mulf %20, %20 : vector<256x128xf32>
    %cst_11 = arith.constant dense<0.000000e+00> : vector<128xf32>
    %24 = vector.multi_reduction <add>, %23, %cst_11 [0] : vector<256x128xf32> to vector<128xf32>
    %25 = vector.shape_cast %24 : vector<128xf32> to vector<1x128xf32>
    %26 = tpu.iota {dimensions = array<i32: 0>} : vector<8x128xi32>
    %c0_i32 = arith.constant 0 : i32
    %27 = vector.broadcast %c0_i32 : i32 to vector<8x128xi32>
    %28 = arith.cmpi eq, %26, %27 : vector<8x128xi32>
    %29 = vector.shape_cast %22 : vector<1x128xf32> to vector<1x128xf32>
    %30 = vector.broadcast %29 : vector<1x128xf32> to vector<8x128xf32>
    %c1_i32 = arith.constant 1 : i32
    %31 = vector.broadcast %c1_i32 : i32 to vector<8x128xi32>
    %32 = arith.cmpi eq, %26, %31 : vector<8x128xi32>
    %33 = vector.shape_cast %25 : vector<1x128xf32> to vector<1x128xf32>
    %34 = vector.broadcast %33 : vector<1x128xf32> to vector<8x128xf32>
    %cst_12 = arith.constant 0.000000e+00 : f32
    %35 = vector.broadcast %cst_12 : f32 to vector<8x128xf32>
    %36 = arith.select %32, %34, %35 : vector<8x128xi1>, vector<8x128xf32>
    %37 = arith.select %28, %30, %36 : vector<8x128xi1>, vector<8x128xf32>
    %38 = vector.shape_cast %37 : vector<8x128xf32> to vector<1x8x128xf32>
    %c0_13 = arith.constant 0 : index
    %c0_14 = arith.constant 0 : index
    %c0_15 = arith.constant 0 : index
    %39 = vector.load %arg5[%c0_13, %c0_14, %c0_15] : memref<1x8x128xf32, #tpu.memory_space<vmem>>, vector<1x8x128xf32>
    tpu.vector_store %arg5[%c0_13, %c0_14, %c0_15], %38 {strides = array<i32>} : memref<1x8x128xf32, #tpu.memory_space<vmem>>, vector<1x8x128xf32>,
    return
  }
  func.func @transform_0(%arg0: i32) -> (i32, i32) {
    %c0_i32 = arith.constant 0 : i32
    %c0_i32_0 = arith.constant 0 : i32
    return %arg0, %c0_i32 : i32, i32
  }
  func.func @transform_1(%arg0: i32) -> (i32, i32) {
    %c0_i32 = arith.constant 0 : i32
    %c0_i32_0 = arith.constant 0 : i32
    %c0_i32_1 = arith.constant 0 : i32
    return %c0_i32, %c0_i32_0 : i32, i32
  }
  func.func @transform_2(%arg0: i32) -> (i32, i32) {
    %c0_i32 = arith.constant 0 : i32
    %c0_i32_0 = arith.constant 0 : i32
    %c0_i32_1 = arith.constant 0 : i32
    return %c0_i32, %c0_i32_0 : i32, i32
  }
  func.func @transform_3(%arg0: i32) -> (i32, i32) {
    %c0_i32 = arith.constant 0 : i32
    %c0_i32_0 = arith.constant 0 : i32
    return %arg0, %c0_i32 : i32, i32
  }
  func.func @transform_4(%arg0: i32) -> (i32, i32, i32) {
    %c0_i32 = arith.constant 0 : i32
    %c0_i32_0 = arith.constant 0 : i32
    %c0_i32_1 = arith.constant 0 : i32
    return %arg0, %c0_i32, %c0_i32_0 : i32, i32, i32
  }
}

module attributes {stable_mosaic.version = 11 : i64} {
  func.func @_edge_agg_kernel(%arg0: i32, %arg1: i32, %arg2: memref<256x256xi8, #tpu.memory_space<vmem>>, %arg3: memref<256x128xbf16, #tpu.memory_space<vmem>>, %arg4: memref<256x1xf32, #tpu.memory_space<vmem>>, %arg5: memref<256x128xbf16, #tpu.memory_space<vmem>>, %arg6: memref<256x128xf32, #tpu.memory_space<vmem>>) attributes {dimension_semantics = [#tpu.dimension_semantics<parallel>, #tpu.dimension_semantics<arbitrary>], iteration_bounds = array<i64: 1, 1>, scalar_prefetch = 0 : i64, scratch_operands = 1 : i64, tpu.core_type = #tpu.core_type<tc>, window_params = [{transform_indices = @transform_0, window_bounds = array<i64: 256, 256>}, {pipeline_mode = #tpu.pipeline_mode<synchronous>, transform_indices = @transform_1, window_bounds = array<i64: 256, 128>}, {transform_indices = @transform_2, window_bounds = array<i64: 256, 1>}, {transform_indices = @transform_3, window_bounds = array<i64: 256, 128>}]} {
    %c0_i32 = arith.constant 0 : i32
    %0 = arith.cmpi eq, %arg1, %c0_i32 : i32
    %1 = arith.extui %0 : i1 to i32
    %c0_i32_0 = arith.constant 0 : i32
    %2 = arith.cmpi ne, %1, %c0_i32_0 : i32
    scf.if %2 {
      %cst_9 = arith.constant 0.000000e+00 : f32
      %17 = vector.broadcast %cst_9 : f32 to vector<256x128xf32>
      %c0_10 = arith.constant 0 : index
      %c0_11 = arith.constant 0 : index
      %18 = vector.load %arg6[%c0_10, %c0_11] : memref<256x128xf32, #tpu.memory_space<vmem>>, vector<256x128xf32>
      tpu.vector_store %arg6[%c0_10, %c0_11], %17 {strides = array<i32>} : memref<256x128xf32, #tpu.memory_space<vmem>>, vector<256x128xf32>,
    } else {
    }
    %c0 = arith.constant 0 : index
    %c0_1 = arith.constant 0 : index
    %3 = vector.load %arg2[%c0, %c0_1] : memref<256x256xi8, #tpu.memory_space<vmem>>, vector<256x256xi8>
    %4 = arith.sitofp %3 : vector<256x256xi8> to vector<256x256xf32>
    %5 = arith.truncf %4 : vector<256x256xf32> to vector<256x256xbf16>
    %c256_i32 = arith.constant 256 : i32
    %6 = arith.muli %arg1, %c256_i32 : i32
    %7 = tpu.assume_multiple %6, 256 : i32
    %8 = arith.index_cast %7 : i32 to index
    %c0_2 = arith.constant 0 : index
    %9 = vector.load %arg3[%8, %c0_2] : memref<256x128xbf16, #tpu.memory_space<vmem>>, vector<256x128xbf16>
    %c0_3 = arith.constant 0 : index
    %c0_4 = arith.constant 0 : index
    %10 = vector.load %arg6[%c0_3, %c0_4] : memref<256x128xf32, #tpu.memory_space<vmem>>, vector<256x128xf32>
    %cst = arith.constant dense<0.000000e+00> : vector<256x128xf32>
    %11 = tpu.matmul %5, %9, %cst {dimension_numbers = #tpu.dot_dimension_numbers<[1], [0], [0], [1], [0, 0, 1, 1], [], []>} : vector<256x256xbf16>, vector<256x128xbf16>, vector<256x128xf32> -> vector<256x128xf32>
    %12 = arith.addf %10, %11 : vector<256x128xf32>
    %c0_5 = arith.constant 0 : index
    %c0_6 = arith.constant 0 : index
    %13 = vector.load %arg6[%c0_5, %c0_6] : memref<256x128xf32, #tpu.memory_space<vmem>>, vector<256x128xf32>
    tpu.vector_store %arg6[%c0_5, %c0_6], %12 {strides = array<i32>} : memref<256x128xf32, #tpu.memory_space<vmem>>, vector<256x128xf32>,
    %c0_i32_7 = arith.constant 0 : i32
    %14 = arith.cmpi eq, %arg1, %c0_i32_7 : i32
    %15 = arith.extui %14 : i1 to i32
    %c0_i32_8 = arith.constant 0 : i32
    %16 = arith.cmpi ne, %15, %c0_i32_8 : i32
    scf.if %16 {
      %c0_9 = arith.constant 0 : index
      %c0_10 = arith.constant 0 : index
      %17 = vector.load %arg6[%c0_9, %c0_10] : memref<256x128xf32, #tpu.memory_space<vmem>>, vector<256x128xf32>
      %c0_11 = arith.constant 0 : index
      %c0_12 = arith.constant 0 : index
      %18 = vector.load %arg4[%c0_11, %c0_12] : memref<256x1xf32, #tpu.memory_space<vmem>>, vector<256x1xf32>
      %19 = vector.broadcast %18 : vector<256x1xf32> to vector<256x128xf32>
      %20 = arith.mulf %17, %19 : vector<256x128xf32>
      %21 = arith.truncf %20 : vector<256x128xf32> to vector<256x128xbf16>
      %c0_13 = arith.constant 0 : index
      %c0_14 = arith.constant 0 : index
      %22 = vector.load %arg5[%c0_13, %c0_14] : memref<256x128xbf16, #tpu.memory_space<vmem>>, vector<256x128xbf16>
      tpu.vector_store %arg5[%c0_13, %c0_14], %21 {strides = array<i32>} : memref<256x128xbf16, #tpu.memory_space<vmem>>, vector<256x128xbf16>,
    } else {
    }
    return
  }
  func.func @transform_0(%arg0: i32, %arg1: i32) -> (i32, i32) {
    %c0_i32 = arith.constant 0 : i32
    return %arg0, %arg1 : i32, i32
  }
  func.func @transform_1(%arg0: i32, %arg1: i32) -> (i32, i32) {
    %c0_i32 = arith.constant 0 : i32
    %c0_i32_0 = arith.constant 0 : i32
    %c0_i32_1 = arith.constant 0 : i32
    return %c0_i32, %c0_i32_0 : i32, i32
  }
  func.func @transform_2(%arg0: i32, %arg1: i32) -> (i32, i32) {
    %c0_i32 = arith.constant 0 : i32
    %c0_i32_0 = arith.constant 0 : i32
    return %arg0, %c0_i32 : i32, i32
  }
  func.func @transform_3(%arg0: i32, %arg1: i32) -> (i32, i32) {
    %c0_i32 = arith.constant 0 : i32
    %c0_i32_0 = arith.constant 0 : i32
    return %arg0, %c0_i32 : i32, i32
  }
}

module attributes {stable_mosaic.version = 11 : i64} {
  func.func @_node_update_kernel(%arg0: i32, %arg1: i32, %arg2: memref<1xf32, #tpu.memory_space<smem>>, %arg3: memref<256x128xbf16, #tpu.memory_space<vmem>>, %arg4: memref<256x256xi8, #tpu.memory_space<vmem>>, %arg5: memref<256x128xbf16, #tpu.memory_space<vmem>>, %arg6: memref<128x128xbf16, #tpu.memory_space<vmem>>, %arg7: memref<1x128xf32, #tpu.memory_space<vmem>>, %arg8: memref<256x128xbf16, #tpu.memory_space<vmem>>, %arg9: memref<256x128xf32, #tpu.memory_space<vmem>>) attributes {dimension_semantics = [#tpu.dimension_semantics<parallel>, #tpu.dimension_semantics<arbitrary>], iteration_bounds = array<i64: 1, 1>, scalar_prefetch = 0 : i64, scratch_operands = 1 : i64, tpu.core_type = #tpu.core_type<tc>, window_params = [{transform_indices = @transform_0, window_bounds = array<i64: 1>}, {transform_indices = @transform_1, window_bounds = array<i64: 256, 128>}, {transform_indices = @transform_2, window_bounds = array<i64: 256, 256>}, {pipeline_mode = #tpu.pipeline_mode<synchronous>, transform_indices = @transform_3, window_bounds = array<i64: 256, 128>}, {pipeline_mode = #tpu.pipeline_mode<synchronous>, transform_indices = @transform_4, window_bounds = array<i64: 128, 128>}, {pipeline_mode = #tpu.pipeline_mode<synchronous>, transform_indices = @transform_5, window_bounds = array<i64: 1, 128>}, {transform_indices = @transform_6, window_bounds = array<i64: 256, 128>}]} {
    %c0_i32 = arith.constant 0 : i32
    %0 = arith.cmpi eq, %arg1, %c0_i32 : i32
    %1 = arith.extui %0 : i1 to i32
    %c0_i32_0 = arith.constant 0 : i32
    %2 = arith.cmpi ne, %1, %c0_i32_0 : i32
    scf.if %2 {
      %cst_9 = arith.constant 0.000000e+00 : f32
      %17 = vector.broadcast %cst_9 : f32 to vector<256x128xf32>
      %c0_10 = arith.constant 0 : index
      %c0_11 = arith.constant 0 : index
      %18 = vector.load %arg9[%c0_10, %c0_11] : memref<256x128xf32, #tpu.memory_space<vmem>>, vector<256x128xf32>
      tpu.vector_store %arg9[%c0_10, %c0_11], %17 {strides = array<i32>} : memref<256x128xf32, #tpu.memory_space<vmem>>, vector<256x128xf32>,
    } else {
    }
    %c0 = arith.constant 0 : index
    %c0_1 = arith.constant 0 : index
    %3 = vector.load %arg4[%c0, %c0_1] : memref<256x256xi8, #tpu.memory_space<vmem>>, vector<256x256xi8>
    %4 = arith.sitofp %3 : vector<256x256xi8> to vector<256x256xf32>
    %5 = arith.truncf %4 : vector<256x256xf32> to vector<256x256xbf16>
    %c256_i32 = arith.constant 256 : i32
    %6 = arith.muli %arg1, %c256_i32 : i32
    %7 = tpu.assume_multiple %6, 256 : i32
    %8 = arith.index_cast %7 : i32 to index
    %c0_2 = arith.constant 0 : index
    %9 = vector.load %arg5[%8, %c0_2] : memref<256x128xbf16, #tpu.memory_space<vmem>>, vector<256x128xbf16>
    %c0_3 = arith.constant 0 : index
    %c0_4 = arith.constant 0 : index
    %10 = vector.load %arg9[%c0_3, %c0_4] : memref<256x128xf32, #tpu.memory_space<vmem>>, vector<256x128xf32>
    %cst = arith.constant dense<0.000000e+00> : vector<256x128xf32>
    %11 = tpu.matmul %5, %9, %cst {dimension_numbers = #tpu.dot_dimension_numbers<[1], [0], [0], [1], [0, 0, 1, 1], [], []>} : vector<256x256xbf16>, vector<256x128xbf16>, vector<256x128xf32> -> vector<256x128xf32>
    %12 = arith.addf %10, %11 : vector<256x128xf32>
    %c0_5 = arith.constant 0 : index
    %c0_6 = arith.constant 0 : index
    %13 = vector.load %arg9[%c0_5, %c0_6] : memref<256x128xf32, #tpu.memory_space<vmem>>, vector<256x128xf32>
    tpu.vector_store %arg9[%c0_5, %c0_6], %12 {strides = array<i32>} : memref<256x128xf32, #tpu.memory_space<vmem>>, vector<256x128xf32>,
    %c0_i32_7 = arith.constant 0 : i32
    %14 = arith.cmpi eq, %arg1, %c0_i32_7 : i32
    %15 = arith.extui %14 : i1 to i32
    %c0_i32_8 = arith.constant 0 : i32
    %16 = arith.cmpi ne, %15, %c0_i32_8 : i32
    scf.if %16 {
      %c0_9 = arith.constant 0 : index
      %c0_10 = arith.constant 0 : index
      %17 = vector.load %arg3[%c0_9, %c0_10] : memref<256x128xbf16, #tpu.memory_space<vmem>>, vector<256x128xbf16>
      %18 = arith.extf %17 : vector<256x128xbf16> to vector<256x128xf32>
      %c0_11 = arith.constant 0 : index
      %c0_12 = arith.constant 0 : index
      %19 = vector.load %arg9[%c0_11, %c0_12] : memref<256x128xf32, #tpu.memory_space<vmem>>, vector<256x128xf32>
      %20 = arith.addf %18, %19 : vector<256x128xf32>
      %21 = arith.truncf %20 : vector<256x128xf32> to vector<256x128xbf16>
      %c0_13 = arith.constant 0 : index
      %c0_14 = arith.constant 0 : index
      %22 = vector.load %arg6[%c0_13, %c0_14] : memref<128x128xbf16, #tpu.memory_space<vmem>>, vector<128x128xbf16>
      %cst_15 = arith.constant dense<0.000000e+00> : vector<256x128xf32>
      %23 = tpu.matmul %21, %22, %cst_15 {dimension_numbers = #tpu.dot_dimension_numbers<[1], [0], [0], [1], [0, 0, 1, 1], [], []>} : vector<256x128xbf16>, vector<128x128xbf16>, vector<256x128xf32> -> vector<256x128xf32>
      %c0_16 = arith.constant 0 : index
      %c0_17 = arith.constant 0 : index
      %24 = vector.load %arg7[%c0_16, %c0_17] : memref<1x128xf32, #tpu.memory_space<vmem>>, vector<1x128xf32>
      %25 = vector.broadcast %24 : vector<1x128xf32> to vector<256x128xf32>
      %26 = arith.addf %23, %25 : vector<256x128xf32>
      %c0_18 = arith.constant 0 : index
      %27 = memref.load %arg2[%c0_18] : memref<1xf32, #tpu.memory_space<smem>>
      %cst_19 = arith.constant 0.000000e+00 : f32
      %28 = vector.broadcast %cst_19 : f32 to vector<256x128xf32>
      %29 = arith.cmpf ogt, %26, %28 : vector<256x128xf32>
      %30 = vector.broadcast %27 : f32 to vector<256x128xf32>
      %31 = arith.mulf %30, %26 : vector<256x128xf32>
      %32 = arith.select %29, %26, %31 : vector<256x128xi1>, vector<256x128xf32>
      %33 = arith.truncf %32 : vector<256x128xf32> to vector<256x128xbf16>
      %c0_20 = arith.constant 0 : index
      %c0_21 = arith.constant 0 : index
      %34 = vector.load %arg8[%c0_20, %c0_21] : memref<256x128xbf16, #tpu.memory_space<vmem>>, vector<256x128xbf16>
      tpu.vector_store %arg8[%c0_20, %c0_21], %33 {strides = array<i32>} : memref<256x128xbf16, #tpu.memory_space<vmem>>, vector<256x128xbf16>,
    } else {
    }
    return
  }
  func.func @transform_0(%arg0: i32, %arg1: i32) -> i32 {
    %c0_i32 = arith.constant 0 : i32
    %c0_i32_0 = arith.constant 0 : i32
    return %c0_i32 : i32
  }
  func.func @transform_1(%arg0: i32, %arg1: i32) -> (i32, i32) {
    %c0_i32 = arith.constant 0 : i32
    %c0_i32_0 = arith.constant 0 : i32
    return %arg0, %c0_i32 : i32, i32
  }
  func.func @transform_2(%arg0: i32, %arg1: i32) -> (i32, i32) {
    %c0_i32 = arith.constant 0 : i32
    return %arg0, %arg1 : i32, i32
  }
  func.func @transform_3(%arg0: i32, %arg1: i32) -> (i32, i32) {
    %c0_i32 = arith.constant 0 : i32
    %c0_i32_0 = arith.constant 0 : i32
    %c0_i32_1 = arith.constant 0 : i32
    return %c0_i32, %c0_i32_0 : i32, i32
  }
  func.func @transform_4(%arg0: i32, %arg1: i32) -> (i32, i32) {
    %c0_i32 = arith.constant 0 : i32
    %c0_i32_0 = arith.constant 0 : i32
    %c0_i32_1 = arith.constant 0 : i32
    return %c0_i32, %c0_i32_0 : i32, i32
  }
  func.func @transform_5(%arg0: i32, %arg1: i32) -> (i32, i32) {
    %c0_i32 = arith.constant 0 : i32
    %c0_i32_0 = arith.constant 0 : i32
    %c0_i32_1 = arith.constant 0 : i32
    return %c0_i32, %c0_i32_0 : i32, i32
  }
  func.func @transform_6(%arg0: i32, %arg1: i32) -> (i32, i32) {
    %c0_i32 = arith.constant 0 : i32
    %c0_i32_0 = arith.constant 0 : i32
    return %arg0, %c0_i32 : i32, i32
  }
}

module attributes {stable_mosaic.version = 11 : i64} {
  func.func @_node_update_kernel(%arg0: i32, %arg1: i32, %arg2: memref<1xf32, #tpu.memory_space<smem>>, %arg3: memref<256x128xbf16, #tpu.memory_space<vmem>>, %arg4: memref<256x256xi8, #tpu.memory_space<vmem>>, %arg5: memref<256x128xbf16, #tpu.memory_space<vmem>>, %arg6: memref<128x128xbf16, #tpu.memory_space<vmem>>, %arg7: memref<1x128xf32, #tpu.memory_space<vmem>>, %arg8: memref<256x128xbf16, #tpu.memory_space<vmem>>, %arg9: memref<256x128xf32, #tpu.memory_space<vmem>>) attributes {dimension_semantics = [#tpu.dimension_semantics<parallel>, #tpu.dimension_semantics<arbitrary>], iteration_bounds = array<i64: 1, 1>, scalar_prefetch = 0 : i64, scratch_operands = 1 : i64, tpu.core_type = #tpu.core_type<tc>, window_params = [{transform_indices = @transform_0, window_bounds = array<i64: 1>}, {transform_indices = @transform_1, window_bounds = array<i64: 256, 128>}, {transform_indices = @transform_2, window_bounds = array<i64: 256, 256>}, {pipeline_mode = #tpu.pipeline_mode<synchronous>, transform_indices = @transform_3, window_bounds = array<i64: 256, 128>}, {pipeline_mode = #tpu.pipeline_mode<synchronous>, transform_indices = @transform_4, window_bounds = array<i64: 128, 128>}, {pipeline_mode = #tpu.pipeline_mode<synchronous>, transform_indices = @transform_5, window_bounds = array<i64: 1, 128>}, {transform_indices = @transform_6, window_bounds = array<i64: 256, 128>}]} {
    %c0_i32 = arith.constant 0 : i32
    %0 = arith.cmpi eq, %arg1, %c0_i32 : i32
    %1 = arith.extui %0 : i1 to i32
    %c0_i32_0 = arith.constant 0 : i32
    %2 = arith.cmpi ne, %1, %c0_i32_0 : i32
    scf.if %2 {
      %cst_9 = arith.constant 0.000000e+00 : f32
      %17 = vector.broadcast %cst_9 : f32 to vector<256x128xf32>
      %c0_10 = arith.constant 0 : index
      %c0_11 = arith.constant 0 : index
      %18 = vector.load %arg9[%c0_10, %c0_11] : memref<256x128xf32, #tpu.memory_space<vmem>>, vector<256x128xf32>
      tpu.vector_store %arg9[%c0_10, %c0_11], %17 {strides = array<i32>} : memref<256x128xf32, #tpu.memory_space<vmem>>, vector<256x128xf32>,
    } else {
    }
    %c0 = arith.constant 0 : index
    %c0_1 = arith.constant 0 : index
    %3 = vector.load %arg4[%c0, %c0_1] : memref<256x256xi8, #tpu.memory_space<vmem>>, vector<256x256xi8>
    %4 = arith.sitofp %3 : vector<256x256xi8> to vector<256x256xf32>
    %5 = arith.truncf %4 : vector<256x256xf32> to vector<256x256xbf16>
    %c256_i32 = arith.constant 256 : i32
    %6 = arith.muli %arg1, %c256_i32 : i32
    %7 = tpu.assume_multiple %6, 256 : i32
    %8 = arith.index_cast %7 : i32 to index
    %c0_2 = arith.constant 0 : index
    %9 = vector.load %arg5[%8, %c0_2] : memref<256x128xbf16, #tpu.memory_space<vmem>>, vector<256x128xbf16>
    %c0_3 = arith.constant 0 : index
    %c0_4 = arith.constant 0 : index
    %10 = vector.load %arg9[%c0_3, %c0_4] : memref<256x128xf32, #tpu.memory_space<vmem>>, vector<256x128xf32>
    %cst = arith.constant dense<0.000000e+00> : vector<256x128xf32>
    %11 = tpu.matmul %5, %9, %cst {dimension_numbers = #tpu.dot_dimension_numbers<[1], [0], [0], [1], [0, 0, 1, 1], [], []>} : vector<256x256xbf16>, vector<256x128xbf16>, vector<256x128xf32> -> vector<256x128xf32>
    %12 = arith.addf %10, %11 : vector<256x128xf32>
    %c0_5 = arith.constant 0 : index
    %c0_6 = arith.constant 0 : index
    %13 = vector.load %arg9[%c0_5, %c0_6] : memref<256x128xf32, #tpu.memory_space<vmem>>, vector<256x128xf32>
    tpu.vector_store %arg9[%c0_5, %c0_6], %12 {strides = array<i32>} : memref<256x128xf32, #tpu.memory_space<vmem>>, vector<256x128xf32>,
    %c0_i32_7 = arith.constant 0 : i32
    %14 = arith.cmpi eq, %arg1, %c0_i32_7 : i32
    %15 = arith.extui %14 : i1 to i32
    %c0_i32_8 = arith.constant 0 : i32
    %16 = arith.cmpi ne, %15, %c0_i32_8 : i32
    scf.if %16 {
      %c0_9 = arith.constant 0 : index
      %c0_10 = arith.constant 0 : index
      %17 = vector.load %arg3[%c0_9, %c0_10] : memref<256x128xbf16, #tpu.memory_space<vmem>>, vector<256x128xbf16>
      %18 = arith.extf %17 : vector<256x128xbf16> to vector<256x128xf32>
      %c0_11 = arith.constant 0 : index
      %c0_12 = arith.constant 0 : index
      %19 = vector.load %arg9[%c0_11, %c0_12] : memref<256x128xf32, #tpu.memory_space<vmem>>, vector<256x128xf32>
      %20 = arith.addf %18, %19 : vector<256x128xf32>
      %21 = arith.truncf %20 : vector<256x128xf32> to vector<256x128xbf16>
      %c0_13 = arith.constant 0 : index
      %c0_14 = arith.constant 0 : index
      %22 = vector.load %arg6[%c0_13, %c0_14] : memref<128x128xbf16, #tpu.memory_space<vmem>>, vector<128x128xbf16>
      %cst_15 = arith.constant dense<0.000000e+00> : vector<256x128xf32>
      %23 = tpu.matmul %21, %22, %cst_15 {dimension_numbers = #tpu.dot_dimension_numbers<[1], [0], [0], [1], [0, 0, 1, 1], [], []>} : vector<256x128xbf16>, vector<128x128xbf16>, vector<256x128xf32> -> vector<256x128xf32>
      %c0_16 = arith.constant 0 : index
      %c0_17 = arith.constant 0 : index
      %24 = vector.load %arg7[%c0_16, %c0_17] : memref<1x128xf32, #tpu.memory_space<vmem>>, vector<1x128xf32>
      %25 = vector.broadcast %24 : vector<1x128xf32> to vector<256x128xf32>
      %26 = arith.addf %23, %25 : vector<256x128xf32>
      %27 = arith.truncf %26 : vector<256x128xf32> to vector<256x128xbf16>
      %c0_18 = arith.constant 0 : index
      %c0_19 = arith.constant 0 : index
      %28 = vector.load %arg8[%c0_18, %c0_19] : memref<256x128xbf16, #tpu.memory_space<vmem>>, vector<256x128xbf16>
      tpu.vector_store %arg8[%c0_18, %c0_19], %27 {strides = array<i32>} : memref<256x128xbf16, #tpu.memory_space<vmem>>, vector<256x128xbf16>,
    } else {
    }
    return
  }
  func.func @transform_0(%arg0: i32, %arg1: i32) -> i32 {
    %c0_i32 = arith.constant 0 : i32
    %c0_i32_0 = arith.constant 0 : i32
    return %c0_i32 : i32
  }
  func.func @transform_1(%arg0: i32, %arg1: i32) -> (i32, i32) {
    %c0_i32 = arith.constant 0 : i32
    %c0_i32_0 = arith.constant 0 : i32
    return %arg0, %c0_i32 : i32, i32
  }
  func.func @transform_2(%arg0: i32, %arg1: i32) -> (i32, i32) {
    %c0_i32 = arith.constant 0 : i32
    return %arg0, %arg1 : i32, i32
  }
  func.func @transform_3(%arg0: i32, %arg1: i32) -> (i32, i32) {
    %c0_i32 = arith.constant 0 : i32
    %c0_i32_0 = arith.constant 0 : i32
    %c0_i32_1 = arith.constant 0 : i32
    return %c0_i32, %c0_i32_0 : i32, i32
  }
  func.func @transform_4(%arg0: i32, %arg1: i32) -> (i32, i32) {
    %c0_i32 = arith.constant 0 : i32
    %c0_i32_0 = arith.constant 0 : i32
    %c0_i32_1 = arith.constant 0 : i32
    return %c0_i32, %c0_i32_0 : i32, i32
  }
  func.func @transform_5(%arg0: i32, %arg1: i32) -> (i32, i32) {
    %c0_i32 = arith.constant 0 : i32
    %c0_i32_0 = arith.constant 0 : i32
    %c0_i32_1 = arith.constant 0 : i32
    return %c0_i32, %c0_i32_0 : i32, i32
  }
  func.func @transform_6(%arg0: i32, %arg1: i32) -> (i32, i32) {
    %c0_i32 = arith.constant 0 : i32
    %c0_i32_0 = arith.constant 0 : i32
    return %arg0, %c0_i32 : i32, i32
  }
}

module attributes {stable_mosaic.version = 11 : i64} {
  func.func @_head_kernel(%arg0: i32, %arg1: memref<256x128xbf16, #tpu.memory_space<vmem>>, %arg2: memref<128x128xbf16, #tpu.memory_space<vmem>>, %arg3: memref<1x128xf32, #tpu.memory_space<vmem>>, %arg4: memref<256x128xf32, #tpu.memory_space<vmem>>) attributes {dimension_semantics = [#tpu.dimension_semantics<parallel>], iteration_bounds = array<i64: 1>, scalar_prefetch = 0 : i64, scratch_operands = 0 : i64, tpu.core_type = #tpu.core_type<tc>, window_params = [{transform_indices = @transform_0, window_bounds = array<i64: 256, 128>}, {pipeline_mode = #tpu.pipeline_mode<synchronous>, transform_indices = @transform_1, window_bounds = array<i64: 128, 128>}, {pipeline_mode = #tpu.pipeline_mode<synchronous>, transform_indices = @transform_2, window_bounds = array<i64: 1, 128>}, {transform_indices = @transform_3, window_bounds = array<i64: 256, 128>}]} {
    %c0 = arith.constant 0 : index
    %c0_0 = arith.constant 0 : index
    %0 = vector.load %arg1[%c0, %c0_0] : memref<256x128xbf16, #tpu.memory_space<vmem>>, vector<256x128xbf16>
    %cst = arith.constant 0.000000e+00 : bf16
    %1 = vector.broadcast %cst : bf16 to vector<256x128xbf16>
    %2 = arith.cmpf ogt, %0, %1 : vector<256x128xbf16>
    %cst_1 = arith.constant 1.000980e-02 : bf16
    %3 = vector.broadcast %cst_1 : bf16 to vector<256x128xbf16>
    %4 = arith.mulf %3, %0 : vector<256x128xbf16>
    %5 = arith.select %2, %0, %4 : vector<256x128xi1>, vector<256x128xbf16>
    %c0_2 = arith.constant 0 : index
    %c0_3 = arith.constant 0 : index
    %6 = vector.load %arg2[%c0_2, %c0_3] : memref<128x128xbf16, #tpu.memory_space<vmem>>, vector<128x128xbf16>
    %cst_4 = arith.constant dense<0.000000e+00> : vector<256x128xf32>
    %7 = tpu.matmul %5, %6, %cst_4 {dimension_numbers = #tpu.dot_dimension_numbers<[1], [0], [0], [1], [0, 0, 1, 1], [], []>} : vector<256x128xbf16>, vector<128x128xbf16>, vector<256x128xf32> -> vector<256x128xf32>
    %c0_5 = arith.constant 0 : index
    %c0_6 = arith.constant 0 : index
    %8 = vector.load %arg3[%c0_5, %c0_6] : memref<1x128xf32, #tpu.memory_space<vmem>>, vector<1x128xf32>
    %9 = vector.broadcast %8 : vector<1x128xf32> to vector<256x128xf32>
    %10 = arith.addf %7, %9 : vector<256x128xf32>
    %c0_7 = arith.constant 0 : index
    %c0_8 = arith.constant 0 : index
    %11 = vector.load %arg4[%c0_7, %c0_8] : memref<256x128xf32, #tpu.memory_space<vmem>>, vector<256x128xf32>
    tpu.vector_store %arg4[%c0_7, %c0_8], %10 {strides = array<i32>} : memref<256x128xf32, #tpu.memory_space<vmem>>, vector<256x128xf32>,
    return
  }
  func.func @transform_0(%arg0: i32) -> (i32, i32) {
    %c0_i32 = arith.constant 0 : i32
    %c0_i32_0 = arith.constant 0 : i32
    return %arg0, %c0_i32 : i32, i32
  }
  func.func @transform_1(%arg0: i32) -> (i32, i32) {
    %c0_i32 = arith.constant 0 : i32
    %c0_i32_0 = arith.constant 0 : i32
    %c0_i32_1 = arith.constant 0 : i32
    return %c0_i32, %c0_i32_0 : i32, i32
  }
  func.func @transform_2(%arg0: i32) -> (i32, i32) {
    %c0_i32 = arith.constant 0 : i32
    %c0_i32_0 = arith.constant 0 : i32
    %c0_i32_1 = arith.constant 0 : i32
    return %c0_i32, %c0_i32_0 : i32, i32
  }
  func.func @transform_3(%arg0: i32) -> (i32, i32) {
    %c0_i32 = arith.constant 0 : i32
    %c0_i32_0 = arith.constant 0 : i32
    return %arg0, %c0_i32 : i32, i32
  }
}

</mosaic_0001>

<llo_original>
// kernel: predictor_unisage_forward.8
$region0: #{predictor_unisage_forward.8}
  #allocation0 [shape = 'u32[]', space=smem, size = 0x4, offset = 0x4, fixed_abs, tag = 'smem constant byte address 0x4 - core index']
  #allocation1 [shape = 'u32[144,128]{1,0:T(1,128)}', space=vmem, size = 0x12000, scoped, tag = 'internal scratch']
  %s0 = inlined_call_operand.vmem [shape: bf16[256,128], index: 0, kind: input, shape index: {}]
  %s1 = inlined_call_operand.vmem [shape: f32[1,128], index: 1, kind: input, shape index: {}]
  %s2 = inlined_call_operand.vmem [shape: f32[1,128], index: 2, kind: input, shape index: {}]
  %s3 = inlined_call_operand.vmem [shape: bf16[256,128], index: 3, kind: output, shape index: {}]
  %s4 = sld [smem:[#allocation0]]
  $region22: #{predictor_unisage_forward.8} parent=0
    _
  %s6 = ssub.s32 1, %s4
  %s7 = scalar_select 0, %s6, %s4
  // Predicated region
  $region2: #{predictor_unisage_forward.8} parent=0 // pred_check
    _
  $region3: #{predictor_unisage_forward.8} parent=0 // pred_check_branch
    %9 = sbr.rel (0) target = $region5
  $region4: #{predictor_unisage_forward.8} parent=0 // pred_region
    _
  $region5: #{predictor_unisage_forward.8} parent=0 // pred_fallthru
    _
  // Predicated region
  $region6: #{predictor_unisage_forward.8} parent=0 // pred_check
    _
  $region7: #{predictor_unisage_forward.8} parent=0 // pred_check_branch
    %11 = sbr.rel (0) target = $region9
  $region8: #{predictor_unisage_forward.8} parent=0 // pred_region
    _
  $region9: #{predictor_unisage_forward.8} parent=0 // pred_fallthru
    _
  // Predicated region
  $region10: #{predictor_unisage_forward.8} parent=0 // pred_check
    _
  $region11: #{predictor_unisage_forward.8} parent=0 // pred_check_branch
    %13 = sbr.rel (0) target = $region13
  $region12: #{predictor_unisage_forward.8} parent=0 // pred_region
    _
  $region13: #{predictor_unisage_forward.8} parent=0 // pred_fallthru
    _
  %v14 = vld [vmem:[%s0] sm:$0xf]
  %v15 = vld [vmem:[%s0 + $0x4] sm:$0xf]
  %v16 = vld [vmem:[%s0 + $0x8] sm:$0xf]
  %v17 = vld [vmem:[%s0 + $0xc] sm:$0xf]
  %v18 = vld [vmem:[%s0 + $0x10] sm:$0xf]
  %v19 = vld [vmem:[%s0 + $0x14] sm:$0xf]
  %v20 = vld [vmem:[%s0 + $0x18] sm:$0xf]
  %v21 = vld [vmem:[%s0 + $0x1c] sm:$0xf]
  %v22 = vld [vmem:[%s0 + $0x20] sm:$0xf]
  %v23 = vld [vmem:[%s0 + $0x24] sm:$0xf]
  %v24 = vld [vmem:[%s0 + $0x28] sm:$0xf]
  %v25 = vld [vmem:[%s0 + $0x2c] sm:$0xf]
  %v26 = vld [vmem:[%s0 + $0x30] sm:$0xf]
  %v27 = vld [vmem:[%s0 + $0x34] sm:$0xf]
  %v28 = vld [vmem:[%s0 + $0x38] sm:$0xf]
  %v29 = vld [vmem:[%s0 + $0x3c] sm:$0xf]
  %v30 = vld [vmem:[%s0 + $0x40] sm:$0xf]
  %v31 = vld [vmem:[%s0 + $0x44] sm:$0xf]
  %v32 = vld [vmem:[%s0 + $0x48] sm:$0xf]
  %v33 = vld [vmem:[%s0 + $0x4c] sm:$0xf]
  %v34 = vld [vmem:[%s0 + $0x50] sm:$0xf]
  %v35 = vld [vmem:[%s0 + $0x54] sm:$0xf]
  %v36 = vld [vmem:[%s0 + $0x58] sm:$0xf]
  %v37 = vld [vmem:[%s0 + $0x5c] sm:$0xf]
  %v38 = vld [vmem:[%s0 + $0x60] sm:$0xf]
  %v39 = vld [vmem:[%s0 + $0x64] sm:$0xf]
  %v40 = vld [vmem:[%s0 + $0x68] sm:$0xf]
  %v41 = vld [vmem:[%s0 + $0x6c] sm:$0xf]
  %v42 = vld [vmem:[%s0 + $0x70] sm:$0xf]
  %v43 = vld [vmem:[%s0 + $0x74] sm:$0xf]
  %v44 = vld [vmem:[%s0 + $0x78] sm:$0xf]
  %v45 = vld [vmem:[%s0 + $0x7c] sm:$0xf]
  %v46 = vunpack.c.l.bf16 %v14
  %v47 = vunpack.c.l.bf16 %v15
  %v48 = vunpack.c.l.bf16 %v16
  %v49 = vunpack.c.l.bf16 %v17
  %v50 = vunpack.c.l.bf16 %v18
  %v51 = vunpack.c.l.bf16 %v19
  %v52 = vunpack.c.l.bf16 %v20
  %v53 = vunpack.c.l.bf16 %v21
  %v54 = vunpack.c.l.bf16 %v22
  %v55 = vunpack.c.l.bf16 %v23
  %v56 = vunpack.c.l.bf16 %v24
  %v57 = vunpack.c.l.bf16 %v25
  %v58 = vunpack.c.l.bf16 %v26
  %v59 = vunpack.c.l.bf16 %v27
  %v60 = vunpack.c.l.bf16 %v28
  %v61 = vunpack.c.l.bf16 %v29
  %v62 = vunpack.c.l.bf16 %v30
  %v63 = vunpack.c.l.bf16 %v31
  %v64 = vunpack.c.l.bf16 %v32
  %v65 = vunpack.c.l.bf16 %v33
  %v66 = vunpack.c.l.bf16 %v34
  %v67 = vunpack.c.l.bf16 %v35
  %v68 = vunpack.c.l.bf16 %v36
  %v69 = vunpack.c.l.bf16 %v37
  %v70 = vunpack.c.l.bf16 %v38
  %v71 = vunpack.c.l.bf16 %v39
  %v72 = vunpack.c.l.bf16 %v40
  %v73 = vunpack.c.l.bf16 %v41
  %v74 = vunpack.c.l.bf16 %v42
  %v75 = vunpack.c.l.bf16 %v43
  %v76 = vunpack.c.l.bf16 %v44
  %v77 = vunpack.c.l.bf16 %v45
  %v78 = vld [vmem:[%s1] sm:$0x1]
  %v80 = vlaneseq
  %v81 = vshrl.u32 %v80, 7
  %v82 = vsub.s32 0, %v81
  %v83 = vrot.slane %v78, %v82
  %v85 = vmul.f32 %v46, %v83
  %v86 = vmul.f32 %v47, %v83
  %v87 = vmul.f32 %v48, %v83
  %v88 = vmul.f32 %v49, %v83
  %v89 = vmul.f32 %v50, %v83
  %v90 = vmul.f32 %v51, %v83
  %v91 = vmul.f32 %v52, %v83
  %v92 = vmul.f32 %v53, %v83
  %v93 = vmul.f32 %v54, %v83
  %v94 = vmul.f32 %v55, %v83
  %v95 = vmul.f32 %v56, %v83
  %v96 = vmul.f32 %v57, %v83
  %v97 = vmul.f32 %v58, %v83
  %v98 = vmul.f32 %v59, %v83
  %v99 = vmul.f32 %v60, %v83
  %v100 = vmul.f32 %v61, %v83
  %v101 = vmul.f32 %v62, %v83
  %v102 = vmul.f32 %v63, %v83
  %v103 = vmul.f32 %v64, %v83
  %v104 = vmul.f32 %v65, %v83
  %v105 = vmul.f32 %v66, %v83
  %v106 = vmul.f32 %v67, %v83
  %v107 = vmul.f32 %v68, %v83
  %v108 = vmul.f32 %v69, %v83
  %v109 = vmul.f32 %v70, %v83
  %v110 = vmul.f32 %v71, %v83
  %v111 = vmul.f32 %v72, %v83
  %v112 = vmul.f32 %v73, %v83
  %v113 = vmul.f32 %v74, %v83
  %v114 = vmul.f32 %v75, %v83
  %v115 = vmul.f32 %v76, %v83
  %v116 = vmul.f32 %v77, %v83
  %v117 = vld [vmem:[%s2] sm:$0x1]
  %v119 = vlaneseq
  %v120 = vshrl.u32 %v119, 7
  %v121 = vsub.s32 0, %v120
  %v122 = vrot.slane %v117, %v121
  %v124 = vadd.f32 %v85, %v122
  %v125 = vadd.f32 %v86, %v122
  %v126 = vadd.f32 %v87, %v122
  %v127 = vadd.f32 %v88, %v122
  %v128 = vadd.f32 %v89, %v122
  %v129 = vadd.f32 %v90, %v122
  %v130 = vadd.f32 %v91, %v122
  %v131 = vadd.f32 %v92, %v122
  %v132 = vadd.f32 %v93, %v122
  %v133 = vadd.f32 %v94, %v122
  %v134 = vadd.f32 %v95, %v122
  %v135 = vadd.f32 %v96, %v122
  %v136 = vadd.f32 %v97, %v122
  %v137 = vadd.f32 %v98, %v122
  %v138 = vadd.f32 %v99, %v122
  %v139 = vadd.f32 %v100, %v122
  %v140 = vadd.f32 %v101, %v122
  %v141 = vadd.f32 %v102, %v122
  %v142 = vadd.f32 %v103, %v122
  %v143 = vadd.f32 %v104, %v122
  %v144 = vadd.f32 %v105, %v122
  %v145 = vadd.f32 %v106, %v122
  %v146 = vadd.f32 %v107, %v122
  %v147 = vadd.f32 %v108, %v122
  %v148 = vadd.f32 %v109, %v122
  %v149 = vadd.f32 %v110, %v122
  %v150 = vadd.f32 %v111, %v122
  %v151 = vadd.f32 %v112, %v122
  %v152 = vadd.f32 %v113, %v122
  %v153 = vadd.f32 %v114, %v122
  %v154 = vadd.f32 %v115, %v122
  %v155 = vadd.f32 %v116, %v122
  %s156 = smul.u32 0, 256
  %v157 = vlaneseq
  %v158 = vshrl.u32 %v157, 7
  %v159 = vadd.s32 %v158, 8
  %v160 = vadd.s32 %v158, 16
  %v161 = vadd.s32 %v158, 24
  %v162 = vadd.s32 %v158, 32
  %v163 = vadd.s32 %v158, 40
  %v164 = vadd.s32 %v158, 48
  %v165 = vadd.s32 %v158, 56
  %v166 = vadd.s32 %v158, 64
  %v167 = vadd.s32 %v158, 72
  %v168 = vadd.s32 %v158, 80
  %v169 = vadd.s32 %v158, 88
  %v170 = vadd.s32 %v158, 96
  %v171 = vadd.s32 %v158, 104
  %v172 = vadd.s32 %v158, 112
  %v173 = vadd.s32 %v158, 120
  %v174 = vadd.s32 %v158, 128
  %v175 = vadd.s32 %v158, 136
  %v176 = vadd.s32 %v158, 144
  %v177 = vadd.s32 %v158, 152
  %v178 = vadd.s32 %v158, 160
  %v179 = vadd.s32 %v158, 168
  %v180 = vadd.s32 %v158, 176
  %v181 = vadd.s32 %v158, 184
  %v182 = vadd.s32 %v158, 192
  %v183 = vadd.s32 %v158, 200
  %v184 = vadd.s32 %v158, 208
  %v185 = vadd.s32 %v158, 216
  %v186 = vadd.s32 %v158, 224
  %v187 = vadd.s32 %v158, 232
  %v188 = vadd.s32 %v158, 240
  %v189 = vadd.s32 %v158, 248
  %v190 = vstv %s156
  %v191 = vadd.s32 %v190, %v158
  %v192 = vadd.s32 %v190, %v159
  %v193 = vadd.s32 %v190, %v160
  %v194 = vadd.s32 %v190, %v161
  %v195 = vadd.s32 %v190, %v162
  %v196 = vadd.s32 %v190, %v163
  %v197 = vadd.s32 %v190, %v164
  %v198 = vadd.s32 %v190, %v165
  %v199 = vadd.s32 %v190, %v166
  %v200 = vadd.s32 %v190, %v167
  %v201 = vadd.s32 %v190, %v168
  %v202 = vadd.s32 %v190, %v169
  %v203 = vadd.s32 %v190, %v170
  %v204 = vadd.s32 %v190, %v171
  %v205 = vadd.s32 %v190, %v172
  %v206 = vadd.s32 %v190, %v173
  %v207 = vadd.s32 %v190, %v174
  %v208 = vadd.s32 %v190, %v175
  %v209 = vadd.s32 %v190, %v176
  %v210 = vadd.s32 %v190, %v177
  %v211 = vadd.s32 %v190, %v178
  %v212 = vadd.s32 %v190, %v179
  %v213 = vadd.s32 %v190, %v180
  %v214 = vadd.s32 %v190, %v181
  %v215 = vadd.s32 %v190, %v182
  %v216 = vadd.s32 %v190, %v183
  %v217 = vadd.s32 %v190, %v184
  %v218 = vadd.s32 %v190, %v185
  %v219 = vadd.s32 %v190, %v186
  %v220 = vadd.s32 %v190, %v187
  %v221 = vadd.s32 %v190, %v188
  %v222 = vadd.s32 %v190, %v189
  %vm223 = vcmp.lt.s32.totalorder %v191, 16
  %vm224 = vcmp.lt.s32.totalorder %v192, 16
  %vm225 = vcmp.lt.s32.totalorder %v193, 16
  %vm226 = vcmp.lt.s32.totalorder %v194, 16
  %vm227 = vcmp.lt.s32.totalorder %v195, 16
  %vm228 = vcmp.lt.s32.totalorder %v196, 16
  %vm229 = vcmp.lt.s32.totalorder %v197, 16
  %vm230 = vcmp.lt.s32.totalorder %v198, 16
  %vm231 = vcmp.lt.s32.totalorder %v199, 16
  %vm232 = vcmp.lt.s32.totalorder %v200, 16
  %vm233 = vcmp.lt.s32.totalorder %v201, 16
  %vm234 = vcmp.lt.s32.totalorder %v202, 16
  %vm235 = vcmp.lt.s32.totalorder %v203, 16
  %vm236 = vcmp.lt.s32.totalorder %v204, 16
  %vm237 = vcmp.lt.s32.totalorder %v205, 16
  %vm238 = vcmp.lt.s32.totalorder %v206, 16
  %vm239 = vcmp.lt.s32.totalorder %v207, 16
  %vm240 = vcmp.lt.s32.totalorder %v208, 16
  %vm241 = vcmp.lt.s32.totalorder %v209, 16
  %vm242 = vcmp.lt.s32.totalorder %v210, 16
  %vm243 = vcmp.lt.s32.totalorder %v211, 16
  %vm244 = vcmp.lt.s32.totalorder %v212, 16
  %vm245 = vcmp.lt.s32.totalorder %v213, 16
  %vm246 = vcmp.lt.s32.totalorder %v214, 16
  %vm247 = vcmp.lt.s32.totalorder %v215, 16
  %vm248 = vcmp.lt.s32.totalorder %v216, 16
  %vm249 = vcmp.lt.s32.totalorder %v217, 16
  %vm250 = vcmp.lt.s32.totalorder %v218, 16
  %vm251 = vcmp.lt.s32.totalorder %v219, 16
  %vm252 = vcmp.lt.s32.totalorder %v220, 16
  %vm253 = vcmp.lt.s32.totalorder %v221, 16
  %vm254 = vcmp.lt.s32.totalorder %v222, 16
  %v255 = vsel %vm223, %v124, 0.0
  %v256 = vsel %vm224, %v125, 0.0
  %v257 = vsel %vm225, %v126, 0.0
  %v258 = vsel %vm226, %v127, 0.0
  %v259 = vsel %vm227, %v128, 0.0
  %v260 = vsel %vm228, %v129, 0.0
  %v261 = vsel %vm229, %v130, 0.0
  %v262 = vsel %vm230, %v131, 0.0
  %v263 = vsel %vm231, %v132, 0.0
  %v264 = vsel %vm232, %v133, 0.0
  %v265 = vsel %vm233, %v134, 0.0
  %v266 = vsel %vm234, %v135, 0.0
  %v267 = vsel %vm235, %v136, 0.0
  %v268 = vsel %vm236, %v137, 0.0
  %v269 = vsel %vm237, %v138, 0.0
  %v270 = vsel %vm238, %v139, 0.0
  %v271 = vsel %vm239, %v140, 0.0
  %v272 = vsel %vm240, %v141, 0.0
  %v273 = vsel %vm241, %v142, 0.0
  %v274 = vsel %vm242, %v143, 0.0
  %v275 = vsel %vm243, %v144, 0.0
  %v276 = vsel %vm244, %v145, 0.0
  %v277 = vsel %vm245, %v146, 0.0
  %v278 = vsel %vm246, %v147, 0.0
  %v279 = vsel %vm247, %v148, 0.0
  %v280 = vsel %vm248, %v149, 0.0
  %v281 = vsel %vm249, %v150, 0.0
  %v282 = vsel %vm250, %v151, 0.0
  %v283 = vsel %vm251, %v152, 0.0
  %v284 = vsel %vm252, %v153, 0.0
  %v285 = vsel %vm253, %v154, 0.0
  %v286 = vsel %vm254, %v155, 0.0
  %v287 = vpack.c.bf16 %v256, %v255
  %v288 = vpack.c.bf16 %v258, %v257
  %v289 = vpack.c.bf16 %v260, %v259
  %v290 = vpack.c.bf16 %v262, %v261
  %v291 = vpack.c.bf16 %v264, %v263
  %v292 = vpack.c.bf16 %v266, %v265
  %v293 = vpack.c.bf16 %v268, %v267
  %v294 = vpack.c.bf16 %v270, %v269
  %v295 = vpack.c.bf16 %v272, %v271
  %v296 = vpack.c.bf16 %v274, %v273
  %v297 = vpack.c.bf16 %v276, %v275
  %v298 = vpack.c.bf16 %v278, %v277
  %v299 = vpack.c.bf16 %v280, %v279
  %v300 = vpack.c.bf16 %v282, %v281
  %v301 = vpack.c.bf16 %v284, %v283
  %v302 = vpack.c.bf16 %v286, %v285
  %v319 = vunpack.c.l.b16 %v287
  %v320 = vunpack.c.h.b16 %v287
  %v321 = vunpack.c.l.b16 %v288
  %v322 = vunpack.c.h.b16 %v288
  %v323 = vunpack.c.l.b16 %v289
  %v324 = vunpack.c.h.b16 %v289
  %v325 = vunpack.c.l.b16 %v290
  %v326 = vunpack.c.h.b16 %v290
  %v327 = vunpack.c.l.b16 %v291
  %v328 = vunpack.c.h.b16 %v291
  %v329 = vunpack.c.l.b16 %v292
  %v330 = vunpack.c.h.b16 %v292
  %v331 = vunpack.c.l.b16 %v293
  %v332 = vunpack.c.h.b16 %v293
  %v333 = vunpack.c.l.b16 %v294
  %v334 = vunpack.c.h.b16 %v294
  %v335 = vunpack.c.l.b16 %v295
  %v336 = vunpack.c.h.b16 %v295
  %v337 = vunpack.c.l.b16 %v296
  %v338 = vunpack.c.h.b16 %v296
  %v339 = vunpack.c.l.b16 %v297
  %v340 = vunpack.c.h.b16 %v297
  %v341 = vunpack.c.l.b16 %v298
  %v342 = vunpack.c.h.b16 %v298
  %v343 = vunpack.c.l.b16 %v299
  %v344 = vunpack.c.h.b16 %v299
  %v345 = vunpack.c.l.b16 %v300
  %v346 = vunpack.c.h.b16 %v300
  %v347 = vunpack.c.l.b16 %v301
  %v348 = vunpack.c.h.b16 %v301
  %v349 = vunpack.c.l.b16 %v302
  %v350 = vunpack.c.h.b16 %v302
  %v351 = vpack.c.b16 %v319, %v319
  %v352 = vpack.c.b16 %v320, %v320
  %v353 = vpack.c.b16 %v321, %v321
  %v354 = vpack.c.b16 %v322, %v322
  %v355 = vpack.c.b16 %v323, %v323
  %v356 = vpack.c.b16 %v324, %v324
  %v357 = vpack.c.b16 %v325, %v325
  %v358 = vpack.c.b16 %v326, %v326
  %v359 = vpack.c.b16 %v327, %v327
  %v360 = vpack.c.b16 %v328, %v328
  %v361 = vpack.c.b16 %v329, %v329
  %v362 = vpack.c.b16 %v330, %v330
  %v363 = vpack.c.b16 %v331, %v331
  %v364 = vpack.c.b16 %v332, %v332
  %v365 = vpack.c.b16 %v333, %v333
  %v366 = vpack.c.b16 %v334, %v334
  %v367 = vpack.c.b16 %v335, %v335
  %v368 = vpack.c.b16 %v336, %v336
  %v369 = vpack.c.b16 %v337, %v337
  %v370 = vpack.c.b16 %v338, %v338
  %v371 = vpack.c.b16 %v339, %v339
  %v372 = vpack.c.b16 %v340, %v340
  %v373 = vpack.c.b16 %v341, %v341
  %v374 = vpack.c.b16 %v342, %v342
  %v375 = vpack.c.b16 %v343, %v343
  %v376 = vpack.c.b16 %v344, %v344
  %v377 = vpack.c.b16 %v345, %v345
  %v378 = vpack.c.b16 %v346, %v346
  %v379 = vpack.c.b16 %v347, %v347
  %v380 = vpack.c.b16 %v348, %v348
  %v381 = vpack.c.b16 %v349, %v349
  %v382 = vpack.c.b16 %v350, %v350
  %415 = vst [vmem:[%s3] sm:$0xf] %v351
  %416 = vst [vmem:[%s3 + $0x4] sm:$0xf] %v352
  %417 = vst [vmem:[%s3 + $0x8] sm:$0xf] %v353
  %418 = vst [vmem:[%s3 + $0xc] sm:$0xf] %v354
  %419 = vst [vmem:[%s3 + $0x10] sm:$0xf] %v355
  %420 = vst [vmem:[%s3 + $0x14] sm:$0xf] %v356
  %421 = vst [vmem:[%s3 + $0x18] sm:$0xf] %v357
  %422 = vst [vmem:[%s3 + $0x1c] sm:$0xf] %v358
  %423 = vst [vmem:[%s3 + $0x20] sm:$0xf] %v359
  %424 = vst [vmem:[%s3 + $0x24] sm:$0xf] %v360
  %425 = vst [vmem:[%s3 + $0x28] sm:$0xf] %v361
  %426 = vst [vmem:[%s3 + $0x2c] sm:$0xf] %v362
  %427 = vst [vmem:[%s3 + $0x30] sm:$0xf] %v363
  %428 = vst [vmem:[%s3 + $0x34] sm:$0xf] %v364
  %429 = vst [vmem:[%s3 + $0x38] sm:$0xf] %v365
  %430 = vst [vmem:[%s3 + $0x3c] sm:$0xf] %v366
  %431 = vst [vmem:[%s3 + $0x40] sm:$0xf] %v367
  %432 = vst [vmem:[%s3 + $0x44] sm:$0xf] %v368
  %433 = vst [vmem:[%s3 + $0x48] sm:$0xf] %v369
  %434 = vst [vmem:[%s3 + $0x4c] sm:$0xf] %v370
  %435 = vst [vmem:[%s3 + $0x50] sm:$0xf] %v371
  %436 = vst [vmem:[%s3 + $0x54] sm:$0xf] %v372
  %437 = vst [vmem:[%s3 + $0x58] sm:$0xf] %v373
  %438 = vst [vmem:[%s3 + $0x5c] sm:$0xf] %v374
  %439 = vst [vmem:[%s3 + $0x60] sm:$0xf] %v375
  %440 = vst [vmem:[%s3 + $0x64] sm:$0xf] %v376
  %441 = vst [vmem:[%s3 + $0x68] sm:$0xf] %v377
  %442 = vst [vmem:[%s3 + $0x6c] sm:$0xf] %v378
  %443 = vst [vmem:[%s3 + $0x70] sm:$0xf] %v379
  %444 = vst [vmem:[%s3 + $0x74] sm:$0xf] %v380
  %445 = vst [vmem:[%s3 + $0x78] sm:$0xf] %v381
  %446 = vst [vmem:[%s3 + $0x7c] sm:$0xf] %v382
  // Predicated region
  $region14: #{predictor_unisage_forward.8} parent=0 // pred_check
    _
  $region15: #{predictor_unisage_forward.8} parent=0 // pred_check_branch
    %448 = sbr.rel (0) target = $region17
  $region16: #{predictor_unisage_forward.8} parent=0 // pred_region
    _
  $region17: #{predictor_unisage_forward.8} parent=0 // pred_fallthru
    _
  // Predicated region
  $region18: #{predictor_unisage_forward.8} parent=0 // pred_check
    _
  $region19: #{predictor_unisage_forward.8} parent=0 // pred_check_branch
    %450 = sbr.rel (0) target = $region21
  $region20: #{predictor_unisage_forward.8} parent=0 // pred_region
    _
  $region21: #{predictor_unisage_forward.8} parent=0 // pred_fallthru
    _

// kernel: predictor_unisage_forward.7
$region0: #{predictor_unisage_forward.7}
  #allocation0 [shape = 'u32[]', space=smem, size = 0x4, offset = 0x4, fixed_abs, tag = 'smem constant byte address 0x4 - core index']
  #allocation1 [shape = 'u32[144,128]{1,0:T(1,128)}', space=vmem, size = 0x12000, scoped, tag = 'internal scratch']
  %s0 = inlined_call_operand.vmem [shape: bf16[256,128], index: 0, kind: input, shape index: {}]
  %s1 = inlined_call_operand.vmem [shape: bf16[128,128], index: 1, kind: input, shape index: {}]
  %s2 = inlined_call_operand.vmem [shape: f32[1,128], index: 2, kind: input, shape index: {}]
  %s3 = inlined_call_operand.vmem [shape: bf16[256,128], index: 3, kind: output, shape index: {0}]
  %s4 = inlined_call_operand.vmem [shape: f32[1,8,128], index: 4, kind: output, shape index: {1}]
  %5 = xla_tuple %s3, %s4
  %s6 = sld [smem:[#allocation0]]
  $region30: #{predictor_unisage_forward.7} parent=0
    _
  %s8 = ssub.s32 1, %s6
  %s9 = scalar_select 0, %s8, %s6
  // Predicated region
  $region2: #{predictor_unisage_forward.7} parent=0 // pred_check
    _
  $region3: #{predictor_unisage_forward.7} parent=0 // pred_check_branch
    %11 = sbr.rel (0) target = $region5
  $region4: #{predictor_unisage_forward.7} parent=0 // pred_region
    _
  $region5: #{predictor_unisage_forward.7} parent=0 // pred_fallthru
    _
  // Predicated region
  $region6: #{predictor_unisage_forward.7} parent=0 // pred_check
    _
  $region7: #{predictor_unisage_forward.7} parent=0 // pred_check_branch
    %13 = sbr.rel (0) target = $region9
  $region8: #{predictor_unisage_forward.7} parent=0 // pred_region
    _
  $region9: #{predictor_unisage_forward.7} parent=0 // pred_fallthru
    _
  // Predicated region
  $region10: #{predictor_unisage_forward.7} parent=0 // pred_check
    _
  $region11: #{predictor_unisage_forward.7} parent=0 // pred_check_branch
    %15 = sbr.rel (0) target = $region13
  $region12: #{predictor_unisage_forward.7} parent=0 // pred_region
    _
  $region13: #{predictor_unisage_forward.7} parent=0 // pred_fallthru
    _
  %v17 = vld [vmem:[%s0] sm:$0xf]
  %v18 = vld [vmem:[%s0 + $0x4] sm:$0xf]
  %v19 = vld [vmem:[%s0 + $0x8] sm:$0xf]
  %v20 = vld [vmem:[%s0 + $0xc] sm:$0xf]
  %v21 = vld [vmem:[%s0 + $0x10] sm:$0xf]
  %v22 = vld [vmem:[%s0 + $0x14] sm:$0xf]
  %v23 = vld [vmem:[%s0 + $0x18] sm:$0xf]
  %v24 = vld [vmem:[%s0 + $0x1c] sm:$0xf]
  %v25 = vld [vmem:[%s0 + $0x20] sm:$0xf]
  %v26 = vld [vmem:[%s0 + $0x24] sm:$0xf]
  %v27 = vld [vmem:[%s0 + $0x28] sm:$0xf]
  %v28 = vld [vmem:[%s0 + $0x2c] sm:$0xf]
  %v29 = vld [vmem:[%s0 + $0x30] sm:$0xf]
  %v30 = vld [vmem:[%s0 + $0x34] sm:$0xf]
  %v31 = vld [vmem:[%s0 + $0x38] sm:$0xf]
  %v32 = vld [vmem:[%s0 + $0x3c] sm:$0xf]
  %v33 = vld [vmem:[%s0 + $0x40] sm:$0xf]
  %v34 = vld [vmem:[%s0 + $0x44] sm:$0xf]
  %v35 = vld [vmem:[%s0 + $0x48] sm:$0xf]
  %v36 = vld [vmem:[%s0 + $0x4c] sm:$0xf]
  %v37 = vld [vmem:[%s0 + $0x50] sm:$0xf]
  %v38 = vld [vmem:[%s0 + $0x54] sm:$0xf]
  %v39 = vld [vmem:[%s0 + $0x58] sm:$0xf]
  %v40 = vld [vmem:[%s0 + $0x5c] sm:$0xf]
  %v41 = vld [vmem:[%s0 + $0x60] sm:$0xf]
  %v42 = vld [vmem:[%s0 + $0x64] sm:$0xf]
  %v43 = vld [vmem:[%s0 + $0x68] sm:$0xf]
  %v44 = vld [vmem:[%s0 + $0x6c] sm:$0xf]
  %v45 = vld [vmem:[%s0 + $0x70] sm:$0xf]
  %v46 = vld [vmem:[%s0 + $0x74] sm:$0xf]
  %v47 = vld [vmem:[%s0 + $0x78] sm:$0xf]
  %v48 = vld [vmem:[%s0 + $0x7c] sm:$0xf]
  %v49 = vld [vmem:[%s1] sm:$0xf]
  %v50 = vld [vmem:[%s1 + $0x4] sm:$0xf]
  %v51 = vld [vmem:[%s1 + $0x8] sm:$0xf]
  %v52 = vld [vmem:[%s1 + $0xc] sm:$0xf]
  %v53 = vld [vmem:[%s1 + $0x10] sm:$0xf]
  %v54 = vld [vmem:[%s1 + $0x14] sm:$0xf]
  %v55 = vld [vmem:[%s1 + $0x18] sm:$0xf]
  %v56 = vld [vmem:[%s1 + $0x1c] sm:$0xf]
  %v57 = vld [vmem:[%s1 + $0x20] sm:$0xf]
  %v58 = vld [vmem:[%s1 + $0x24] sm:$0xf]
  %v59 = vld [vmem:[%s1 + $0x28] sm:$0xf]
  %v60 = vld [vmem:[%s1 + $0x2c] sm:$0xf]
  %v61 = vld [vmem:[%s1 + $0x30] sm:$0xf]
  %v62 = vld [vmem:[%s1 + $0x34] sm:$0xf]
  %v63 = vld [vmem:[%s1 + $0x38] sm:$0xf]
  %v64 = vld [vmem:[%s1 + $0x3c] sm:$0xf]
  %v65 = vld [vmem:[%s2] sm:$0x1]
  %v67 = vlaneseq
  %v68 = vshrl.u32 %v67, 7
  %v69 = vsub.s32 0, %v68
  %v70 = vrot.slane %v65, %v69
  %v104 = vunpack.c.l.b16 %v17
  %v105 = vunpack.c.l.b16 %v18
  %v106 = vunpack.c.l.b16 %v19
  %v107 = vunpack.c.l.b16 %v20
  %v108 = vunpack.c.l.b16 %v21
  %v109 = vunpack.c.l.b16 %v22
  %v110 = vunpack.c.l.b16 %v23
  %v111 = vunpack.c.l.b16 %v24
  %v112 = vunpack.c.l.b16 %v25
  %v113 = vunpack.c.l.b16 %v26
  %v114 = vunpack.c.l.b16 %v27
  %v115 = vunpack.c.l.b16 %v28
  %v116 = vunpack.c.l.b16 %v29
  %v117 = vunpack.c.l.b16 %v30
  %v118 = vunpack.c.l.b16 %v31
  %v119 = vunpack.c.l.b16 %v32
  %v120 = vunpack.c.l.b16 %v33
  %v121 = vunpack.c.l.b16 %v34
  %v122 = vunpack.c.l.b16 %v35
  %v123 = vunpack.c.l.b16 %v36
  %v124 = vunpack.c.l.b16 %v37
  %v125 = vunpack.c.l.b16 %v38
  %v126 = vunpack.c.l.b16 %v39
  %v127 = vunpack.c.l.b16 %v40
  %v128 = vunpack.c.l.b16 %v41
  %v129 = vunpack.c.l.b16 %v42
  %v130 = vunpack.c.l.b16 %v43
  %v131 = vunpack.c.l.b16 %v44
  %v132 = vunpack.c.l.b16 %v45
  %v133 = vunpack.c.l.b16 %v46
  %v134 = vunpack.c.l.b16 %v47
  %v135 = vunpack.c.l.b16 %v48
  %v136 = vpack.c.b16 %v105, %v104
  %v137 = vpack.c.b16 %v107, %v106
  %v138 = vpack.c.b16 %v109, %v108
  %v139 = vpack.c.b16 %v111, %v110
  %v140 = vpack.c.b16 %v113, %v112
  %v141 = vpack.c.b16 %v115, %v114
  %v142 = vpack.c.b16 %v117, %v116
  %v143 = vpack.c.b16 %v119, %v118
  %v144 = vpack.c.b16 %v121, %v120
  %v145 = vpack.c.b16 %v123, %v122
  %v146 = vpack.c.b16 %v125, %v124
  %v147 = vpack.c.b16 %v127, %v126
  %v148 = vpack.c.b16 %v129, %v128
  %v149 = vpack.c.b16 %v131, %v130
  %v150 = vpack.c.b16 %v133, %v132
  %v151 = vpack.c.b16 %v135, %v134
  %v184 = vunpack.c.l.b16 %v49
  %v185 = vunpack.c.l.b16 %v50
  %v186 = vunpack.c.l.b16 %v51
  %v187 = vunpack.c.l.b16 %v52
  %v188 = vunpack.c.l.b16 %v53
  %v189 = vunpack.c.l.b16 %v54
  %v190 = vunpack.c.l.b16 %v55
  %v191 = vunpack.c.l.b16 %v56
  %v192 = vunpack.c.l.b16 %v57
  %v193 = vunpack.c.l.b16 %v58
  %v194 = vunpack.c.l.b16 %v59
  %v195 = vunpack.c.l.b16 %v60
  %v196 = vunpack.c.l.b16 %v61
  %v197 = vunpack.c.l.b16 %v62
  %v198 = vunpack.c.l.b16 %v63
  %v199 = vunpack.c.l.b16 %v64
  %v200 = vpack.c.b16 %v185, %v184
  %v201 = vpack.c.b16 %v187, %v186
  %v202 = vpack.c.b16 %v189, %v188
  %v203 = vpack.c.b16 %v191, %v190
  %v204 = vpack.c.b16 %v193, %v192
  %v205 = vpack.c.b16 %v195, %v194
  %v206 = vpack.c.b16 %v197, %v196
  %v207 = vpack.c.b16 %v199, %v198
  %216 = vmatprep.subr.bf16.mxu0 0
  %217 = vmatpush1.bf16.msra.mxu0 %v200
  %218 = vmatprep.subr.bf16.mxu0 0
  %219 = vmatpush1.bf16.msra.mxu0 %v201
  %220 = vmatprep.subr.bf16.mxu0 0
  %221 = vmatpush1.bf16.msra.mxu0 %v202
  %222 = vmatprep.subr.bf16.mxu0 0
  %223 = vmatpush1.bf16.msra.mxu0 %v203
  %224 = vmatprep.subr.bf16.mxu0 0
  %225 = vmatpush1.bf16.msra.mxu0 %v204
  %226 = vmatprep.subr.bf16.mxu0 0
  %227 = vmatpush1.bf16.msra.mxu0 %v205
  %228 = vmatprep.subr.bf16.mxu0 0
  %229 = vmatpush1.bf16.msra.mxu0 %v206
  %230 = vmatprep.subr.bf16.mxu0 0
  %231 = vmatpush1.bf16.msra.mxu0 %v207
  %232 = vmatprep.subr.bf16.mxu0 0
  %233 = vmatpush1.bf16.msra.mxu0 0
  %234 = vmatprep.subr.bf16.mxu0 0
  %235 = vmatpush1.bf16.msra.mxu0 0
  %236 = vmatprep.subr.bf16.mxu0 0
  %237 = vmatpush1.bf16.msra.mxu0 0
  %238 = vmatprep.subr.bf16.mxu0 0
  %239 = vmatpush1.bf16.msra.mxu0 0
  %240 = vmatprep.subr.bf16.mxu0 0
  %241 = vmatpush1.bf16.msra.mxu0 0
  %242 = vmatprep.subr.bf16.mxu0 0
  %243 = vmatpush1.bf16.msra.mxu0 0
  %244 = vmatprep.subr.bf16.mxu0 0
  %245 = vmatpush1.bf16.msra.mxu0 0
  %246 = vmatprep.subr.bf16.mxu0 0
  %247 = vmatpush1.bf16.msra.mxu0 0
  %248 = vmatprep.mubr.bf16.mxu0 0
  %249 = vmatmul.mubr.bf16.gmra.mrb[0].mxu0 %v136
  %v250 = vpop.f32.mrb[0].mxu0
  %v251 = vadd.f32 %v70, %v250
  %v252 = vpop.f32.mrb[0].mxu0
  %v253 = vpop.f32.mrb[0].mxu0
  %v254 = vadd.f32 %v70, %v253
  %v255 = vpop.f32.mrb[0].mxu0
  %256 = vmatprep.mubr.bf16.mxu0 0
  %257 = vmatmul.mubr.bf16.gmra.mrb[0].mxu0 %v137
  %v258 = vpop.f32.mrb[0].mxu0
  %v259 = vadd.f32 %v70, %v258
  %v260 = vpop.f32.mrb[0].mxu0
  %v261 = vpop.f32.mrb[0].mxu0
  %v262 = vadd.f32 %v70, %v261
  %v263 = vpop.f32.mrb[0].mxu0
  %264 = vmatprep.mubr.bf16.mxu0 0
  %265 = vmatmul.mubr.bf16.gmra.mrb[0].mxu0 %v138
  %v266 = vpop.f32.mrb[0].mxu0
  %v267 = vadd.f32 %v70, %v266
  %v268 = vpop.f32.mrb[0].mxu0
  %v269 = vpop.f32.mrb[0].mxu0
  %v270 = vadd.f32 %v70, %v269
  %v271 = vpop.f32.mrb[0].mxu0
  %272 = vmatprep.mubr.bf16.mxu0 0
  %273 = vmatmul.mubr.bf16.gmra.mrb[0].mxu0 %v139
  %v274 = vpop.f32.mrb[0].mxu0
  %v275 = vadd.f32 %v70, %v274
  %v276 = vpop.f32.mrb[0].mxu0
  %v277 = vpop.f32.mrb[0].mxu0
  %v278 = vadd.f32 %v70, %v277
  %v279 = vpop.f32.mrb[0].mxu0
  %280 = vmatprep.mubr.bf16.mxu0 0
  %281 = vmatmul.mubr.bf16.gmra.mrb[0].mxu0 %v140
  %v282 = vpop.f32.mrb[0].mxu0
  %v283 = vadd.f32 %v70, %v282
  %v284 = vpop.f32.mrb[0].mxu0
  %v285 = vpop.f32.mrb[0].mxu0
  %v286 = vadd.f32 %v70, %v285
  %v287 = vpop.f32.mrb[0].mxu0
  %288 = vmatprep.mubr.bf16.mxu0 0
  %289 = vmatmul.mubr.bf16.gmra.mrb[0].mxu0 %v141
  %v290 = vpop.f32.mrb[0].mxu0
  %v291 = vadd.f32 %v70, %v290
  %v292 = vpop.f32.mrb[0].mxu0
  %v293 = vpop.f32.mrb[0].mxu0
  %v294 = vadd.f32 %v70, %v293
  %v295 = vpop.f32.mrb[0].mxu0
  %296 = vmatprep.mubr.bf16.mxu0 0
  %297 = vmatmul.mubr.bf16.gmra.mrb[0].mxu0 %v142
  %v298 = vpop.f32.mrb[0].mxu0
  %v299 = vadd.f32 %v70, %v298
  %v300 = vpop.f32.mrb[0].mxu0
  %v301 = vpop.f32.mrb[0].mxu0
  %v302 = vadd.f32 %v70, %v301
  %v303 = vpop.f32.mrb[0].mxu0
  %304 = vmatprep.mubr.bf16.mxu0 0
  %305 = vmatmul.mubr.bf16.gmra.mrb[0].mxu0 %v143
  %v306 = vpop.f32.mrb[0].mxu0
  %v307 = vadd.f32 %v70, %v306
  %v308 = vpop.f32.mrb[0].mxu0
  %v309 = vpop.f32.mrb[0].mxu0
  %v310 = vadd.f32 %v70, %v309
  %v311 = vpop.f32.mrb[0].mxu0
  %312 = vmatprep.mubr.bf16.mxu0 0
  %313 = vmatmul.mubr.bf16.gmra.mrb[0].mxu0 %v144
  %v314 = vpop.f32.mrb[0].mxu0
  %v315 = vadd.f32 %v70, %v314
  %v316 = vpop.f32.mrb[0].mxu0
  %v317 = vpop.f32.mrb[0].mxu0
  %v318 = vadd.f32 %v70, %v317
  %v319 = vpop.f32.mrb[0].mxu0
  %320 = vmatprep.mubr.bf16.mxu0 0
  %321 = vmatmul.mubr.bf16.gmra.mrb[0].mxu0 %v145
  %v322 = vpop.f32.mrb[0].mxu0
  %v323 = vadd.f32 %v70, %v322
  %v324 = vpop.f32.mrb[0].mxu0
  %v325 = vpop.f32.mrb[0].mxu0
  %v326 = vadd.f32 %v70, %v325
  %v327 = vpop.f32.mrb[0].mxu0
  %328 = vmatprep.mubr.bf16.mxu0 0
  %329 = vmatmul.mubr.bf16.gmra.mrb[0].mxu0 %v146
  %v330 = vpop.f32.mrb[0].mxu0
  %v331 = vadd.f32 %v70, %v330
  %v332 = vpop.f32.mrb[0].mxu0
  %v333 = vpop.f32.mrb[0].mxu0
  %v334 = vadd.f32 %v70, %v333
  %v335 = vpop.f32.mrb[0].mxu0
  %336 = vmatprep.mubr.bf16.mxu0 0
  %337 = vmatmul.mubr.bf16.gmra.mrb[0].mxu0 %v147
  %v338 = vpop.f32.mrb[0].mxu0
  %v339 = vadd.f32 %v70, %v338
  %v340 = vpop.f32.mrb[0].mxu0
  %v341 = vpop.f32.mrb[0].mxu0
  %v342 = vadd.f32 %v70, %v341
  %v343 = vpop.f32.mrb[0].mxu0
  %344 = vmatprep.mubr.bf16.mxu0 0
  %345 = vmatmul.mubr.bf16.gmra.mrb[0].mxu0 %v148
  %v346 = vpop.f32.mrb[0].mxu0
  %v347 = vadd.f32 %v70, %v346
  %v348 = vpop.f32.mrb[0].mxu0
  %v349 = vpop.f32.mrb[0].mxu0
  %v350 = vadd.f32 %v70, %v349
  %v351 = vpop.f32.mrb[0].mxu0
  %352 = vmatprep.mubr.bf16.mxu0 0
  %353 = vmatmul.mubr.bf16.gmra.mrb[0].mxu0 %v149
  %v354 = vpop.f32.mrb[0].mxu0
  %v355 = vadd.f32 %v70, %v354
  %v356 = vpop.f32.mrb[0].mxu0
  %v357 = vpop.f32.mrb[0].mxu0
  %v358 = vadd.f32 %v70, %v357
  %v359 = vpop.f32.mrb[0].mxu0
  %360 = vmatprep.mubr.bf16.mxu0 0
  %361 = vmatmul.mubr.bf16.gmra.mrb[0].mxu0 %v150
  %v362 = vpop.f32.mrb[0].mxu0
  %v363 = vadd.f32 %v70, %v362
  %v364 = vpop.f32.mrb[0].mxu0
  %v365 = vpop.f32.mrb[0].mxu0
  %v366 = vadd.f32 %v70, %v365
  %v367 = vpop.f32.mrb[0].mxu0
  %368 = vmatprep.mubr.bf16.mxu0 0
  %369 = vmatmul.mubr.bf16.gmra.mrb[0].mxu0 %v151
  %v370 = vpop.f32.mrb[0].mxu0
  %v371 = vadd.f32 %v70, %v370
  %v372 = vpop.f32.mrb[0].mxu0
  %v373 = vpop.f32.mrb[0].mxu0
  %v374 = vadd.f32 %v70, %v373
  %v375 = vpop.f32.mrb[0].mxu0
  %376 = vdwg.mxu0
  %vm377 = vcmp.gt.f32.partialorder %v251, 0.0
  %vm378 = vcmp.gt.f32.partialorder %v254, 0.0
  %vm379 = vcmp.gt.f32.partialorder %v259, 0.0
  %vm380 = vcmp.gt.f32.partialorder %v262, 0.0
  %vm381 = vcmp.gt.f32.partialorder %v267, 0.0
  %vm382 = vcmp.gt.f32.partialorder %v270, 0.0
  %vm383 = vcmp.gt.f32.partialorder %v275, 0.0
  %vm384 = vcmp.gt.f32.partialorder %v278, 0.0
  %vm385 = vcmp.gt.f32.partialorder %v283, 0.0
  %vm386 = vcmp.gt.f32.partialorder %v286, 0.0
  %vm387 = vcmp.gt.f32.partialorder %v291, 0.0
  %vm388 = vcmp.gt.f32.partialorder %v294, 0.0
  %vm389 = vcmp.gt.f32.partialorder %v299, 0.0
  %vm390 = vcmp.gt.f32.partialorder %v302, 0.0
  %vm391 = vcmp.gt.f32.partialorder %v307, 0.0
  %vm392 = vcmp.gt.f32.partialorder %v310, 0.0
  %vm393 = vcmp.gt.f32.partialorder %v315, 0.0
  %vm394 = vcmp.gt.f32.partialorder %v318, 0.0
  %vm395 = vcmp.gt.f32.partialorder %v323, 0.0
  %vm396 = vcmp.gt.f32.partialorder %v326, 0.0
  %vm397 = vcmp.gt.f32.partialorder %v331, 0.0
  %vm398 = vcmp.gt.f32.partialorder %v334, 0.0
  %vm399 = vcmp.gt.f32.partialorder %v339, 0.0
  %vm400 = vcmp.gt.f32.partialorder %v342, 0.0
  %vm401 = vcmp.gt.f32.partialorder %v347, 0.0
  %vm402 = vcmp.gt.f32.partialorder %v350, 0.0
  %vm403 = vcmp.gt.f32.partialorder %v355, 0.0
  %vm404 = vcmp.gt.f32.partialorder %v358, 0.0
  %vm405 = vcmp.gt.f32.partialorder %v363, 0.0
  %vm406 = vcmp.gt.f32.partialorder %v366, 0.0
  %vm407 = vcmp.gt.f32.partialorder %v371, 0.0
  %vm408 = vcmp.gt.f32.partialorder %v374, 0.0
  %v409 = vmul.f32 %v251, 0.1
  %v410 = vmul.f32 %v254, 0.1
  %v411 = vmul.f32 %v259, 0.1
  %v412 = vmul.f32 %v262, 0.1
  %v413 = vmul.f32 %v267, 0.1
  %v414 = vmul.f32 %v270, 0.1
  %v415 = vmul.f32 %v275, 0.1
  %v416 = vmul.f32 %v278, 0.1
  %v417 = vmul.f32 %v283, 0.1
  %v418 = vmul.f32 %v286, 0.1
  %v419 = vmul.f32 %v291, 0.1
  %v420 = vmul.f32 %v294, 0.1
  %v421 = vmul.f32 %v299, 0.1
  %v422 = vmul.f32 %v302, 0.1
  %v423 = vmul.f32 %v307, 0.1
  %v424 = vmul.f32 %v310, 0.1
  %v425 = vmul.f32 %v315, 0.1
  %v426 = vmul.f32 %v318, 0.1
  %v427 = vmul.f32 %v323, 0.1
  %v428 = vmul.f32 %v326, 0.1
  %v429 = vmul.f32 %v331, 0.1
  %v430 = vmul.f32 %v334, 0.1
  %v431 = vmul.f32 %v339, 0.1
  %v432 = vmul.f32 %v342, 0.1
  %v433 = vmul.f32 %v347, 0.1
  %v434 = vmul.f32 %v350, 0.1
  %v435 = vmul.f32 %v355, 0.1
  %v436 = vmul.f32 %v358, 0.1
  %v437 = vmul.f32 %v363, 0.1
  %v438 = vmul.f32 %v366, 0.1
  %v439 = vmul.f32 %v371, 0.1
  %v440 = vmul.f32 %v374, 0.1
  %v441 = vsel %vm377, %v251, %v409
  %v442 = vsel %vm378, %v254, %v410
  %v443 = vsel %vm379, %v259, %v411
  %v444 = vsel %vm380, %v262, %v412
  %v445 = vsel %vm381, %v267, %v413
  %v446 = vsel %vm382, %v270, %v414
  %v447 = vsel %vm383, %v275, %v415
  %v448 = vsel %vm384, %v278, %v416
  %v449 = vsel %vm385, %v283, %v417
  %v450 = vsel %vm386, %v286, %v418
  %v451 = vsel %vm387, %v291, %v419
  %v452 = vsel %vm388, %v294, %v420
  %v453 = vsel %vm389, %v299, %v421
  %v454 = vsel %vm390, %v302, %v422
  %v455 = vsel %vm391, %v307, %v423
  %v456 = vsel %vm392, %v310, %v424
  %v457 = vsel %vm393, %v315, %v425
  %v458 = vsel %vm394, %v318, %v426
  %v459 = vsel %vm395, %v323, %v427
  %v460 = vsel %vm396, %v326, %v428
  %v461 = vsel %vm397, %v331, %v429
  %v462 = vsel %vm398, %v334, %v430
  %v463 = vsel %vm399, %v339, %v431
  %v464 = vsel %vm400, %v342, %v432
  %v465 = vsel %vm401, %v347, %v433
  %v466 = vsel %vm402, %v350, %v434
  %v467 = vsel %vm403, %v355, %v435
  %v468 = vsel %vm404, %v358, %v436
  %v469 = vsel %vm405, %v363, %v437
  %v470 = vsel %vm406, %v366, %v438
  %v471 = vsel %vm407, %v371, %v439
  %v472 = vsel %vm408, %v374, %v440
  %v473 = vpack.c.bf16 %v442, %v441
  %v474 = vpack.c.bf16 %v444, %v443
  %v475 = vpack.c.bf16 %v446, %v445
  %v476 = vpack.c.bf16 %v448, %v447
  %v477 = vpack.c.bf16 %v450, %v449
  %v478 = vpack.c.bf16 %v452, %v451
  %v479 = vpack.c.bf16 %v454, %v453
  %v480 = vpack.c.bf16 %v456, %v455
  %v481 = vpack.c.bf16 %v458, %v457
  %v482 = vpack.c.bf16 %v460, %v459
  %v483 = vpack.c.bf16 %v462, %v461
  %v484 = vpack.c.bf16 %v464, %v463
  %v485 = vpack.c.bf16 %v466, %v465
  %v486 = vpack.c.bf16 %v468, %v467
  %v487 = vpack.c.bf16 %v470, %v469
  %v488 = vpack.c.bf16 %v472, %v471
  %v505 = vunpack.c.l.b16 %v473
  %v506 = vunpack.c.h.b16 %v473
  %v507 = vunpack.c.l.b16 %v474
  %v508 = vunpack.c.h.b16 %v474
  %v509 = vunpack.c.l.b16 %v475
  %v510 = vunpack.c.h.b16 %v475
  %v511 = vunpack.c.l.b16 %v476
  %v512 = vunpack.c.h.b16 %v476
  %v513 = vunpack.c.l.b16 %v477
  %v514 = vunpack.c.h.b16 %v477
  %v515 = vunpack.c.l.b16 %v478
  %v516 = vunpack.c.h.b16 %v478
  %v517 = vunpack.c.l.b16 %v479
  %v518 = vunpack.c.h.b16 %v479
  %v519 = vunpack.c.l.b16 %v480
  %v520 = vunpack.c.h.b16 %v480
  %v521 = vunpack.c.l.b16 %v481
  %v522 = vunpack.c.h.b16 %v481
  %v523 = vunpack.c.l.b16 %v482
  %v524 = vunpack.c.h.b16 %v482
  %v525 = vunpack.c.l.b16 %v483
  %v526 = vunpack.c.h.b16 %v483
  %v527 = vunpack.c.l.b16 %v484
  %v528 = vunpack.c.h.b16 %v484
  %v529 = vunpack.c.l.b16 %v485
  %v530 = vunpack.c.h.b16 %v485
  %v531 = vunpack.c.l.b16 %v486
  %v532 = vunpack.c.h.b16 %v486
  %v533 = vunpack.c.l.b16 %v487
  %v534 = vunpack.c.h.b16 %v487
  %v535 = vunpack.c.l.b16 %v488
  %v536 = vunpack.c.h.b16 %v488
  %v537 = vpack.c.b16 %v505, %v505
  %v538 = vpack.c.b16 %v506, %v506
  %v539 = vpack.c.b16 %v507, %v507
  %v540 = vpack.c.b16 %v508, %v508
  %v541 = vpack.c.b16 %v509, %v509
  %v542 = vpack.c.b16 %v510, %v510
  %v543 = vpack.c.b16 %v511, %v511
  %v544 = vpack.c.b16 %v512, %v512
  %v545 = vpack.c.b16 %v513, %v513
  %v546 = vpack.c.b16 %v514, %v514
  %v547 = vpack.c.b16 %v515, %v515
  %v548 = vpack.c.b16 %v516, %v516
  %v549 = vpack.c.b16 %v517, %v517
  %v550 = vpack.c.b16 %v518, %v518
  %v551 = vpack.c.b16 %v519, %v519
  %v552 = vpack.c.b16 %v520, %v520
  %v553 = vpack.c.b16 %v521, %v521
  %v554 = vpack.c.b16 %v522, %v522
  %v555 = vpack.c.b16 %v523, %v523
  %v556 = vpack.c.b16 %v524, %v524
  %v557 = vpack.c.b16 %v525, %v525
  %v558 = vpack.c.b16 %v526, %v526
  %v559 = vpack.c.b16 %v527, %v527
  %v560 = vpack.c.b16 %v528, %v528
  %v561 = vpack.c.b16 %v529, %v529
  %v562 = vpack.c.b16 %v530, %v530
  %v563 = vpack.c.b16 %v531, %v531
  %v564 = vpack.c.b16 %v532, %v532
  %v565 = vpack.c.b16 %v533, %v533
  %v566 = vpack.c.b16 %v534, %v534
  %v567 = vpack.c.b16 %v535, %v535
  %v568 = vpack.c.b16 %v536, %v536
  %601 = vst [vmem:[%s3] sm:$0xf] %v537
  %602 = vst [vmem:[%s3 + $0x4] sm:$0xf] %v538
  %603 = vst [vmem:[%s3 + $0x8] sm:$0xf] %v539
  %604 = vst [vmem:[%s3 + $0xc] sm:$0xf] %v540
  %605 = vst [vmem:[%s3 + $0x10] sm:$0xf] %v541
  %606 = vst [vmem:[%s3 + $0x14] sm:$0xf] %v542
  %607 = vst [vmem:[%s3 + $0x18] sm:$0xf] %v543
  %608 = vst [vmem:[%s3 + $0x1c] sm:$0xf] %v544
  %609 = vst [vmem:[%s3 + $0x20] sm:$0xf] %v545
  %610 = vst [vmem:[%s3 + $0x24] sm:$0xf] %v546
  %611 = vst [vmem:[%s3 + $0x28] sm:$0xf] %v547
  %612 = vst [vmem:[%s3 + $0x2c] sm:$0xf] %v548
  %613 = vst [vmem:[%s3 + $0x30] sm:$0xf] %v549
  %614 = vst [vmem:[%s3 + $0x34] sm:$0xf] %v550
  %615 = vst [vmem:[%s3 + $0x38] sm:$0xf] %v551
  %616 = vst [vmem:[%s3 + $0x3c] sm:$0xf] %v552
  %617 = vst [vmem:[%s3 + $0x40] sm:$0xf] %v553
  %618 = vst [vmem:[%s3 + $0x44] sm:$0xf] %v554
  %619 = vst [vmem:[%s3 + $0x48] sm:$0xf] %v555
  %620 = vst [vmem:[%s3 + $0x4c] sm:$0xf] %v556
  %621 = vst [vmem:[%s3 + $0x50] sm:$0xf] %v557
  %622 = vst [vmem:[%s3 + $0x54] sm:$0xf] %v558
  %623 = vst [vmem:[%s3 + $0x58] sm:$0xf] %v559
  %624 = vst [vmem:[%s3 + $0x5c] sm:$0xf] %v560
  %625 = vst [vmem:[%s3 + $0x60] sm:$0xf] %v561
  %626 = vst [vmem:[%s3 + $0x64] sm:$0xf] %v562
  %627 = vst [vmem:[%s3 + $0x68] sm:$0xf] %v563
  %628 = vst [vmem:[%s3 + $0x6c] sm:$0xf] %v564
  %629 = vst [vmem:[%s3 + $0x70] sm:$0xf] %v565
  %630 = vst [vmem:[%s3 + $0x74] sm:$0xf] %v566
  %631 = vst [vmem:[%s3 + $0x78] sm:$0xf] %v567
  %632 = vst [vmem:[%s3 + $0x7c] sm:$0xf] %v568
  %s633 = smul.u32 0, 256
  %v634 = vlaneseq
  %v635 = vshrl.u32 %v634, 7
  %v636 = vadd.s32 %v635, 8
  %v637 = vadd.s32 %v635, 16
  %v638 = vadd.s32 %v635, 24
  %v639 = vadd.s32 %v635, 32
  %v640 = vadd.s32 %v635, 40
  %v641 = vadd.s32 %v635, 48
  %v642 = vadd.s32 %v635, 56
  %v643 = vadd.s32 %v635, 64
  %v644 = vadd.s32 %v635, 72
  %v645 = vadd.s32 %v635, 80
  %v646 = vadd.s32 %v635, 88
  %v647 = vadd.s32 %v635, 96
  %v648 = vadd.s32 %v635, 104
  %v649 = vadd.s32 %v635, 112
  %v650 = vadd.s32 %v635, 120
  %v651 = vadd.s32 %v635, 128
  %v652 = vadd.s32 %v635, 136
  %v653 = vadd.s32 %v635, 144
  %v654 = vadd.s32 %v635, 152
  %v655 = vadd.s32 %v635, 160
  %v656 = vadd.s32 %v635, 168
  %v657 = vadd.s32 %v635, 176
  %v658 = vadd.s32 %v635, 184
  %v659 = vadd.s32 %v635, 192
  %v660 = vadd.s32 %v635, 200
  %v661 = vadd.s32 %v635, 208
  %v662 = vadd.s32 %v635, 216
  %v663 = vadd.s32 %v635, 224
  %v664 = vadd.s32 %v635, 232
  %v665 = vadd.s32 %v635, 240
  %v666 = vadd.s32 %v635, 248
  %v667 = vstv %s633
  %v668 = vadd.s32 %v667, %v635
  %v669 = vadd.s32 %v667, %v636
  %v670 = vadd.s32 %v667, %v637
  %v671 = vadd.s32 %v667, %v638
  %v672 = vadd.s32 %v667, %v639
  %v673 = vadd.s32 %v667, %v640
  %v674 = vadd.s32 %v667, %v641
  %v675 = vadd.s32 %v667, %v642
  %v676 = vadd.s32 %v667, %v643
  %v677 = vadd.s32 %v667, %v644
  %v678 = vadd.s32 %v667, %v645
  %v679 = vadd.s32 %v667, %v646
  %v680 = vadd.s32 %v667, %v647
  %v681 = vadd.s32 %v667, %v648
  %v682 = vadd.s32 %v667, %v649
  %v683 = vadd.s32 %v667, %v650
  %v684 = vadd.s32 %v667, %v651
  %v685 = vadd.s32 %v667, %v652
  %v686 = vadd.s32 %v667, %v653
  %v687 = vadd.s32 %v667, %v654
  %v688 = vadd.s32 %v667, %v655
  %v689 = vadd.s32 %v667, %v656
  %v690 = vadd.s32 %v667, %v657
  %v691 = vadd.s32 %v667, %v658
  %v692 = vadd.s32 %v667, %v659
  %v693 = vadd.s32 %v667, %v660
  %v694 = vadd.s32 %v667, %v661
  %v695 = vadd.s32 %v667, %v662
  %v696 = vadd.s32 %v667, %v663
  %v697 = vadd.s32 %v667, %v664
  %v698 = vadd.s32 %v667, %v665
  %v699 = vadd.s32 %v667, %v666
  %vm700 = vcmp.lt.s32.totalorder %v668, 16
  %vm701 = vcmp.lt.s32.totalorder %v669, 16
  %vm702 = vcmp.lt.s32.totalorder %v670, 16
  %vm703 = vcmp.lt.s32.totalorder %v671, 16
  %vm704 = vcmp.lt.s32.totalorder %v672, 16
  %vm705 = vcmp.lt.s32.totalorder %v673, 16
  %vm706 = vcmp.lt.s32.totalorder %v674, 16
  %vm707 = vcmp.lt.s32.totalorder %v675, 16
  %vm708 = vcmp.lt.s32.totalorder %v676, 16
  %vm709 = vcmp.lt.s32.totalorder %v677, 16
  %vm710 = vcmp.lt.s32.totalorder %v678, 16
  %vm711 = vcmp.lt.s32.totalorder %v679, 16
  %vm712 = vcmp.lt.s32.totalorder %v680, 16
  %vm713 = vcmp.lt.s32.totalorder %v681, 16
  %vm714 = vcmp.lt.s32.totalorder %v682, 16
  %vm715 = vcmp.lt.s32.totalorder %v683, 16
  %vm716 = vcmp.lt.s32.totalorder %v684, 16
  %vm717 = vcmp.lt.s32.totalorder %v685, 16
  %vm718 = vcmp.lt.s32.totalorder %v686, 16
  %vm719 = vcmp.lt.s32.totalorder %v687, 16
  %vm720 = vcmp.lt.s32.totalorder %v688, 16
  %vm721 = vcmp.lt.s32.totalorder %v689, 16
  %vm722 = vcmp.lt.s32.totalorder %v690, 16
  %vm723 = vcmp.lt.s32.totalorder %v691, 16
  %vm724 = vcmp.lt.s32.totalorder %v692, 16
  %vm725 = vcmp.lt.s32.totalorder %v693, 16
  %vm726 = vcmp.lt.s32.totalorder %v694, 16
  %vm727 = vcmp.lt.s32.totalorder %v695, 16
  %vm728 = vcmp.lt.s32.totalorder %v696, 16
  %vm729 = vcmp.lt.s32.totalorder %v697, 16
  %vm730 = vcmp.lt.s32.totalorder %v698, 16
  %vm731 = vcmp.lt.s32.totalorder %v699, 16
  %v732 = vsel %vm700, %v441, 0.0
  %v733 = vsel %vm701, %v442, 0.0
  %v734 = vsel %vm702, %v443, 0.0
  %v735 = vsel %vm703, %v444, 0.0
  %v736 = vsel %vm704, %v445, 0.0
  %v737 = vsel %vm705, %v446, 0.0
  %v738 = vsel %vm706, %v447, 0.0
  %v739 = vsel %vm707, %v448, 0.0
  %v740 = vsel %vm708, %v449, 0.0
  %v741 = vsel %vm709, %v450, 0.0
  %v742 = vsel %vm710, %v451, 0.0
  %v743 = vsel %vm711, %v452, 0.0
  %v744 = vsel %vm712, %v453, 0.0
  %v745 = vsel %vm713, %v454, 0.0
  %v746 = vsel %vm714, %v455, 0.0
  %v747 = vsel %vm715, %v456, 0.0
  %v748 = vsel %vm716, %v457, 0.0
  %v749 = vsel %vm717, %v458, 0.0
  %v750 = vsel %vm718, %v459, 0.0
  %v751 = vsel %vm719, %v460, 0.0
  %v752 = vsel %vm720, %v461, 0.0
  %v753 = vsel %vm721, %v462, 0.0
  %v754 = vsel %vm722, %v463, 0.0
  %v755 = vsel %vm723, %v464, 0.0
  %v756 = vsel %vm724, %v465, 0.0
  %v757 = vsel %vm725, %v466, 0.0
  %v758 = vsel %vm726, %v467, 0.0
  %v759 = vsel %vm727, %v468, 0.0
  %v760 = vsel %vm728, %v469, 0.0
  %v761 = vsel %vm729, %v470, 0.0
  %v762 = vsel %vm730, %v471, 0.0
  %v763 = vsel %vm731, %v472, 0.0
  %v764 = vadd.f32 %v732, %v733
  %v765 = vadd.f32 %v764, %v734
  %v766 = vadd.f32 %v765, %v735
  %v767 = vadd.f32 %v766, %v736
  %v768 = vadd.f32 %v767, %v737
  %v769 = vadd.f32 %v768, %v738
  %v770 = vadd.f32 %v769, %v739
  %v771 = vadd.f32 %v770, %v740
  %v772 = vadd.f32 %v771, %v741
  %v773 = vadd.f32 %v772, %v742
  %v774 = vadd.f32 %v773, %v743
  %v775 = vadd.f32 %v774, %v744
  %v776 = vadd.f32 %v775, %v745
  %v777 = vadd.f32 %v776, %v746
  %v778 = vadd.f32 %v777, %v747
  %v779 = vadd.f32 %v778, %v748
  %v780 = vadd.f32 %v779, %v749
  %v781 = vadd.f32 %v780, %v750
  %v782 = vadd.f32 %v781, %v751
  %v783 = vadd.f32 %v782, %v752
  %v784 = vadd.f32 %v783, %v753
  %v785 = vadd.f32 %v784, %v754
  %v786 = vadd.f32 %v785, %v755
  %v787 = vadd.f32 %v786, %v756
  %v788 = vadd.f32 %v787, %v757
  %v789 = vadd.f32 %v788, %v758
  %v790 = vadd.f32 %v789, %v759
  %v791 = vadd.f32 %v790, %v760
  %v792 = vadd.f32 %v791, %v761
  %v793 = vadd.f32 %v792, %v762
  %v794 = vadd.f32 %v793, %v763
  %v795 = vrot.slane %v794, 4
  %v796 = vadd.f32 %v794, %v795
  %v797 = vrot.slane %v796, 2
  %v798 = vadd.f32 %v796, %v797
  %v799 = vrot.slane %v798, 1
  %v800 = vadd.f32 %v798, %v799
  %v801 = vmul.f32 %v732, %v732
  %v802 = vmul.f32 %v733, %v733
  %v803 = vmul.f32 %v734, %v734
  %v804 = vmul.f32 %v735, %v735
  %v805 = vmul.f32 %v736, %v736
  %v806 = vmul.f32 %v737, %v737
  %v807 = vmul.f32 %v738, %v738
  %v808 = vmul.f32 %v739, %v739
  %v809 = vmul.f32 %v740, %v740
  %v810 = vmul.f32 %v741, %v741
  %v811 = vmul.f32 %v742, %v742
  %v812 = vmul.f32 %v743, %v743
  %v813 = vmul.f32 %v744, %v744
  %v814 = vmul.f32 %v745, %v745
  %v815 = vmul.f32 %v746, %v746
  %v816 = vmul.f32 %v747, %v747
  %v817 = vmul.f32 %v748, %v748
  %v818 = vmul.f32 %v749, %v749
  %v819 = vmul.f32 %v750, %v750
  %v820 = vmul.f32 %v751, %v751
  %v821 = vmul.f32 %v752, %v752
  %v822 = vmul.f32 %v753, %v753
  %v823 = vmul.f32 %v754, %v754
  %v824 = vmul.f32 %v755, %v755
  %v825 = vmul.f32 %v756, %v756
  %v826 = vmul.f32 %v757, %v757
  %v827 = vmul.f32 %v758, %v758
  %v828 = vmul.f32 %v759, %v759
  %v829 = vmul.f32 %v760, %v760
  %v830 = vmul.f32 %v761, %v761
  %v831 = vmul.f32 %v762, %v762
  %v832 = vmul.f32 %v763, %v763
  %v833 = vadd.f32 %v801, %v802
  %v834 = vadd.f32 %v833, %v803
  %v835 = vadd.f32 %v834, %v804
  %v836 = vadd.f32 %v835, %v805
  %v837 = vadd.f32 %v836, %v806
  %v838 = vadd.f32 %v837, %v807
  %v839 = vadd.f32 %v838, %v808
  %v840 = vadd.f32 %v839, %v809
  %v841 = vadd.f32 %v840, %v810
  %v842 = vadd.f32 %v841, %v811
  %v843 = vadd.f32 %v842, %v812
  %v844 = vadd.f32 %v843, %v813
  %v845 = vadd.f32 %v844, %v814
  %v846 = vadd.f32 %v845, %v815
  %v847 = vadd.f32 %v846, %v816
  %v848 = vadd.f32 %v847, %v817
  %v849 = vadd.f32 %v848, %v818
  %v850 = vadd.f32 %v849, %v819
  %v851 = vadd.f32 %v850, %v820
  %v852 = vadd.f32 %v851, %v821
  %v853 = vadd.f32 %v852, %v822
  %v854 = vadd.f32 %v853, %v823
  %v855 = vadd.f32 %v854, %v824
  %v856 = vadd.f32 %v855, %v825
  %v857 = vadd.f32 %v856, %v826
  %v858 = vadd.f32 %v857, %v827
  %v859 = vadd.f32 %v858, %v828
  %v860 = vadd.f32 %v859, %v829
  %v861 = vadd.f32 %v860, %v830
  %v862 = vadd.f32 %v861, %v831
  %v863 = vadd.f32 %v862, %v832
  %v864 = vrot.slane %v863, 4
  %v865 = vadd.f32 %v863, %v864
  %v866 = vrot.slane %v865, 2
  %v867 = vadd.f32 %v865, %v866
  %v868 = vrot.slane %v867, 1
  %v869 = vadd.f32 %v867, %v868
  %vm870 = vcmp.eq.s32.totalorder %v635, 0
  %vm871 = vcmp.eq.s32.totalorder %v635, 1
  %v872 = vsel %vm871, %v869, 0.0
  %v873 = vsel %vm870, %v800, %v872
  %874 = vst [vmem:[%s4] sm:$0xff] %v873
  // Predicated region
  $region14: #{predictor_unisage_forward.7} parent=0 // pred_check
    _
  $region15: #{predictor_unisage_forward.7} parent=0 // pred_check_branch
    %876 = sbr.rel (0) target = $region17
  $region16: #{predictor_unisage_forward.7} parent=0 // pred_region
    _
  $region17: #{predictor_unisage_forward.7} parent=0 // pred_fallthru
    _
  // Predicated region
  $region18: #{predictor_unisage_forward.7} parent=0 // pred_check
    _
  $region19: #{predictor_unisage_forward.7} parent=0 // pred_check_branch
    %878 = sbr.rel (0) target = $region21
  $region20: #{predictor_unisage_forward.7} parent=0 // pred_region
    _
  $region21: #{predictor_unisage_forward.7} parent=0 // pred_fallthru
    _
  // Predicated region
  $region22: #{predictor_unisage_forward.7} parent=0 // pred_check
    _
  $region23: #{predictor_unisage_forward.7} parent=0 // pred_check_branch
    %880 = sbr.rel (0) target = $region25
  $region24: #{predictor_unisage_forward.7} parent=0 // pred_region
    _
  $region25: #{predictor_unisage_forward.7} parent=0 // pred_fallthru
    _
  // Predicated region
  $region26: #{predictor_unisage_forward.7} parent=0 // pred_check
    _
  $region27: #{predictor_unisage_forward.7} parent=0 // pred_check_branch
    %882 = sbr.rel (0) target = $region29
  $region28: #{predictor_unisage_forward.7} parent=0 // pred_region
    _
  $region29: #{predictor_unisage_forward.7} parent=0 // pred_fallthru
    _

// kernel: predictor_unisage_forward.9
$region0: #{predictor_unisage_forward.9}
  #allocation0 [shape = 'u32[]', space=smem, size = 0x4, offset = 0x4, fixed_abs, tag = 'smem constant byte address 0x4 - core index']
  #allocation1 [shape = 'u32[144,128]{1,0:T(1,128)}', space=vmem, size = 0x12000, scoped, tag = 'internal scratch']
  #allocation2 [shape = 'f32[256,128]{1,0:T(8,128)}', space=vmem, size = 0x20000, scoped, tag = 'scratch operand']
  %s0 = inlined_call_operand.vmem [shape: s8[256,256], index: 0, kind: input, shape index: {}]
  %s1 = inlined_call_operand.vmem [shape: bf16[256,128], index: 1, kind: input, shape index: {}]
  %s2 = inlined_call_operand.vmem [shape: f32[256,1], index: 2, kind: input, shape index: {}]
  %s3 = inlined_call_operand.vmem [shape: bf16[256,128], index: 3, kind: output, shape index: {}]
  %s4 = sld [smem:[#allocation0]]
  $region30: #{predictor_unisage_forward.9} parent=0
    _
  %s6 = ssub.s32 1, %s4
  %s7 = scalar_select 0, %s6, %s4
  // Predicated region
  $region2: #{predictor_unisage_forward.9} parent=0 // pred_check
    _
  $region3: #{predictor_unisage_forward.9} parent=0 // pred_check_branch
    %9 = sbr.rel (0) target = $region5
  $region4: #{predictor_unisage_forward.9} parent=0 // pred_region
    _
  $region5: #{predictor_unisage_forward.9} parent=0 // pred_fallthru
    _
  // Predicated region
  $region6: #{predictor_unisage_forward.9} parent=0 // pred_check
    _
  $region7: #{predictor_unisage_forward.9} parent=0 // pred_check_branch
    %11 = sbr.rel (0) target = $region9
  $region8: #{predictor_unisage_forward.9} parent=0 // pred_region
    _
  $region9: #{predictor_unisage_forward.9} parent=0 // pred_fallthru
    _
  // Predicated region
  $region10: #{predictor_unisage_forward.9} parent=0 // pred_check
    _
  $region11: #{predictor_unisage_forward.9} parent=0 // pred_check_branch
    %13 = sbr.rel (0) target = $region13
  $region12: #{predictor_unisage_forward.9} parent=0 // pred_region
    _
  $region13: #{predictor_unisage_forward.9} parent=0 // pred_fallthru
    _
  %p15 = scmp.eq.s32.totalorder 0, 0
  // Predicated region
  $region14: #{predictor_unisage_forward.9} parent=0 // pred_check
    %p16 = pneg %p15
  $region15: #{predictor_unisage_forward.9} parent=0 // pred_check_branch
    %18 = sbr.rel (%p16) target = $region17
  $region16: #{predictor_unisage_forward.9} parent=0 // pred_region
    %19 = vst [vmem:[#allocation2] sm:$0xff] 0.0
    %20 = vst [vmem:[#allocation2 + $0x8] sm:$0xff] 0.0
    %21 = vst [vmem:[#allocation2 + $0x10] sm:$0xff] 0.0
    %22 = vst [vmem:[#allocation2 + $0x18] sm:$0xff] 0.0
    %23 = vst [vmem:[#allocation2 + $0x20] sm:$0xff] 0.0
    %24 = vst [vmem:[#allocation2 + $0x28] sm:$0xff] 0.0
    %25 = vst [vmem:[#allocation2 + $0x30] sm:$0xff] 0.0
    %26 = vst [vmem:[#allocation2 + $0x38] sm:$0xff] 0.0
    %27 = vst [vmem:[#allocation2 + $0x40] sm:$0xff] 0.0
    %28 = vst [vmem:[#allocation2 + $0x48] sm:$0xff] 0.0
    %29 = vst [vmem:[#allocation2 + $0x50] sm:$0xff] 0.0
    %30 = vst [vmem:[#allocation2 + $0x58] sm:$0xff] 0.0
    %31 = vst [vmem:[#allocation2 + $0x60] sm:$0xff] 0.0
    %32 = vst [vmem:[#allocation2 + $0x68] sm:$0xff] 0.0
    %33 = vst [vmem:[#allocation2 + $0x70] sm:$0xff] 0.0
    %34 = vst [vmem:[#allocation2 + $0x78] sm:$0xff] 0.0
    %35 = vst [vmem:[#allocation2 + $0x80] sm:$0xff] 0.0
    %36 = vst [vmem:[#allocation2 + $0x88] sm:$0xff] 0.0
    %37 = vst [vmem:[#allocation2 + $0x90] sm:$0xff] 0.0
    %38 = vst [vmem:[#allocation2 + $0x98] sm:$0xff] 0.0
    %39 = vst [vmem:[#allocation2 + $0xa0] sm:$0xff] 0.0
    %40 = vst [vmem:[#allocation2 + $0xa8] sm:$0xff] 0.0
    %41 = vst [vmem:[#allocation2 + $0xb0] sm:$0xff] 0.0
    %42 = vst [vmem:[#allocation2 + $0xb8] sm:$0xff] 0.0
    %43 = vst [vmem:[#allocation2 + $0xc0] sm:$0xff] 0.0
    %44 = vst [vmem:[#allocation2 + $0xc8] sm:$0xff] 0.0
    %45 = vst [vmem:[#allocation2 + $0xd0] sm:$0xff] 0.0
    %46 = vst [vmem:[#allocation2 + $0xd8] sm:$0xff] 0.0
    %47 = vst [vmem:[#allocation2 + $0xe0] sm:$0xff] 0.0
    %48 = vst [vmem:[#allocation2 + $0xe8] sm:$0xff] 0.0
    %49 = vst [vmem:[#allocation2 + $0xf0] sm:$0xff] 0.0
    %50 = vst [vmem:[#allocation2 + $0xf8] sm:$0xff] 0.0
  $region17: #{predictor_unisage_forward.9} parent=0 // pred_fallthru
    _
  %v51 = vld [vmem:[%s0] sm:$0xff]
  %v52 = vld [vmem:[%s0 + $0x8] sm:$0xff]
  %v53 = vld [vmem:[%s0 + $0x10] sm:$0xff]
  %v54 = vld [vmem:[%s0 + $0x18] sm:$0xff]
  %v55 = vld [vmem:[%s0 + $0x20] sm:$0xff]
  %v56 = vld [vmem:[%s0 + $0x28] sm:$0xff]
  %v57 = vld [vmem:[%s0 + $0x30] sm:$0xff]
  %v58 = vld [vmem:[%s0 + $0x38] sm:$0xff]
  %v59 = vld [vmem:[%s0 + $0x40] sm:$0xff]
  %v60 = vld [vmem:[%s0 + $0x48] sm:$0xff]
  %v61 = vld [vmem:[%s0 + $0x50] sm:$0xff]
  %v62 = vld [vmem:[%s0 + $0x58] sm:$0xff]
  %v63 = vld [vmem:[%s0 + $0x60] sm:$0xff]
  %v64 = vld [vmem:[%s0 + $0x68] sm:$0xff]
  %v65 = vld [vmem:[%s0 + $0x70] sm:$0xff]
  %v66 = vld [vmem:[%s0 + $0x78] sm:$0xff]
  %v67 = vunpack.c.l.s8.bf16 %v51
  %v68 = vunpack.c.l.s8.bf16 %v52
  %v69 = vunpack.c.h.s8.bf16 %v51
  %v70 = vunpack.c.h.s8.bf16 %v52
  %v71 = vunpack.c.l.s8.bf16 %v53
  %v72 = vunpack.c.l.s8.bf16 %v54
  %v73 = vunpack.c.h.s8.bf16 %v53
  %v74 = vunpack.c.h.s8.bf16 %v54
  %v75 = vunpack.c.l.s8.bf16 %v55
  %v76 = vunpack.c.l.s8.bf16 %v56
  %v77 = vunpack.c.h.s8.bf16 %v55
  %v78 = vunpack.c.h.s8.bf16 %v56
  %v79 = vunpack.c.l.s8.bf16 %v57
  %v80 = vunpack.c.l.s8.bf16 %v58
  %v81 = vunpack.c.h.s8.bf16 %v57
  %v82 = vunpack.c.h.s8.bf16 %v58
  %v83 = vunpack.c.l.s8.bf16 %v59
  %v84 = vunpack.c.l.s8.bf16 %v60
  %v85 = vunpack.c.h.s8.bf16 %v59
  %v86 = vunpack.c.h.s8.bf16 %v60
  %v87 = vunpack.c.l.s8.bf16 %v61
  %v88 = vunpack.c.l.s8.bf16 %v62
  %v89 = vunpack.c.h.s8.bf16 %v61
  %v90 = vunpack.c.h.s8.bf16 %v62
  %v91 = vunpack.c.l.s8.bf16 %v63
  %v92 = vunpack.c.l.s8.bf16 %v64
  %v93 = vunpack.c.h.s8.bf16 %v63
  %v94 = vunpack.c.h.s8.bf16 %v64
  %v95 = vunpack.c.l.s8.bf16 %v65
  %v96 = vunpack.c.l.s8.bf16 %v66
  %v97 = vunpack.c.h.s8.bf16 %v65
  %v98 = vunpack.c.h.s8.bf16 %v66
  %s99 = smul.u32 0, 256
  %s100 = sshra.s32 %s99, 3
  %s101 = sand.u32 %s99, 7
  %s102 = smul.addr %s100, 4
  %s103 = scalar_lea.vmem %s1, %s102
  %v104 = vld [vmem:[%s103] sm:$0xf]
  %v105 = vld [vmem:[%s103 + $0x4] sm:$0xf]
  %v106 = vld [vmem:[%s103 + $0x8] sm:$0xf]
  %v107 = vld [vmem:[%s103 + $0xc] sm:$0xf]
  %v108 = vld [vmem:[%s103 + $0x10] sm:$0xf]
  %v109 = vld [vmem:[%s103 + $0x14] sm:$0xf]
  %v110 = vld [vmem:[%s103 + $0x18] sm:$0xf]
  %v111 = vld [vmem:[%s103 + $0x1c] sm:$0xf]
  %v112 = vld [vmem:[%s103 + $0x20] sm:$0xf]
  %v113 = vld [vmem:[%s103 + $0x24] sm:$0xf]
  %v114 = vld [vmem:[%s103 + $0x28] sm:$0xf]
  %v115 = vld [vmem:[%s103 + $0x2c] sm:$0xf]
  %v116 = vld [vmem:[%s103 + $0x30] sm:$0xf]
  %v117 = vld [vmem:[%s103 + $0x34] sm:$0xf]
  %v118 = vld [vmem:[%s103 + $0x38] sm:$0xf]
  %v119 = vld [vmem:[%s103 + $0x3c] sm:$0xf]
  %v120 = vld [vmem:[%s103 + $0x40] sm:$0xf]
  %v121 = vld [vmem:[%s103 + $0x44] sm:$0xf]
  %v122 = vld [vmem:[%s103 + $0x48] sm:$0xf]
  %v123 = vld [vmem:[%s103 + $0x4c] sm:$0xf]
  %v124 = vld [vmem:[%s103 + $0x50] sm:$0xf]
  %v125 = vld [vmem:[%s103 + $0x54] sm:$0xf]
  %v126 = vld [vmem:[%s103 + $0x58] sm:$0xf]
  %v127 = vld [vmem:[%s103 + $0x5c] sm:$0xf]
  %v128 = vld [vmem:[%s103 + $0x60] sm:$0xf]
  %v129 = vld [vmem:[%s103 + $0x64] sm:$0xf]
  %v130 = vld [vmem:[%s103 + $0x68] sm:$0xf]
  %v131 = vld [vmem:[%s103 + $0x6c] sm:$0xf]
  %v132 = vld [vmem:[%s103 + $0x70] sm:$0xf]
  %v133 = vld [vmem:[%s103 + $0x74] sm:$0xf]
  %v134 = vld [vmem:[%s103 + $0x78] sm:$0xf]
  %v135 = vld [vmem:[%s103 + $0x7c] sm:$0xf]
  %v136 = vld [vmem:[#allocation2] sm:$0xff]
  %v137 = vld [vmem:[#allocation2 + $0x8] sm:$0xff]
  %v138 = vld [vmem:[#allocation2 + $0x10] sm:$0xff]
  %v139 = vld [vmem:[#allocation2 + $0x18] sm:$0xff]
  %v140 = vld [vmem:[#allocation2 + $0x20] sm:$0xff]
  %v141 = vld [vmem:[#allocation2 + $0x28] sm:$0xff]
  %v142 = vld [vmem:[#allocation2 + $0x30] sm:$0xff]
  %v143 = vld [vmem:[#allocation2 + $0x38] sm:$0xff]
  %v144 = vld [vmem:[#allocation2 + $0x40] sm:$0xff]
  %v145 = vld [vmem:[#allocation2 + $0x48] sm:$0xff]
  %v146 = vld [vmem:[#allocation2 + $0x50] sm:$0xff]
  %v147 = vld [vmem:[#allocation2 + $0x58] sm:$0xff]
  %v148 = vld [vmem:[#allocation2 + $0x60] sm:$0xff]
  %v149 = vld [vmem:[#allocation2 + $0x68] sm:$0xff]
  %v150 = vld [vmem:[#allocation2 + $0x70] sm:$0xff]
  %v151 = vld [vmem:[#allocation2 + $0x78] sm:$0xff]
  %v152 = vld [vmem:[#allocation2 + $0x80] sm:$0xff]
  %v153 = vld [vmem:[#allocation2 + $0x88] sm:$0xff]
  %v154 = vld [vmem:[#allocation2 + $0x90] sm:$0xff]
  %v155 = vld [vmem:[#allocation2 + $0x98] sm:$0xff]
  %v156 = vld [vmem:[#allocation2 + $0xa0] sm:$0xff]
  %v157 = vld [vmem:[#allocation2 + $0xa8] sm:$0xff]
  %v158 = vld [vmem:[#allocation2 + $0xb0] sm:$0xff]
  %v159 = vld [vmem:[#allocation2 + $0xb8] sm:$0xff]
  %v160 = vld [vmem:[#allocation2 + $0xc0] sm:$0xff]
  %v161 = vld [vmem:[#allocation2 + $0xc8] sm:$0xff]
  %v162 = vld [vmem:[#allocation2 + $0xd0] sm:$0xff]
  %v163 = vld [vmem:[#allocation2 + $0xd8] sm:$0xff]
  %v164 = vld [vmem:[#allocation2 + $0xe0] sm:$0xff]
  %v165 = vld [vmem:[#allocation2 + $0xe8] sm:$0xff]
  %v166 = vld [vmem:[#allocation2 + $0xf0] sm:$0xff]
  %v167 = vld [vmem:[#allocation2 + $0xf8] sm:$0xff]
  %v200 = vunpack.c.l.b16 %v104
  %v201 = vunpack.c.l.b16 %v105
  %v202 = vunpack.c.l.b16 %v106
  %v203 = vunpack.c.l.b16 %v107
  %v204 = vunpack.c.l.b16 %v108
  %v205 = vunpack.c.l.b16 %v109
  %v206 = vunpack.c.l.b16 %v110
  %v207 = vunpack.c.l.b16 %v111
  %v208 = vunpack.c.l.b16 %v112
  %v209 = vunpack.c.l.b16 %v113
  %v210 = vunpack.c.l.b16 %v114
  %v211 = vunpack.c.l.b16 %v115
  %v212 = vunpack.c.l.b16 %v116
  %v213 = vunpack.c.l.b16 %v117
  %v214 = vunpack.c.l.b16 %v118
  %v215 = vunpack.c.l.b16 %v119
  %v216 = vunpack.c.l.b16 %v120
  %v217 = vunpack.c.l.b16 %v121
  %v218 = vunpack.c.l.b16 %v122
  %v219 = vunpack.c.l.b16 %v123
  %v220 = vunpack.c.l.b16 %v124
  %v221 = vunpack.c.l.b16 %v125
  %v222 = vunpack.c.l.b16 %v126
  %v223 = vunpack.c.l.b16 %v127
  %v224 = vunpack.c.l.b16 %v128
  %v225 = vunpack.c.l.b16 %v129
  %v226 = vunpack.c.l.b16 %v130
  %v227 = vunpack.c.l.b16 %v131
  %v228 = vunpack.c.l.b16 %v132
  %v229 = vunpack.c.l.b16 %v133
  %v230 = vunpack.c.l.b16 %v134
  %v231 = vunpack.c.l.b16 %v135
  %v232 = vpack.c.b16 %v201, %v200
  %v233 = vpack.c.b16 %v203, %v202
  %v234 = vpack.c.b16 %v205, %v204
  %v235 = vpack.c.b16 %v207, %v206
  %v236 = vpack.c.b16 %v209, %v208
  %v237 = vpack.c.b16 %v211, %v210
  %v238 = vpack.c.b16 %v213, %v212
  %v239 = vpack.c.b16 %v215, %v214
  %v240 = vpack.c.b16 %v217, %v216
  %v241 = vpack.c.b16 %v219, %v218
  %v242 = vpack.c.b16 %v221, %v220
  %v243 = vpack.c.b16 %v223, %v222
  %v244 = vpack.c.b16 %v225, %v224
  %v245 = vpack.c.b16 %v227, %v226
  %v246 = vpack.c.b16 %v229, %v228
  %v247 = vpack.c.b16 %v231, %v230
  %264 = vmatprep.subr.bf16.mxu0 0
  %265 = vmatpush1.bf16.msra.mxu0 %v232
  %266 = vmatprep.subr.bf16.mxu0 0
  %267 = vmatpush1.bf16.msra.mxu0 %v233
  %268 = vmatprep.subr.bf16.mxu0 0
  %269 = vmatpush1.bf16.msra.mxu0 %v234
  %270 = vmatprep.subr.bf16.mxu0 0
  %271 = vmatpush1.bf16.msra.mxu0 %v235
  %272 = vmatprep.subr.bf16.mxu0 0
  %273 = vmatpush1.bf16.msra.mxu0 %v236
  %274 = vmatprep.subr.bf16.mxu0 0
  %275 = vmatpush1.bf16.msra.mxu0 %v237
  %276 = vmatprep.subr.bf16.mxu0 0
  %277 = vmatpush1.bf16.msra.mxu0 %v238
  %278 = vmatprep.subr.bf16.mxu0 0
  %279 = vmatpush1.bf16.msra.mxu0 %v239
  %280 = vmatprep.subr.bf16.mxu0 0
  %281 = vmatpush1.bf16.msra.mxu0 %v240
  %282 = vmatprep.subr.bf16.mxu0 0
  %283 = vmatpush1.bf16.msra.mxu0 %v241
  %284 = vmatprep.subr.bf16.mxu0 0
  %285 = vmatpush1.bf16.msra.mxu0 %v242
  %286 = vmatprep.subr.bf16.mxu0 0
  %287 = vmatpush1.bf16.msra.mxu0 %v243
  %288 = vmatprep.subr.bf16.mxu0 0
  %289 = vmatpush1.bf16.msra.mxu0 %v244
  %290 = vmatprep.subr.bf16.mxu0 0
  %291 = vmatpush1.bf16.msra.mxu0 %v245
  %292 = vmatprep.subr.bf16.mxu0 0
  %293 = vmatpush1.bf16.msra.mxu0 %v246
  %294 = vmatprep.subr.bf16.mxu0 0
  %295 = vmatpush1.bf16.msra.mxu0 %v247
  %296 = vmatprep.mubr.bf16.mxu0 %v68
  %297 = vmatmul.mubr.bf16.gmra.mrb[0].mxu0 %v67
  %v298 = vpop.f32.mrb[0].mxu0
  %v299 = vadd.f32 0.0, %v298
  %v300 = vpop.f32.mrb[0].mxu0
  %v301 = vpop.f32.mrb[0].mxu0
  %v302 = vadd.f32 0.0, %v301
  %v303 = vpop.f32.mrb[0].mxu0
  %304 = vmatprep.mubr.bf16.mxu0 %v70
  %305 = vmatmul.mubr.bf16.gmra.mrb[0].mxu0 %v69
  %v306 = vpop.f32.mrb[0].mxu0
  %v307 = vadd.f32 0.0, %v306
  %v308 = vpop.f32.mrb[0].mxu0
  %v309 = vpop.f32.mrb[0].mxu0
  %v310 = vadd.f32 0.0, %v309
  %v311 = vpop.f32.mrb[0].mxu0
  %312 = vmatprep.mubr.bf16.mxu0 %v72
  %313 = vmatmul.mubr.bf16.gmra.mrb[0].mxu0 %v71
  %v314 = vpop.f32.mrb[0].mxu0
  %v315 = vadd.f32 0.0, %v314
  %v316 = vpop.f32.mrb[0].mxu0
  %v317 = vpop.f32.mrb[0].mxu0
  %v318 = vadd.f32 0.0, %v317
  %v319 = vpop.f32.mrb[0].mxu0
  %320 = vmatprep.mubr.bf16.mxu0 %v74
  %321 = vmatmul.mubr.bf16.gmra.mrb[0].mxu0 %v73
  %v322 = vpop.f32.mrb[0].mxu0
  %v323 = vadd.f32 0.0, %v322
  %v324 = vpop.f32.mrb[0].mxu0
  %v325 = vpop.f32.mrb[0].mxu0
  %v326 = vadd.f32 0.0, %v325
  %v327 = vpop.f32.mrb[0].mxu0
  %328 = vmatprep.mubr.bf16.mxu0 %v76
  %329 = vmatmul.mubr.bf16.gmra.mrb[0].mxu0 %v75
  %v330 = vpop.f32.mrb[0].mxu0
  %v331 = vadd.f32 0.0, %v330
  %v332 = vpop.f32.mrb[0].mxu0
  %v333 = vpop.f32.mrb[0].mxu0
  %v334 = vadd.f32 0.0, %v333
  %v335 = vpop.f32.mrb[0].mxu0
  %336 = vmatprep.mubr.bf16.mxu0 %v78
  %337 = vmatmul.mubr.bf16.gmra.mrb[0].mxu0 %v77
  %v338 = vpop.f32.mrb[0].mxu0
  %v339 = vadd.f32 0.0, %v338
  %v340 = vpop.f32.mrb[0].mxu0
  %v341 = vpop.f32.mrb[0].mxu0
  %v342 = vadd.f32 0.0, %v341
  %v343 = vpop.f32.mrb[0].mxu0
  %344 = vmatprep.mubr.bf16.mxu0 %v80
  %345 = vmatmul.mubr.bf16.gmra.mrb[0].mxu0 %v79
  %v346 = vpop.f32.mrb[0].mxu0
  %v347 = vadd.f32 0.0, %v346
  %v348 = vpop.f32.mrb[0].mxu0
  %v349 = vpop.f32.mrb[0].mxu0
  %v350 = vadd.f32 0.0, %v349
  %v351 = vpop.f32.mrb[0].mxu0
  %352 = vmatprep.mubr.bf16.mxu0 %v82
  %353 = vmatmul.mubr.bf16.gmra.mrb[0].mxu0 %v81
  %v354 = vpop.f32.mrb[0].mxu0
  %v355 = vadd.f32 0.0, %v354
  %v356 = vpop.f32.mrb[0].mxu0
  %v357 = vpop.f32.mrb[0].mxu0
  %v358 = vadd.f32 0.0, %v357
  %v359 = vpop.f32.mrb[0].mxu0
  %360 = vmatprep.mubr.bf16.mxu0 %v84
  %361 = vmatmul.mubr.bf16.gmra.mrb[0].mxu0 %v83
  %v362 = vpop.f32.mrb[0].mxu0
  %v363 = vadd.f32 0.0, %v362
  %v364 = vpop.f32.mrb[0].mxu0
  %v365 = vpop.f32.mrb[0].mxu0
  %v366 = vadd.f32 0.0, %v365
  %v367 = vpop.f32.mrb[0].mxu0
  %368 = vmatprep.mubr.bf16.mxu0 %v86
  %369 = vmatmul.mubr.bf16.gmra.mrb[0].mxu0 %v85
  %v370 = vpop.f32.mrb[0].mxu0
  %v371 = vadd.f32 0.0, %v370
  %v372 = vpop.f32.mrb[0].mxu0
  %v373 = vpop.f32.mrb[0].mxu0
  %v374 = vadd.f32 0.0, %v373
  %v375 = vpop.f32.mrb[0].mxu0
  %376 = vmatprep.mubr.bf16.mxu0 %v88
  %377 = vmatmul.mubr.bf16.gmra.mrb[0].mxu0 %v87
  %v378 = vpop.f32.mrb[0].mxu0
  %v379 = vadd.f32 0.0, %v378
  %v380 = vpop.f32.mrb[0].mxu0
  %v381 = vpop.f32.mrb[0].mxu0
  %v382 = vadd.f32 0.0, %v381
  %v383 = vpop.f32.mrb[0].mxu0
  %384 = vmatprep.mubr.bf16.mxu0 %v90
  %385 = vmatmul.mubr.bf16.gmra.mrb[0].mxu0 %v89
  %v386 = vpop.f32.mrb[0].mxu0
  %v387 = vadd.f32 0.0, %v386
  %v388 = vpop.f32.mrb[0].mxu0
  %v389 = vpop.f32.mrb[0].mxu0
  %v390 = vadd.f32 0.0, %v389
  %v391 = vpop.f32.mrb[0].mxu0
  %392 = vmatprep.mubr.bf16.mxu0 %v92
  %393 = vmatmul.mubr.bf16.gmra.mrb[0].mxu0 %v91
  %v394 = vpop.f32.mrb[0].mxu0
  %v395 = vadd.f32 0.0, %v394
  %v396 = vpop.f32.mrb[0].mxu0
  %v397 = vpop.f32.mrb[0].mxu0
  %v398 = vadd.f32 0.0, %v397
  %v399 = vpop.f32.mrb[0].mxu0
  %400 = vmatprep.mubr.bf16.mxu0 %v94
  %401 = vmatmul.mubr.bf16.gmra.mrb[0].mxu0 %v93
  %v402 = vpop.f32.mrb[0].mxu0
  %v403 = vadd.f32 0.0, %v402
  %v404 = vpop.f32.mrb[0].mxu0
  %v405 = vpop.f32.mrb[0].mxu0
  %v406 = vadd.f32 0.0, %v405
  %v407 = vpop.f32.mrb[0].mxu0
  %408 = vmatprep.mubr.bf16.mxu0 %v96
  %409 = vmatmul.mubr.bf16.gmra.mrb[0].mxu0 %v95
  %v410 = vpop.f32.mrb[0].mxu0
  %v411 = vadd.f32 0.0, %v410
  %v412 = vpop.f32.mrb[0].mxu0
  %v413 = vpop.f32.mrb[0].mxu0
  %v414 = vadd.f32 0.0, %v413
  %v415 = vpop.f32.mrb[0].mxu0
  %416 = vmatprep.mubr.bf16.mxu0 %v98
  %417 = vmatmul.mubr.bf16.gmra.mrb[0].mxu0 %v97
  %v418 = vpop.f32.mrb[0].mxu0
  %v419 = vadd.f32 0.0, %v418
  %v420 = vpop.f32.mrb[0].mxu0
  %v421 = vpop.f32.mrb[0].mxu0
  %v422 = vadd.f32 0.0, %v421
  %v423 = vpop.f32.mrb[0].mxu0
  %424 = vdwg.mxu0
  %v425 = vadd.f32 %v136, %v299
  %v426 = vadd.f32 %v137, %v302
  %v427 = vadd.f32 %v138, %v307
  %v428 = vadd.f32 %v139, %v310
  %v429 = vadd.f32 %v140, %v315
  %v430 = vadd.f32 %v141, %v318
  %v431 = vadd.f32 %v142, %v323
  %v432 = vadd.f32 %v143, %v326
  %v433 = vadd.f32 %v144, %v331
  %v434 = vadd.f32 %v145, %v334
  %v435 = vadd.f32 %v146, %v339
  %v436 = vadd.f32 %v147, %v342
  %v437 = vadd.f32 %v148, %v347
  %v438 = vadd.f32 %v149, %v350
  %v439 = vadd.f32 %v150, %v355
  %v440 = vadd.f32 %v151, %v358
  %v441 = vadd.f32 %v152, %v363
  %v442 = vadd.f32 %v153, %v366
  %v443 = vadd.f32 %v154, %v371
  %v444 = vadd.f32 %v155, %v374
  %v445 = vadd.f32 %v156, %v379
  %v446 = vadd.f32 %v157, %v382
  %v447 = vadd.f32 %v158, %v387
  %v448 = vadd.f32 %v159, %v390
  %v449 = vadd.f32 %v160, %v395
  %v450 = vadd.f32 %v161, %v398
  %v451 = vadd.f32 %v162, %v403
  %v452 = vadd.f32 %v163, %v406
  %v453 = vadd.f32 %v164, %v411
  %v454 = vadd.f32 %v165, %v414
  %v455 = vadd.f32 %v166, %v419
  %v456 = vadd.f32 %v167, %v422
  %457 = vst [vmem:[#allocation2] sm:$0xff] %v425
  %458 = vst [vmem:[#allocation2 + $0x8] sm:$0xff] %v426
  %459 = vst [vmem:[#allocation2 + $0x10] sm:$0xff] %v427
  %460 = vst [vmem:[#allocation2 + $0x18] sm:$0xff] %v428
  %461 = vst [vmem:[#allocation2 + $0x20] sm:$0xff] %v429
  %462 = vst [vmem:[#allocation2 + $0x28] sm:$0xff] %v430
  %463 = vst [vmem:[#allocation2 + $0x30] sm:$0xff] %v431
  %464 = vst [vmem:[#allocation2 + $0x38] sm:$0xff] %v432
  %465 = vst [vmem:[#allocation2 + $0x40] sm:$0xff] %v433
  %466 = vst [vmem:[#allocation2 + $0x48] sm:$0xff] %v434
  %467 = vst [vmem:[#allocation2 + $0x50] sm:$0xff] %v435
  %468 = vst [vmem:[#allocation2 + $0x58] sm:$0xff] %v436
  %469 = vst [vmem:[#allocation2 + $0x60] sm:$0xff] %v437
  %470 = vst [vmem:[#allocation2 + $0x68] sm:$0xff] %v438
  %471 = vst [vmem:[#allocation2 + $0x70] sm:$0xff] %v439
  %472 = vst [vmem:[#allocation2 + $0x78] sm:$0xff] %v440
  %473 = vst [vmem:[#allocation2 + $0x80] sm:$0xff] %v441
  %474 = vst [vmem:[#allocation2 + $0x88] sm:$0xff] %v442
  %475 = vst [vmem:[#allocation2 + $0x90] sm:$0xff] %v443
  %476 = vst [vmem:[#allocation2 + $0x98] sm:$0xff] %v444
  %477 = vst [vmem:[#allocation2 + $0xa0] sm:$0xff] %v445
  %478 = vst [vmem:[#allocation2 + $0xa8] sm:$0xff] %v446
  %479 = vst [vmem:[#allocation2 + $0xb0] sm:$0xff] %v447
  %480 = vst [vmem:[#allocation2 + $0xb8] sm:$0xff] %v448
  %481 = vst [vmem:[#allocation2 + $0xc0] sm:$0xff] %v449
  %482 = vst [vmem:[#allocation2 + $0xc8] sm:$0xff] %v450
  %483 = vst [vmem:[#allocation2 + $0xd0] sm:$0xff] %v451
  %484 = vst [vmem:[#allocation2 + $0xd8] sm:$0xff] %v452
  %485 = vst [vmem:[#allocation2 + $0xe0] sm:$0xff] %v453
  %486 = vst [vmem:[#allocation2 + $0xe8] sm:$0xff] %v454
  %487 = vst [vmem:[#allocation2 + $0xf0] sm:$0xff] %v455
  %488 = vst [vmem:[#allocation2 + $0xf8] sm:$0xff] %v456
  // Predicated region
  $region18: #{predictor_unisage_forward.9} parent=0 // pred_check
    %p489 = pneg %p15
  $region19: #{predictor_unisage_forward.9} parent=0 // pred_check_branch
    %491 = sbr.rel (%p489) target = $region21
  $region20: #{predictor_unisage_forward.9} parent=0 // pred_region
    %v492 = vld [vmem:[#allocation2] sm:$0xff]
    %v493 = vld [vmem:[#allocation2 + $0x8] sm:$0xff]
    %v494 = vld [vmem:[#allocation2 + $0x10] sm:$0xff]
    %v495 = vld [vmem:[#allocation2 + $0x18] sm:$0xff]
    %v496 = vld [vmem:[#allocation2 + $0x20] sm:$0xff]
    %v497 = vld [vmem:[#allocation2 + $0x28] sm:$0xff]
    %v498 = vld [vmem:[#allocation2 + $0x30] sm:$0xff]
    %v499 = vld [vmem:[#allocation2 + $0x38] sm:$0xff]
    %v500 = vld [vmem:[#allocation2 + $0x40] sm:$0xff]
    %v501 = vld [vmem:[#allocation2 + $0x48] sm:$0xff]
    %v502 = vld [vmem:[#allocation2 + $0x50] sm:$0xff]
    %v503 = vld [vmem:[#allocation2 + $0x58] sm:$0xff]
    %v504 = vld [vmem:[#allocation2 + $0x60] sm:$0xff]
    %v505 = vld [vmem:[#allocation2 + $0x68] sm:$0xff]
    %v506 = vld [vmem:[#allocation2 + $0x70] sm:$0xff]
    %v507 = vld [vmem:[#allocation2 + $0x78] sm:$0xff]
    %v508 = vld [vmem:[#allocation2 + $0x80] sm:$0xff]
    %v509 = vld [vmem:[#allocation2 + $0x88] sm:$0xff]
    %v510 = vld [vmem:[#allocation2 + $0x90] sm:$0xff]
    %v511 = vld [vmem:[#allocation2 + $0x98] sm:$0xff]
    %v512 = vld [vmem:[#allocation2 + $0xa0] sm:$0xff]
    %v513 = vld [vmem:[#allocation2 + $0xa8] sm:$0xff]
    %v514 = vld [vmem:[#allocation2 + $0xb0] sm:$0xff]
    %v515 = vld [vmem:[#allocation2 + $0xb8] sm:$0xff]
    %v516 = vld [vmem:[#allocation2 + $0xc0] sm:$0xff]
    %v517 = vld [vmem:[#allocation2 + $0xc8] sm:$0xff]
    %v518 = vld [vmem:[#allocation2 + $0xd0] sm:$0xff]
    %v519 = vld [vmem:[#allocation2 + $0xd8] sm:$0xff]
    %v520 = vld [vmem:[#allocation2 + $0xe0] sm:$0xff]
    %v521 = vld [vmem:[#allocation2 + $0xe8] sm:$0xff]
    %v522 = vld [vmem:[#allocation2 + $0xf0] sm:$0xff]
    %v523 = vld [vmem:[#allocation2 + $0xf8] sm:$0xff]
    %v524 = vld [vmem:[%s2] sm:$0xff]
    %v525 = vld [vmem:[%s2 + $0x8] sm:$0xff]
    %v526 = vld [vmem:[%s2 + $0x10] sm:$0xff]
    %v527 = vld [vmem:[%s2 + $0x18] sm:$0xff]
    %v528 = vld [vmem:[%s2 + $0x20] sm:$0xff]
    %v529 = vld [vmem:[%s2 + $0x28] sm:$0xff]
    %v530 = vld [vmem:[%s2 + $0x30] sm:$0xff]
    %v531 = vld [vmem:[%s2 + $0x38] sm:$0xff]
    %v532 = vld [vmem:[%s2 + $0x40] sm:$0xff]
    %v533 = vld [vmem:[%s2 + $0x48] sm:$0xff]
    %v534 = vld [vmem:[%s2 + $0x50] sm:$0xff]
    %v535 = vld [vmem:[%s2 + $0x58] sm:$0xff]
    %v536 = vld [vmem:[%s2 + $0x60] sm:$0xff]
    %v537 = vld [vmem:[%s2 + $0x68] sm:$0xff]
    %v538 = vld [vmem:[%s2 + $0x70] sm:$0xff]
    %v539 = vld [vmem:[%s2 + $0x78] sm:$0xff]
    %v540 = vld [vmem:[%s2 + $0x80] sm:$0xff]
    %v541 = vld [vmem:[%s2 + $0x88] sm:$0xff]
    %v542 = vld [vmem:[%s2 + $0x90] sm:$0xff]
    %v543 = vld [vmem:[%s2 + $0x98] sm:$0xff]
    %v544 = vld [vmem:[%s2 + $0xa0] sm:$0xff]
    %v545 = vld [vmem:[%s2 + $0xa8] sm:$0xff]
    %v546 = vld [vmem:[%s2 + $0xb0] sm:$0xff]
    %v547 = vld [vmem:[%s2 + $0xb8] sm:$0xff]
    %v548 = vld [vmem:[%s2 + $0xc0] sm:$0xff]
    %v549 = vld [vmem:[%s2 + $0xc8] sm:$0xff]
    %v550 = vld [vmem:[%s2 + $0xd0] sm:$0xff]
    %v551 = vld [vmem:[%s2 + $0xd8] sm:$0xff]
    %v552 = vld [vmem:[%s2 + $0xe0] sm:$0xff]
    %v553 = vld [vmem:[%s2 + $0xe8] sm:$0xff]
    %v554 = vld [vmem:[%s2 + $0xf0] sm:$0xff]
    %v555 = vld [vmem:[%s2 + $0xf8] sm:$0xff]
    %557 = vset.pattern.permute.xlu0 0
    %558 = vperm.xlu0 %557, %v524
    %v559 = vpop.permute.xlu0 %558
    %562 = vset.pattern.permute.xlu0 0
    %563 = vperm.xlu0 %562, %v525
    %v564 = vpop.permute.xlu0 %563
    %567 = vset.pattern.permute.xlu0 0
    %568 = vperm.xlu0 %567, %v526
    %v569 = vpop.permute.xlu0 %568
    %572 = vset.pattern.permute.xlu0 0
    %573 = vperm.xlu0 %572, %v527
    %v574 = vpop.permute.xlu0 %573
    %577 = vset.pattern.permute.xlu0 0
    %578 = vperm.xlu0 %577, %v528
    %v579 = vpop.permute.xlu0 %578
    %582 = vset.pattern.permute.xlu0 0
    %583 = vperm.xlu0 %582, %v529
    %v584 = vpop.permute.xlu0 %583
    %587 = vset.pattern.permute.xlu0 0
    %588 = vperm.xlu0 %587, %v530
    %v589 = vpop.permute.xlu0 %588
    %592 = vset.pattern.permute.xlu0 0
    %593 = vperm.xlu0 %592, %v531
    %v594 = vpop.permute.xlu0 %593
    %597 = vset.pattern.permute.xlu0 0
    %598 = vperm.xlu0 %597, %v532
    %v599 = vpop.permute.xlu0 %598
    %602 = vset.pattern.permute.xlu0 0
    %603 = vperm.xlu0 %602, %v533
    %v604 = vpop.permute.xlu0 %603
    %607 = vset.pattern.permute.xlu0 0
    %608 = vperm.xlu0 %607, %v534
    %v609 = vpop.permute.xlu0 %608
    %612 = vset.pattern.permute.xlu0 0
    %613 = vperm.xlu0 %612, %v535
    %v614 = vpop.permute.xlu0 %613
    %617 = vset.pattern.permute.xlu0 0
    %618 = vperm.xlu0 %617, %v536
    %v619 = vpop.permute.xlu0 %618
    %622 = vset.pattern.permute.xlu0 0
    %623 = vperm.xlu0 %622, %v537
    %v624 = vpop.permute.xlu0 %623
    %627 = vset.pattern.permute.xlu0 0
    %628 = vperm.xlu0 %627, %v538
    %v629 = vpop.permute.xlu0 %628
    %632 = vset.pattern.permute.xlu0 0
    %633 = vperm.xlu0 %632, %v539
    %v634 = vpop.permute.xlu0 %633
    %637 = vset.pattern.permute.xlu0 0
    %638 = vperm.xlu0 %637, %v540
    %v639 = vpop.permute.xlu0 %638
    %642 = vset.pattern.permute.xlu0 0
    %643 = vperm.xlu0 %642, %v541
    %v644 = vpop.permute.xlu0 %643
    %647 = vset.pattern.permute.xlu0 0
    %648 = vperm.xlu0 %647, %v542
    %v649 = vpop.permute.xlu0 %648
    %652 = vset.pattern.permute.xlu0 0
    %653 = vperm.xlu0 %652, %v543
    %v654 = vpop.permute.xlu0 %653
    %657 = vset.pattern.permute.xlu0 0
    %658 = vperm.xlu0 %657, %v544
    %v659 = vpop.permute.xlu0 %658
    %662 = vset.pattern.permute.xlu0 0
    %663 = vperm.xlu0 %662, %v545
    %v664 = vpop.permute.xlu0 %663
    %667 = vset.pattern.permute.xlu0 0
    %668 = vperm.xlu0 %667, %v546
    %v669 = vpop.permute.xlu0 %668
    %672 = vset.pattern.permute.xlu0 0
    %673 = vperm.xlu0 %672, %v547
    %v674 = vpop.permute.xlu0 %673
    %677 = vset.pattern.permute.xlu0 0
    %678 = vperm.xlu0 %677, %v548
    %v679 = vpop.permute.xlu0 %678
    %682 = vset.pattern.permute.xlu0 0
    %683 = vperm.xlu0 %682, %v549
    %v684 = vpop.permute.xlu0 %683
    %687 = vset.pattern.permute.xlu0 0
    %688 = vperm.xlu0 %687, %v550
    %v689 = vpop.permute.xlu0 %688
    %692 = vset.pattern.permute.xlu0 0
    %693 = vperm.xlu0 %692, %v551
    %v694 = vpop.permute.xlu0 %693
    %697 = vset.pattern.permute.xlu0 0
    %698 = vperm.xlu0 %697, %v552
    %v699 = vpop.permute.xlu0 %698
    %702 = vset.pattern.permute.xlu0 0
    %703 = vperm.xlu0 %702, %v553
    %v704 = vpop.permute.xlu0 %703
    %707 = vset.pattern.permute.xlu0 0
    %708 = vperm.xlu0 %707, %v554
    %v709 = vpop.permute.xlu0 %708
    %712 = vset.pattern.permute.xlu0 0
    %713 = vperm.xlu0 %712, %v555
    %v714 = vpop.permute.xlu0 %713
    %v716 = vmul.f32 %v492, %v559
    %v717 = vmul.f32 %v493, %v564
    %v718 = vmul.f32 %v494, %v569
    %v719 = vmul.f32 %v495, %v574
    %v720 = vmul.f32 %v496, %v579
    %v721 = vmul.f32 %v497, %v584
    %v722 = vmul.f32 %v498, %v589
    %v723 = vmul.f32 %v499, %v594
    %v724 = vmul.f32 %v500, %v599
    %v725 = vmul.f32 %v501, %v604
    %v726 = vmul.f32 %v502, %v609
    %v727 = vmul.f32 %v503, %v614
    %v728 = vmul.f32 %v504, %v619
    %v729 = vmul.f32 %v505, %v624
    %v730 = vmul.f32 %v506, %v629
    %v731 = vmul.f32 %v507, %v634
    %v732 = vmul.f32 %v508, %v639
    %v733 = vmul.f32 %v509, %v644
    %v734 = vmul.f32 %v510, %v649
    %v735 = vmul.f32 %v511, %v654
    %v736 = vmul.f32 %v512, %v659
    %v737 = vmul.f32 %v513, %v664
    %v738 = vmul.f32 %v514, %v669
    %v739 = vmul.f32 %v515, %v674
    %v740 = vmul.f32 %v516, %v679
    %v741 = vmul.f32 %v517, %v684
    %v742 = vmul.f32 %v518, %v689
    %v743 = vmul.f32 %v519, %v694
    %v744 = vmul.f32 %v520, %v699
    %v745 = vmul.f32 %v521, %v704
    %v746 = vmul.f32 %v522, %v709
    %v747 = vmul.f32 %v523, %v714
    %v748 = vpack.c.bf16 %v717, %v716
    %v749 = vpack.c.bf16 %v719, %v718
    %v750 = vpack.c.bf16 %v721, %v720
    %v751 = vpack.c.bf16 %v723, %v722
    %v752 = vpack.c.bf16 %v725, %v724
    %v753 = vpack.c.bf16 %v727, %v726
    %v754 = vpack.c.bf16 %v729, %v728
    %v755 = vpack.c.bf16 %v731, %v730
    %v756 = vpack.c.bf16 %v733, %v732
    %v757 = vpack.c.bf16 %v735, %v734
    %v758 = vpack.c.bf16 %v737, %v736
    %v759 = vpack.c.bf16 %v739, %v738
    %v760 = vpack.c.bf16 %v741, %v740
    %v761 = vpack.c.bf16 %v743, %v742
    %v762 = vpack.c.bf16 %v745, %v744
    %v763 = vpack.c.bf16 %v747, %v746
    %v780 = vunpack.c.l.b16 %v748
    %v781 = vunpack.c.h.b16 %v748
    %v782 = vunpack.c.l.b16 %v749
    %v783 = vunpack.c.h.b16 %v749
    %v784 = vunpack.c.l.b16 %v750
    %v785 = vunpack.c.h.b16 %v750
    %v786 = vunpack.c.l.b16 %v751
    %v787 = vunpack.c.h.b16 %v751
    %v788 = vunpack.c.l.b16 %v752
    %v789 = vunpack.c.h.b16 %v752
    %v790 = vunpack.c.l.b16 %v753
    %v791 = vunpack.c.h.b16 %v753
    %v792 = vunpack.c.l.b16 %v754
    %v793 = vunpack.c.h.b16 %v754
    %v794 = vunpack.c.l.b16 %v755
    %v795 = vunpack.c.h.b16 %v755
    %v796 = vunpack.c.l.b16 %v756
    %v797 = vunpack.c.h.b16 %v756
    %v798 = vunpack.c.l.b16 %v757
    %v799 = vunpack.c.h.b16 %v757
    %v800 = vunpack.c.l.b16 %v758
    %v801 = vunpack.c.h.b16 %v758
    %v802 = vunpack.c.l.b16 %v759
    %v803 = vunpack.c.h.b16 %v759
    %v804 = vunpack.c.l.b16 %v760
    %v805 = vunpack.c.h.b16 %v760
    %v806 = vunpack.c.l.b16 %v761
    %v807 = vunpack.c.h.b16 %v761
    %v808 = vunpack.c.l.b16 %v762
    %v809 = vunpack.c.h.b16 %v762
    %v810 = vunpack.c.l.b16 %v763
    %v811 = vunpack.c.h.b16 %v763
    %v812 = vpack.c.b16 %v780, %v780
    %v813 = vpack.c.b16 %v781, %v781
    %v814 = vpack.c.b16 %v782, %v782
    %v815 = vpack.c.b16 %v783, %v783
    %v816 = vpack.c.b16 %v784, %v784
    %v817 = vpack.c.b16 %v785, %v785
    %v818 = vpack.c.b16 %v786, %v786
    %v819 = vpack.c.b16 %v787, %v787
    %v820 = vpack.c.b16 %v788, %v788
    %v821 = vpack.c.b16 %v789, %v789
    %v822 = vpack.c.b16 %v790, %v790
    %v823 = vpack.c.b16 %v791, %v791
    %v824 = vpack.c.b16 %v792, %v792
    %v825 = vpack.c.b16 %v793, %v793
    %v826 = vpack.c.b16 %v794, %v794
    %v827 = vpack.c.b16 %v795, %v795
    %v828 = vpack.c.b16 %v796, %v796
    %v829 = vpack.c.b16 %v797, %v797
    %v830 = vpack.c.b16 %v798, %v798
    %v831 = vpack.c.b16 %v799, %v799
    %v832 = vpack.c.b16 %v800, %v800
    %v833 = vpack.c.b16 %v801, %v801
    %v834 = vpack.c.b16 %v802, %v802
    %v835 = vpack.c.b16 %v803, %v803
    %v836 = vpack.c.b16 %v804, %v804
    %v837 = vpack.c.b16 %v805, %v805
    %v838 = vpack.c.b16 %v806, %v806
    %v839 = vpack.c.b16 %v807, %v807
    %v840 = vpack.c.b16 %v808, %v808
    %v841 = vpack.c.b16 %v809, %v809
    %v842 = vpack.c.b16 %v810, %v810
    %v843 = vpack.c.b16 %v811, %v811
    %876 = vst [vmem:[%s3] sm:$0xf] %v812
    %877 = vst [vmem:[%s3 + $0x4] sm:$0xf] %v813
    %878 = vst [vmem:[%s3 + $0x8] sm:$0xf] %v814
    %879 = vst [vmem:[%s3 + $0xc] sm:$0xf] %v815
    %880 = vst [vmem:[%s3 + $0x10] sm:$0xf] %v816
    %881 = vst [vmem:[%s3 + $0x14] sm:$0xf] %v817
    %882 = vst [vmem:[%s3 + $0x18] sm:$0xf] %v818
    %883 = vst [vmem:[%s3 + $0x1c] sm:$0xf] %v819
    %884 = vst [vmem:[%s3 + $0x20] sm:$0xf] %v820
    %885 = vst [vmem:[%s3 + $0x24] sm:$0xf] %v821
    %886 = vst [vmem:[%s3 + $0x28] sm:$0xf] %v822
    %887 = vst [vmem:[%s3 + $0x2c] sm:$0xf] %v823
    %888 = vst [vmem:[%s3 + $0x30] sm:$0xf] %v824
    %889 = vst [vmem:[%s3 + $0x34] sm:$0xf] %v825
    %890 = vst [vmem:[%s3 + $0x38] sm:$0xf] %v826
    %891 = vst [vmem:[%s3 + $0x3c] sm:$0xf] %v827
    %892 = vst [vmem:[%s3 + $0x40] sm:$0xf] %v828
    %893 = vst [vmem:[%s3 + $0x44] sm:$0xf] %v829
    %894 = vst [vmem:[%s3 + $0x48] sm:$0xf] %v830
    %895 = vst [vmem:[%s3 + $0x4c] sm:$0xf] %v831
    %896 = vst [vmem:[%s3 + $0x50] sm:$0xf] %v832
    %897 = vst [vmem:[%s3 + $0x54] sm:$0xf] %v833
    %898 = vst [vmem:[%s3 + $0x58] sm:$0xf] %v834
    %899 = vst [vmem:[%s3 + $0x5c] sm:$0xf] %v835
    %900 = vst [vmem:[%s3 + $0x60] sm:$0xf] %v836
    %901 = vst [vmem:[%s3 + $0x64] sm:$0xf] %v837
    %902 = vst [vmem:[%s3 + $0x68] sm:$0xf] %v838
    %903 = vst [vmem:[%s3 + $0x6c] sm:$0xf] %v839
    %904 = vst [vmem:[%s3 + $0x70] sm:$0xf] %v840
    %905 = vst [vmem:[%s3 + $0x74] sm:$0xf] %v841
    %906 = vst [vmem:[%s3 + $0x78] sm:$0xf] %v842
    %907 = vst [vmem:[%s3 + $0x7c] sm:$0xf] %v843
  $region21: #{predictor_unisage_forward.9} parent=0 // pred_fallthru
    _
  // Predicated region
  $region22: #{predictor_unisage_forward.9} parent=0 // pred_check
    _
  $region23: #{predictor_unisage_forward.9} parent=0 // pred_check_branch
    %909 = sbr.rel (0) target = $region25
  $region24: #{predictor_unisage_forward.9} parent=0 // pred_region
    _
  $region25: #{predictor_unisage_forward.9} parent=0 // pred_fallthru
    _
  // Predicated region
  $region26: #{predictor_unisage_forward.9} parent=0 // pred_check
    _
  $region27: #{predictor_unisage_forward.9} parent=0 // pred_check_branch
    %911 = sbr.rel (0) target = $region29
  $region28: #{predictor_unisage_forward.9} parent=0 // pred_region
    _
  $region29: #{predictor_unisage_forward.9} parent=0 // pred_fallthru
    _

// kernel: predictor_unisage_forward.13
$region0: #{predictor_unisage_forward.13}
  #allocation0 [shape = 'u32[]', space=smem, size = 0x4, offset = 0x4, fixed_abs, tag = 'smem constant byte address 0x4 - core index']
  #allocation1 [shape = 'u32[144,128]{1,0:T(1,128)}', space=vmem, size = 0x12000, scoped, tag = 'internal scratch']
  %s0 = inlined_call_operand.vmem [shape: bf16[256,128], index: 0, kind: input, shape index: {}]
  %s1 = inlined_call_operand.vmem [shape: bf16[128,128], index: 1, kind: input, shape index: {}]
  %s2 = inlined_call_operand.vmem [shape: f32[1,128], index: 2, kind: input, shape index: {}]
  %s3 = inlined_call_operand.vmem [shape: f32[256,128], index: 3, kind: output, shape index: {}]
  %s4 = sld [smem:[#allocation0]]
  $region22: #{predictor_unisage_forward.13} parent=0
    _
  %s6 = ssub.s32 1, %s4
  %s7 = scalar_select 0, %s6, %s4
  // Predicated region
  $region2: #{predictor_unisage_forward.13} parent=0 // pred_check
    _
  $region3: #{predictor_unisage_forward.13} parent=0 // pred_check_branch
    %9 = sbr.rel (0) target = $region5
  $region4: #{predictor_unisage_forward.13} parent=0 // pred_region
    _
  $region5: #{predictor_unisage_forward.13} parent=0 // pred_fallthru
    _
  // Predicated region
  $region6: #{predictor_unisage_forward.13} parent=0 // pred_check
    _
  $region7: #{predictor_unisage_forward.13} parent=0 // pred_check_branch
    %11 = sbr.rel (0) target = $region9
  $region8: #{predictor_unisage_forward.13} parent=0 // pred_region
    _
  $region9: #{predictor_unisage_forward.13} parent=0 // pred_fallthru
    _
  // Predicated region
  $region10: #{predictor_unisage_forward.13} parent=0 // pred_check
    _
  $region11: #{predictor_unisage_forward.13} parent=0 // pred_check_branch
    %13 = sbr.rel (0) target = $region13
  $region12: #{predictor_unisage_forward.13} parent=0 // pred_region
    _
  $region13: #{predictor_unisage_forward.13} parent=0 // pred_fallthru
    _
  %v16 = vld [vmem:[%s0] sm:$0xf]
  %v17 = vld [vmem:[%s0 + $0x4] sm:$0xf]
  %v18 = vld [vmem:[%s0 + $0x8] sm:$0xf]
  %v19 = vld [vmem:[%s0 + $0xc] sm:$0xf]
  %v20 = vld [vmem:[%s0 + $0x10] sm:$0xf]
  %v21 = vld [vmem:[%s0 + $0x14] sm:$0xf]
  %v22 = vld [vmem:[%s0 + $0x18] sm:$0xf]
  %v23 = vld [vmem:[%s0 + $0x1c] sm:$0xf]
  %v24 = vld [vmem:[%s0 + $0x20] sm:$0xf]
  %v25 = vld [vmem:[%s0 + $0x24] sm:$0xf]
  %v26 = vld [vmem:[%s0 + $0x28] sm:$0xf]
  %v27 = vld [vmem:[%s0 + $0x2c] sm:$0xf]
  %v28 = vld [vmem:[%s0 + $0x30] sm:$0xf]
  %v29 = vld [vmem:[%s0 + $0x34] sm:$0xf]
  %v30 = vld [vmem:[%s0 + $0x38] sm:$0xf]
  %v31 = vld [vmem:[%s0 + $0x3c] sm:$0xf]
  %v32 = vld [vmem:[%s0 + $0x40] sm:$0xf]
  %v33 = vld [vmem:[%s0 + $0x44] sm:$0xf]
  %v34 = vld [vmem:[%s0 + $0x48] sm:$0xf]
  %v35 = vld [vmem:[%s0 + $0x4c] sm:$0xf]
  %v36 = vld [vmem:[%s0 + $0x50] sm:$0xf]
  %v37 = vld [vmem:[%s0 + $0x54] sm:$0xf]
  %v38 = vld [vmem:[%s0 + $0x58] sm:$0xf]
  %v39 = vld [vmem:[%s0 + $0x5c] sm:$0xf]
  %v40 = vld [vmem:[%s0 + $0x60] sm:$0xf]
  %v41 = vld [vmem:[%s0 + $0x64] sm:$0xf]
  %v42 = vld [vmem:[%s0 + $0x68] sm:$0xf]
  %v43 = vld [vmem:[%s0 + $0x6c] sm:$0xf]
  %v44 = vld [vmem:[%s0 + $0x70] sm:$0xf]
  %v45 = vld [vmem:[%s0 + $0x74] sm:$0xf]
  %v46 = vld [vmem:[%s0 + $0x78] sm:$0xf]
  %v47 = vld [vmem:[%s0 + $0x7c] sm:$0xf]
  %vm48 = vcmp.gt.bf16.partialorder %v16, 0
  %vm49 = vcmp.gt.bf16.partialorder %v17, 0
  %vm50 = vcmp.gt.bf16.partialorder %v18, 0
  %vm51 = vcmp.gt.bf16.partialorder %v19, 0
  %vm52 = vcmp.gt.bf16.partialorder %v20, 0
  %vm53 = vcmp.gt.bf16.partialorder %v21, 0
  %vm54 = vcmp.gt.bf16.partialorder %v22, 0
  %vm55 = vcmp.gt.bf16.partialorder %v23, 0
  %vm56 = vcmp.gt.bf16.partialorder %v24, 0
  %vm57 = vcmp.gt.bf16.partialorder %v25, 0
  %vm58 = vcmp.gt.bf16.partialorder %v26, 0
  %vm59 = vcmp.gt.bf16.partialorder %v27, 0
  %vm60 = vcmp.gt.bf16.partialorder %v28, 0
  %vm61 = vcmp.gt.bf16.partialorder %v29, 0
  %vm62 = vcmp.gt.bf16.partialorder %v30, 0
  %vm63 = vcmp.gt.bf16.partialorder %v31, 0
  %vm64 = vcmp.gt.bf16.partialorder %v32, 0
  %vm65 = vcmp.gt.bf16.partialorder %v33, 0
  %vm66 = vcmp.gt.bf16.partialorder %v34, 0
  %vm67 = vcmp.gt.bf16.partialorder %v35, 0
  %vm68 = vcmp.gt.bf16.partialorder %v36, 0
  %vm69 = vcmp.gt.bf16.partialorder %v37, 0
  %vm70 = vcmp.gt.bf16.partialorder %v38, 0
  %vm71 = vcmp.gt.bf16.partialorder %v39, 0
  %vm72 = vcmp.gt.bf16.partialorder %v40, 0
  %vm73 = vcmp.gt.bf16.partialorder %v41, 0
  %vm74 = vcmp.gt.bf16.partialorder %v42, 0
  %vm75 = vcmp.gt.bf16.partialorder %v43, 0
  %vm76 = vcmp.gt.bf16.partialorder %v44, 0
  %vm77 = vcmp.gt.bf16.partialorder %v45, 0
  %vm78 = vcmp.gt.bf16.partialorder %v46, 0
  %vm79 = vcmp.gt.bf16.partialorder %v47, 0
  %v80 = vmul.bf16 %v16, 1009007652
  %v81 = vmul.bf16 %v17, 1009007652
  %v82 = vmul.bf16 %v18, 1009007652
  %v83 = vmul.bf16 %v19, 1009007652
  %v84 = vmul.bf16 %v20, 1009007652
  %v85 = vmul.bf16 %v21, 1009007652
  %v86 = vmul.bf16 %v22, 1009007652
  %v87 = vmul.bf16 %v23, 1009007652
  %v88 = vmul.bf16 %v24, 1009007652
  %v89 = vmul.bf16 %v25, 1009007652
  %v90 = vmul.bf16 %v26, 1009007652
  %v91 = vmul.bf16 %v27, 1009007652
  %v92 = vmul.bf16 %v28, 1009007652
  %v93 = vmul.bf16 %v29, 1009007652
  %v94 = vmul.bf16 %v30, 1009007652
  %v95 = vmul.bf16 %v31, 1009007652
  %v96 = vmul.bf16 %v32, 1009007652
  %v97 = vmul.bf16 %v33, 1009007652
  %v98 = vmul.bf16 %v34, 1009007652
  %v99 = vmul.bf16 %v35, 1009007652
  %v100 = vmul.bf16 %v36, 1009007652
  %v101 = vmul.bf16 %v37, 1009007652
  %v102 = vmul.bf16 %v38, 1009007652
  %v103 = vmul.bf16 %v39, 1009007652
  %v104 = vmul.bf16 %v40, 1009007652
  %v105 = vmul.bf16 %v41, 1009007652
  %v106 = vmul.bf16 %v42, 1009007652
  %v107 = vmul.bf16 %v43, 1009007652
  %v108 = vmul.bf16 %v44, 1009007652
  %v109 = vmul.bf16 %v45, 1009007652
  %v110 = vmul.bf16 %v46, 1009007652
  %v111 = vmul.bf16 %v47, 1009007652
  %v112 = vsel %vm48, %v16, %v80
  %v113 = vsel %vm49, %v17, %v81
  %v114 = vsel %vm50, %v18, %v82
  %v115 = vsel %vm51, %v19, %v83
  %v116 = vsel %vm52, %v20, %v84
  %v117 = vsel %vm53, %v21, %v85
  %v118 = vsel %vm54, %v22, %v86
  %v119 = vsel %vm55, %v23, %v87
  %v120 = vsel %vm56, %v24, %v88
  %v121 = vsel %vm57, %v25, %v89
  %v122 = vsel %vm58, %v26, %v90
  %v123 = vsel %vm59, %v27, %v91
  %v124 = vsel %vm60, %v28, %v92
  %v125 = vsel %vm61, %v29, %v93
  %v126 = vsel %vm62, %v30, %v94
  %v127 = vsel %vm63, %v31, %v95
  %v128 = vsel %vm64, %v32, %v96
  %v129 = vsel %vm65, %v33, %v97
  %v130 = vsel %vm66, %v34, %v98
  %v131 = vsel %vm67, %v35, %v99
  %v132 = vsel %vm68, %v36, %v100
  %v133 = vsel %vm69, %v37, %v101
  %v134 = vsel %vm70, %v38, %v102
  %v135 = vsel %vm71, %v39, %v103
  %v136 = vsel %vm72, %v40, %v104
  %v137 = vsel %vm73, %v41, %v105
  %v138 = vsel %vm74, %v42, %v106
  %v139 = vsel %vm75, %v43, %v107
  %v140 = vsel %vm76, %v44, %v108
  %v141 = vsel %vm77, %v45, %v109
  %v142 = vsel %vm78, %v46, %v110
  %v143 = vsel %vm79, %v47, %v111
  %v144 = vld [vmem:[%s1] sm:$0xf]
  %v145 = vld [vmem:[%s1 + $0x4] sm:$0xf]
  %v146 = vld [vmem:[%s1 + $0x8] sm:$0xf]
  %v147 = vld [vmem:[%s1 + $0xc] sm:$0xf]
  %v148 = vld [vmem:[%s1 + $0x10] sm:$0xf]
  %v149 = vld [vmem:[%s1 + $0x14] sm:$0xf]
  %v150 = vld [vmem:[%s1 + $0x18] sm:$0xf]
  %v151 = vld [vmem:[%s1 + $0x1c] sm:$0xf]
  %v152 = vld [vmem:[%s1 + $0x20] sm:$0xf]
  %v153 = vld [vmem:[%s1 + $0x24] sm:$0xf]
  %v154 = vld [vmem:[%s1 + $0x28] sm:$0xf]
  %v155 = vld [vmem:[%s1 + $0x2c] sm:$0xf]
  %v156 = vld [vmem:[%s1 + $0x30] sm:$0xf]
  %v157 = vld [vmem:[%s1 + $0x34] sm:$0xf]
  %v158 = vld [vmem:[%s1 + $0x38] sm:$0xf]
  %v159 = vld [vmem:[%s1 + $0x3c] sm:$0xf]
  %v160 = vld [vmem:[%s2] sm:$0x1]
  %v162 = vlaneseq
  %v163 = vshrl.u32 %v162, 7
  %v164 = vsub.s32 0, %v163
  %v165 = vrot.slane %v160, %v164
  %v199 = vunpack.c.l.b16 %v112
  %v200 = vunpack.c.l.b16 %v113
  %v201 = vunpack.c.l.b16 %v114
  %v202 = vunpack.c.l.b16 %v115
  %v203 = vunpack.c.l.b16 %v116
  %v204 = vunpack.c.l.b16 %v117
  %v205 = vunpack.c.l.b16 %v118
  %v206 = vunpack.c.l.b16 %v119
  %v207 = vunpack.c.l.b16 %v120
  %v208 = vunpack.c.l.b16 %v121
  %v209 = vunpack.c.l.b16 %v122
  %v210 = vunpack.c.l.b16 %v123
  %v211 = vunpack.c.l.b16 %v124
  %v212 = vunpack.c.l.b16 %v125
  %v213 = vunpack.c.l.b16 %v126
  %v214 = vunpack.c.l.b16 %v127
  %v215 = vunpack.c.l.b16 %v128
  %v216 = vunpack.c.l.b16 %v129
  %v217 = vunpack.c.l.b16 %v130
  %v218 = vunpack.c.l.b16 %v131
  %v219 = vunpack.c.l.b16 %v132
  %v220 = vunpack.c.l.b16 %v133
  %v221 = vunpack.c.l.b16 %v134
  %v222 = vunpack.c.l.b16 %v135
  %v223 = vunpack.c.l.b16 %v136
  %v224 = vunpack.c.l.b16 %v137
  %v225 = vunpack.c.l.b16 %v138
  %v226 = vunpack.c.l.b16 %v139
  %v227 = vunpack.c.l.b16 %v140
  %v228 = vunpack.c.l.b16 %v141
  %v229 = vunpack.c.l.b16 %v142
  %v230 = vunpack.c.l.b16 %v143
  %v231 = vpack.c.b16 %v200, %v199
  %v232 = vpack.c.b16 %v202, %v201
  %v233 = vpack.c.b16 %v204, %v203
  %v234 = vpack.c.b16 %v206, %v205
  %v235 = vpack.c.b16 %v208, %v207
  %v236 = vpack.c.b16 %v210, %v209
  %v237 = vpack.c.b16 %v212, %v211
  %v238 = vpack.c.b16 %v214, %v213
  %v239 = vpack.c.b16 %v216, %v215
  %v240 = vpack.c.b16 %v218, %v217
  %v241 = vpack.c.b16 %v220, %v219
  %v242 = vpack.c.b16 %v222, %v221
  %v243 = vpack.c.b16 %v224, %v223
  %v244 = vpack.c.b16 %v226, %v225
  %v245 = vpack.c.b16 %v228, %v227
  %v246 = vpack.c.b16 %v230, %v229
  %v279 = vunpack.c.l.b16 %v144
  %v280 = vunpack.c.l.b16 %v145
  %v281 = vunpack.c.l.b16 %v146
  %v282 = vunpack.c.l.b16 %v147
  %v283 = vunpack.c.l.b16 %v148
  %v284 = vunpack.c.l.b16 %v149
  %v285 = vunpack.c.l.b16 %v150
  %v286 = vunpack.c.l.b16 %v151
  %v287 = vunpack.c.l.b16 %v152
  %v288 = vunpack.c.l.b16 %v153
  %v289 = vunpack.c.l.b16 %v154
  %v290 = vunpack.c.l.b16 %v155
  %v291 = vunpack.c.l.b16 %v156
  %v292 = vunpack.c.l.b16 %v157
  %v293 = vunpack.c.l.b16 %v158
  %v294 = vunpack.c.l.b16 %v159
  %v295 = vpack.c.b16 %v280, %v279
  %v296 = vpack.c.b16 %v282, %v281
  %v297 = vpack.c.b16 %v284, %v283
  %v298 = vpack.c.b16 %v286, %v285
  %v299 = vpack.c.b16 %v288, %v287
  %v300 = vpack.c.b16 %v290, %v289
  %v301 = vpack.c.b16 %v292, %v291
  %v302 = vpack.c.b16 %v294, %v293
  %311 = vmatprep.subr.bf16.mxu0 0
  %312 = vmatpush1.bf16.msra.mxu0 %v295
  %313 = vmatprep.subr.bf16.mxu0 0
  %314 = vmatpush1.bf16.msra.mxu0 %v296
  %315 = vmatprep.subr.bf16.mxu0 0
  %316 = vmatpush1.bf16.msra.mxu0 %v297
  %317 = vmatprep.subr.bf16.mxu0 0
  %318 = vmatpush1.bf16.msra.mxu0 %v298
  %319 = vmatprep.subr.bf16.mxu0 0
  %320 = vmatpush1.bf16.msra.mxu0 %v299
  %321 = vmatprep.subr.bf16.mxu0 0
  %322 = vmatpush1.bf16.msra.mxu0 %v300
  %323 = vmatprep.subr.bf16.mxu0 0
  %324 = vmatpush1.bf16.msra.mxu0 %v301
  %325 = vmatprep.subr.bf16.mxu0 0
  %326 = vmatpush1.bf16.msra.mxu0 %v302
  %327 = vmatprep.subr.bf16.mxu0 0
  %328 = vmatpush1.bf16.msra.mxu0 0
  %329 = vmatprep.subr.bf16.mxu0 0
  %330 = vmatpush1.bf16.msra.mxu0 0
  %331 = vmatprep.subr.bf16.mxu0 0
  %332 = vmatpush1.bf16.msra.mxu0 0
  %333 = vmatprep.subr.bf16.mxu0 0
  %334 = vmatpush1.bf16.msra.mxu0 0
  %335 = vmatprep.subr.bf16.mxu0 0
  %336 = vmatpush1.bf16.msra.mxu0 0
  %337 = vmatprep.subr.bf16.mxu0 0
  %338 = vmatpush1.bf16.msra.mxu0 0
  %339 = vmatprep.subr.bf16.mxu0 0
  %340 = vmatpush1.bf16.msra.mxu0 0
  %341 = vmatprep.subr.bf16.mxu0 0
  %342 = vmatpush1.bf16.msra.mxu0 0
  %343 = vmatprep.mubr.bf16.mxu0 0
  %344 = vmatmul.mubr.bf16.gmra.mrb[0].mxu0 %v231
  %v345 = vpop.f32.mrb[0].mxu0
  %v346 = vadd.f32 %v165, %v345
  %v347 = vpop.f32.mrb[0].mxu0
  %v348 = vpop.f32.mrb[0].mxu0
  %v349 = vadd.f32 %v165, %v348
  %v350 = vpop.f32.mrb[0].mxu0
  %351 = vmatprep.mubr.bf16.mxu0 0
  %352 = vmatmul.mubr.bf16.gmra.mrb[0].mxu0 %v232
  %v353 = vpop.f32.mrb[0].mxu0
  %v354 = vadd.f32 %v165, %v353
  %v355 = vpop.f32.mrb[0].mxu0
  %v356 = vpop.f32.mrb[0].mxu0
  %v357 = vadd.f32 %v165, %v356
  %v358 = vpop.f32.mrb[0].mxu0
  %359 = vmatprep.mubr.bf16.mxu0 0
  %360 = vmatmul.mubr.bf16.gmra.mrb[0].mxu0 %v233
  %v361 = vpop.f32.mrb[0].mxu0
  %v362 = vadd.f32 %v165, %v361
  %v363 = vpop.f32.mrb[0].mxu0
  %v364 = vpop.f32.mrb[0].mxu0
  %v365 = vadd.f32 %v165, %v364
  %v366 = vpop.f32.mrb[0].mxu0
  %367 = vmatprep.mubr.bf16.mxu0 0
  %368 = vmatmul.mubr.bf16.gmra.mrb[0].mxu0 %v234
  %v369 = vpop.f32.mrb[0].mxu0
  %v370 = vadd.f32 %v165, %v369
  %v371 = vpop.f32.mrb[0].mxu0
  %v372 = vpop.f32.mrb[0].mxu0
  %v373 = vadd.f32 %v165, %v372
  %v374 = vpop.f32.mrb[0].mxu0
  %375 = vmatprep.mubr.bf16.mxu0 0
  %376 = vmatmul.mubr.bf16.gmra.mrb[0].mxu0 %v235
  %v377 = vpop.f32.mrb[0].mxu0
  %v378 = vadd.f32 %v165, %v377
  %v379 = vpop.f32.mrb[0].mxu0
  %v380 = vpop.f32.mrb[0].mxu0
  %v381 = vadd.f32 %v165, %v380
  %v382 = vpop.f32.mrb[0].mxu0
  %383 = vmatprep.mubr.bf16.mxu0 0
  %384 = vmatmul.mubr.bf16.gmra.mrb[0].mxu0 %v236
  %v385 = vpop.f32.mrb[0].mxu0
  %v386 = vadd.f32 %v165, %v385
  %v387 = vpop.f32.mrb[0].mxu0
  %v388 = vpop.f32.mrb[0].mxu0
  %v389 = vadd.f32 %v165, %v388
  %v390 = vpop.f32.mrb[0].mxu0
  %391 = vmatprep.mubr.bf16.mxu0 0
  %392 = vmatmul.mubr.bf16.gmra.mrb[0].mxu0 %v237
  %v393 = vpop.f32.mrb[0].mxu0
  %v394 = vadd.f32 %v165, %v393
  %v395 = vpop.f32.mrb[0].mxu0
  %v396 = vpop.f32.mrb[0].mxu0
  %v397 = vadd.f32 %v165, %v396
  %v398 = vpop.f32.mrb[0].mxu0
  %399 = vmatprep.mubr.bf16.mxu0 0
  %400 = vmatmul.mubr.bf16.gmra.mrb[0].mxu0 %v238
  %v401 = vpop.f32.mrb[0].mxu0
  %v402 = vadd.f32 %v165, %v401
  %v403 = vpop.f32.mrb[0].mxu0
  %v404 = vpop.f32.mrb[0].mxu0
  %v405 = vadd.f32 %v165, %v404
  %v406 = vpop.f32.mrb[0].mxu0
  %407 = vmatprep.mubr.bf16.mxu0 0
  %408 = vmatmul.mubr.bf16.gmra.mrb[0].mxu0 %v239
  %v409 = vpop.f32.mrb[0].mxu0
  %v410 = vadd.f32 %v165, %v409
  %v411 = vpop.f32.mrb[0].mxu0
  %v412 = vpop.f32.mrb[0].mxu0
  %v413 = vadd.f32 %v165, %v412
  %v414 = vpop.f32.mrb[0].mxu0
  %415 = vmatprep.mubr.bf16.mxu0 0
  %416 = vmatmul.mubr.bf16.gmra.mrb[0].mxu0 %v240
  %v417 = vpop.f32.mrb[0].mxu0
  %v418 = vadd.f32 %v165, %v417
  %v419 = vpop.f32.mrb[0].mxu0
  %v420 = vpop.f32.mrb[0].mxu0
  %v421 = vadd.f32 %v165, %v420
  %v422 = vpop.f32.mrb[0].mxu0
  %423 = vmatprep.mubr.bf16.mxu0 0
  %424 = vmatmul.mubr.bf16.gmra.mrb[0].mxu0 %v241
  %v425 = vpop.f32.mrb[0].mxu0
  %v426 = vadd.f32 %v165, %v425
  %v427 = vpop.f32.mrb[0].mxu0
  %v428 = vpop.f32.mrb[0].mxu0
  %v429 = vadd.f32 %v165, %v428
  %v430 = vpop.f32.mrb[0].mxu0
  %431 = vmatprep.mubr.bf16.mxu0 0
  %432 = vmatmul.mubr.bf16.gmra.mrb[0].mxu0 %v242
  %v433 = vpop.f32.mrb[0].mxu0
  %v434 = vadd.f32 %v165, %v433
  %v435 = vpop.f32.mrb[0].mxu0
  %v436 = vpop.f32.mrb[0].mxu0
  %v437 = vadd.f32 %v165, %v436
  %v438 = vpop.f32.mrb[0].mxu0
  %439 = vmatprep.mubr.bf16.mxu0 0
  %440 = vmatmul.mubr.bf16.gmra.mrb[0].mxu0 %v243
  %v441 = vpop.f32.mrb[0].mxu0
  %v442 = vadd.f32 %v165, %v441
  %v443 = vpop.f32.mrb[0].mxu0
  %v444 = vpop.f32.mrb[0].mxu0
  %v445 = vadd.f32 %v165, %v444
  %v446 = vpop.f32.mrb[0].mxu0
  %447 = vmatprep.mubr.bf16.mxu0 0
  %448 = vmatmul.mubr.bf16.gmra.mrb[0].mxu0 %v244
  %v449 = vpop.f32.mrb[0].mxu0
  %v450 = vadd.f32 %v165, %v449
  %v451 = vpop.f32.mrb[0].mxu0
  %v452 = vpop.f32.mrb[0].mxu0
  %v453 = vadd.f32 %v165, %v452
  %v454 = vpop.f32.mrb[0].mxu0
  %455 = vmatprep.mubr.bf16.mxu0 0
  %456 = vmatmul.mubr.bf16.gmra.mrb[0].mxu0 %v245
  %v457 = vpop.f32.mrb[0].mxu0
  %v458 = vadd.f32 %v165, %v457
  %v459 = vpop.f32.mrb[0].mxu0
  %v460 = vpop.f32.mrb[0].mxu0
  %v461 = vadd.f32 %v165, %v460
  %v462 = vpop.f32.mrb[0].mxu0
  %463 = vmatprep.mubr.bf16.mxu0 0
  %464 = vmatmul.mubr.bf16.gmra.mrb[0].mxu0 %v246
  %v465 = vpop.f32.mrb[0].mxu0
  %v466 = vadd.f32 %v165, %v465
  %v467 = vpop.f32.mrb[0].mxu0
  %v468 = vpop.f32.mrb[0].mxu0
  %v469 = vadd.f32 %v165, %v468
  %v470 = vpop.f32.mrb[0].mxu0
  %471 = vdwg.mxu0
  %472 = vst [vmem:[%s3] sm:$0xff] %v346
  %473 = vst [vmem:[%s3 + $0x8] sm:$0xff] %v349
  %474 = vst [vmem:[%s3 + $0x10] sm:$0xff] %v354
  %475 = vst [vmem:[%s3 + $0x18] sm:$0xff] %v357
  %476 = vst [vmem:[%s3 + $0x20] sm:$0xff] %v362
  %477 = vst [vmem:[%s3 + $0x28] sm:$0xff] %v365
  %478 = vst [vmem:[%s3 + $0x30] sm:$0xff] %v370
  %479 = vst [vmem:[%s3 + $0x38] sm:$0xff] %v373
  %480 = vst [vmem:[%s3 + $0x40] sm:$0xff] %v378
  %481 = vst [vmem:[%s3 + $0x48] sm:$0xff] %v381
  %482 = vst [vmem:[%s3 + $0x50] sm:$0xff] %v386
  %483 = vst [vmem:[%s3 + $0x58] sm:$0xff] %v389
  %484 = vst [vmem:[%s3 + $0x60] sm:$0xff] %v394
  %485 = vst [vmem:[%s3 + $0x68] sm:$0xff] %v397
  %486 = vst [vmem:[%s3 + $0x70] sm:$0xff] %v402
  %487 = vst [vmem:[%s3 + $0x78] sm:$0xff] %v405
  %488 = vst [vmem:[%s3 + $0x80] sm:$0xff] %v410
  %489 = vst [vmem:[%s3 + $0x88] sm:$0xff] %v413
  %490 = vst [vmem:[%s3 + $0x90] sm:$0xff] %v418
  %491 = vst [vmem:[%s3 + $0x98] sm:$0xff] %v421
  %492 = vst [vmem:[%s3 + $0xa0] sm:$0xff] %v426
  %493 = vst [vmem:[%s3 + $0xa8] sm:$0xff] %v429
  %494 = vst [vmem:[%s3 + $0xb0] sm:$0xff] %v434
  %495 = vst [vmem:[%s3 + $0xb8] sm:$0xff] %v437
  %496 = vst [vmem:[%s3 + $0xc0] sm:$0xff] %v442
  %497 = vst [vmem:[%s3 + $0xc8] sm:$0xff] %v445
  %498 = vst [vmem:[%s3 + $0xd0] sm:$0xff] %v450
  %499 = vst [vmem:[%s3 + $0xd8] sm:$0xff] %v453
  %500 = vst [vmem:[%s3 + $0xe0] sm:$0xff] %v458
  %501 = vst [vmem:[%s3 + $0xe8] sm:$0xff] %v461
  %502 = vst [vmem:[%s3 + $0xf0] sm:$0xff] %v466
  %503 = vst [vmem:[%s3 + $0xf8] sm:$0xff] %v469
  // Predicated region
  $region14: #{predictor_unisage_forward.13} parent=0 // pred_check
    _
  $region15: #{predictor_unisage_forward.13} parent=0 // pred_check_branch
    %505 = sbr.rel (0) target = $region17
  $region16: #{predictor_unisage_forward.13} parent=0 // pred_region
    _
  $region17: #{predictor_unisage_forward.13} parent=0 // pred_fallthru
    _
  // Predicated region
  $region18: #{predictor_unisage_forward.13} parent=0 // pred_check
    _
  $region19: #{predictor_unisage_forward.13} parent=0 // pred_check_branch
    %507 = sbr.rel (0) target = $region21
  $region20: #{predictor_unisage_forward.13} parent=0 // pred_region
    _
  $region21: #{predictor_unisage_forward.13} parent=0 // pred_fallthru
    _

// kernel: predictor_unisage_forward.12
$region0: #{predictor_unisage_forward.12}
  #allocation0 [shape = 'u32[]', space=smem, size = 0x4, offset = 0x4, fixed_abs, tag = 'smem constant byte address 0x4 - core index']
  #allocation1 [shape = 'u32[144,128]{1,0:T(1,128)}', space=vmem, size = 0x12000, scoped, tag = 'internal scratch']
  #allocation2 [shape = 'f32[256,128]{1,0:T(8,128)}', space=vmem, size = 0x20000, scoped, tag = 'scratch operand']
  #allocation3 [shape = 'f32[1]{0:T(128)S(6)}', space=smem, size = 0x200, scoped, tag = 'scoped memory for predictor_unisage_forward.12']
  %s0 = inlined_call_operand.<no memory space> [shape: f32[1], index: 0, kind: input, shape index: {}]
  %s1 = inlined_call_operand.vmem [shape: bf16[256,128], index: 1, kind: input, shape index: {}]
  %s2 = inlined_call_operand.vmem [shape: s8[256,256], index: 2, kind: input, shape index: {}]
  %s3 = inlined_call_operand.vmem [shape: bf16[256,128], index: 3, kind: input, shape index: {}]
  %s4 = inlined_call_operand.vmem [shape: bf16[128,128], index: 4, kind: input, shape index: {}]
  %s5 = inlined_call_operand.vmem [shape: f32[1,128], index: 5, kind: input, shape index: {}]
  %s6 = inlined_call_operand.vmem [shape: bf16[256,128], index: 6, kind: output, shape index: {}]
  %s7 = sld [smem:[#allocation0]]
  $region42: #{predictor_unisage_forward.12} parent=0
    _
  %s9 = ssub.s32 1, %s7
  %s10 = scalar_select 0, %s9, %s7
  %11 = sst [smem:[#allocation3]] %s0
  // Predicated region
  $region2: #{predictor_unisage_forward.12} parent=0 // pred_check
    _
  $region3: #{predictor_unisage_forward.12} parent=0 // pred_check_branch
    %13 = sbr.rel (0) target = $region5
  $region4: #{predictor_unisage_forward.12} parent=0 // pred_region
    _
  $region5: #{predictor_unisage_forward.12} parent=0 // pred_fallthru
    _
  // Predicated region
  $region6: #{predictor_unisage_forward.12} parent=0 // pred_check
    _
  $region7: #{predictor_unisage_forward.12} parent=0 // pred_check_branch
    %15 = sbr.rel (0) target = $region9
  $region8: #{predictor_unisage_forward.12} parent=0 // pred_region
    _
  $region9: #{predictor_unisage_forward.12} parent=0 // pred_fallthru
    _
  // Predicated region
  $region10: #{predictor_unisage_forward.12} parent=0 // pred_check
    _
  $region11: #{predictor_unisage_forward.12} parent=0 // pred_check_branch
    %17 = sbr.rel (0) target = $region13
  $region12: #{predictor_unisage_forward.12} parent=0 // pred_region
    _
  $region13: #{predictor_unisage_forward.12} parent=0 // pred_fallthru
    _
  // Predicated region
  $region14: #{predictor_unisage_forward.12} parent=0 // pred_check
    _
  $region15: #{predictor_unisage_forward.12} parent=0 // pred_check_branch
    %19 = sbr.rel (0) target = $region17
  $region16: #{predictor_unisage_forward.12} parent=0 // pred_region
    _
  $region17: #{predictor_unisage_forward.12} parent=0 // pred_fallthru
    _
  // Predicated region
  $region18: #{predictor_unisage_forward.12} parent=0 // pred_check
    _
  $region19: #{predictor_unisage_forward.12} parent=0 // pred_check_branch
    %21 = sbr.rel (0) target = $region21
  $region20: #{predictor_unisage_forward.12} parent=0 // pred_region
    _
  $region21: #{predictor_unisage_forward.12} parent=0 // pred_fallthru
    _
  // Predicated region
  $region22: #{predictor_unisage_forward.12} parent=0 // pred_check
    _
  $region23: #{predictor_unisage_forward.12} parent=0 // pred_check_branch
    %23 = sbr.rel (0) target = $region25
  $region24: #{predictor_unisage_forward.12} parent=0 // pred_region
    _
  $region25: #{predictor_unisage_forward.12} parent=0 // pred_fallthru
    _
  %p25 = scmp.eq.s32.totalorder 0, 0
  // Predicated region
  $region26: #{predictor_unisage_forward.12} parent=0 // pred_check
    %p26 = pneg %p25
  $region27: #{predictor_unisage_forward.12} parent=0 // pred_check_branch
    %28 = sbr.rel (%p26) target = $region29
  $region28: #{predictor_unisage_forward.12} parent=0 // pred_region
    %29 = vst [vmem:[#allocation2] sm:$0xff] 0.0
    %30 = vst [vmem:[#allocation2 + $0x8] sm:$0xff] 0.0
    %31 = vst [vmem:[#allocation2 + $0x10] sm:$0xff] 0.0
    %32 = vst [vmem:[#allocation2 + $0x18] sm:$0xff] 0.0
    %33 = vst [vmem:[#allocation2 + $0x20] sm:$0xff] 0.0
    %34 = vst [vmem:[#allocation2 + $0x28] sm:$0xff] 0.0
    %35 = vst [vmem:[#allocation2 + $0x30] sm:$0xff] 0.0
    %36 = vst [vmem:[#allocation2 + $0x38] sm:$0xff] 0.0
    %37 = vst [vmem:[#allocation2 + $0x40] sm:$0xff] 0.0
    %38 = vst [vmem:[#allocation2 + $0x48] sm:$0xff] 0.0
    %39 = vst [vmem:[#allocation2 + $0x50] sm:$0xff] 0.0
    %40 = vst [vmem:[#allocation2 + $0x58] sm:$0xff] 0.0
    %41 = vst [vmem:[#allocation2 + $0x60] sm:$0xff] 0.0
    %42 = vst [vmem:[#allocation2 + $0x68] sm:$0xff] 0.0
    %43 = vst [vmem:[#allocation2 + $0x70] sm:$0xff] 0.0
    %44 = vst [vmem:[#allocation2 + $0x78] sm:$0xff] 0.0
    %45 = vst [vmem:[#allocation2 + $0x80] sm:$0xff] 0.0
    %46 = vst [vmem:[#allocation2 + $0x88] sm:$0xff] 0.0
    %47 = vst [vmem:[#allocation2 + $0x90] sm:$0xff] 0.0
    %48 = vst [vmem:[#allocation2 + $0x98] sm:$0xff] 0.0
    %49 = vst [vmem:[#allocation2 + $0xa0] sm:$0xff] 0.0
    %50 = vst [vmem:[#allocation2 + $0xa8] sm:$0xff] 0.0
    %51 = vst [vmem:[#allocation2 + $0xb0] sm:$0xff] 0.0
    %52 = vst [vmem:[#allocation2 + $0xb8] sm:$0xff] 0.0
    %53 = vst [vmem:[#allocation2 + $0xc0] sm:$0xff] 0.0
    %54 = vst [vmem:[#allocation2 + $0xc8] sm:$0xff] 0.0
    %55 = vst [vmem:[#allocation2 + $0xd0] sm:$0xff] 0.0
    %56 = vst [vmem:[#allocation2 + $0xd8] sm:$0xff] 0.0
    %57 = vst [vmem:[#allocation2 + $0xe0] sm:$0xff] 0.0
    %58 = vst [vmem:[#allocation2 + $0xe8] sm:$0xff] 0.0
    %59 = vst [vmem:[#allocation2 + $0xf0] sm:$0xff] 0.0
    %60 = vst [vmem:[#allocation2 + $0xf8] sm:$0xff] 0.0
  $region29: #{predictor_unisage_forward.12} parent=0 // pred_fallthru
    _
  %v61 = vld [vmem:[%s2] sm:$0xff]
  %v62 = vld [vmem:[%s2 + $0x8] sm:$0xff]
  %v63 = vld [vmem:[%s2 + $0x10] sm:$0xff]
  %v64 = vld [vmem:[%s2 + $0x18] sm:$0xff]
  %v65 = vld [vmem:[%s2 + $0x20] sm:$0xff]
  %v66 = vld [vmem:[%s2 + $0x28] sm:$0xff]
  %v67 = vld [vmem:[%s2 + $0x30] sm:$0xff]
  %v68 = vld [vmem:[%s2 + $0x38] sm:$0xff]
  %v69 = vld [vmem:[%s2 + $0x40] sm:$0xff]
  %v70 = vld [vmem:[%s2 + $0x48] sm:$0xff]
  %v71 = vld [vmem:[%s2 + $0x50] sm:$0xff]
  %v72 = vld [vmem:[%s2 + $0x58] sm:$0xff]
  %v73 = vld [vmem:[%s2 + $0x60] sm:$0xff]
  %v74 = vld [vmem:[%s2 + $0x68] sm:$0xff]
  %v75 = vld [vmem:[%s2 + $0x70] sm:$0xff]
  %v76 = vld [vmem:[%s2 + $0x78] sm:$0xff]
  %v77 = vunpack.c.l.s8.bf16 %v61
  %v78 = vunpack.c.l.s8.bf16 %v62
  %v79 = vunpack.c.h.s8.bf16 %v61
  %v80 = vunpack.c.h.s8.bf16 %v62
  %v81 = vunpack.c.l.s8.bf16 %v63
  %v82 = vunpack.c.l.s8.bf16 %v64
  %v83 = vunpack.c.h.s8.bf16 %v63
  %v84 = vunpack.c.h.s8.bf16 %v64
  %v85 = vunpack.c.l.s8.bf16 %v65
  %v86 = vunpack.c.l.s8.bf16 %v66
  %v87 = vunpack.c.h.s8.bf16 %v65
  %v88 = vunpack.c.h.s8.bf16 %v66
  %v89 = vunpack.c.l.s8.bf16 %v67
  %v90 = vunpack.c.l.s8.bf16 %v68
  %v91 = vunpack.c.h.s8.bf16 %v67
  %v92 = vunpack.c.h.s8.bf16 %v68
  %v93 = vunpack.c.l.s8.bf16 %v69
  %v94 = vunpack.c.l.s8.bf16 %v70
  %v95 = vunpack.c.h.s8.bf16 %v69
  %v96 = vunpack.c.h.s8.bf16 %v70
  %v97 = vunpack.c.l.s8.bf16 %v71
  %v98 = vunpack.c.l.s8.bf16 %v72
  %v99 = vunpack.c.h.s8.bf16 %v71
  %v100 = vunpack.c.h.s8.bf16 %v72
  %v101 = vunpack.c.l.s8.bf16 %v73
  %v102 = vunpack.c.l.s8.bf16 %v74
  %v103 = vunpack.c.h.s8.bf16 %v73
  %v104 = vunpack.c.h.s8.bf16 %v74
  %v105 = vunpack.c.l.s8.bf16 %v75
  %v106 = vunpack.c.l.s8.bf16 %v76
  %v107 = vunpack.c.h.s8.bf16 %v75
  %v108 = vunpack.c.h.s8.bf16 %v76
  %s109 = smul.u32 0, 256
  %s110 = sshra.s32 %s109, 3
  %s111 = sand.u32 %s109, 7
  %s112 = smul.addr %s110, 4
  %s113 = scalar_lea.vmem %s3, %s112
  %v114 = vld [vmem:[%s113] sm:$0xf]
  %v115 = vld [vmem:[%s113 + $0x4] sm:$0xf]
  %v116 = vld [vmem:[%s113 + $0x8] sm:$0xf]
  %v117 = vld [vmem:[%s113 + $0xc] sm:$0xf]
  %v118 = vld [vmem:[%s113 + $0x10] sm:$0xf]
  %v119 = vld [vmem:[%s113 + $0x14] sm:$0xf]
  %v120 = vld [vmem:[%s113 + $0x18] sm:$0xf]
  %v121 = vld [vmem:[%s113 + $0x1c] sm:$0xf]
  %v122 = vld [vmem:[%s113 + $0x20] sm:$0xf]
  %v123 = vld [vmem:[%s113 + $0x24] sm:$0xf]
  %v124 = vld [vmem:[%s113 + $0x28] sm:$0xf]
  %v125 = vld [vmem:[%s113 + $0x2c] sm:$0xf]
  %v126 = vld [vmem:[%s113 + $0x30] sm:$0xf]
  %v127 = vld [vmem:[%s113 + $0x34] sm:$0xf]
  %v128 = vld [vmem:[%s113 + $0x38] sm:$0xf]
  %v129 = vld [vmem:[%s113 + $0x3c] sm:$0xf]
  %v130 = vld [vmem:[%s113 + $0x40] sm:$0xf]
  %v131 = vld [vmem:[%s113 + $0x44] sm:$0xf]
  %v132 = vld [vmem:[%s113 + $0x48] sm:$0xf]
  %v133 = vld [vmem:[%s113 + $0x4c] sm:$0xf]
  %v134 = vld [vmem:[%s113 + $0x50] sm:$0xf]
  %v135 = vld [vmem:[%s113 + $0x54] sm:$0xf]
  %v136 = vld [vmem:[%s113 + $0x58] sm:$0xf]
  %v137 = vld [vmem:[%s113 + $0x5c] sm:$0xf]
  %v138 = vld [vmem:[%s113 + $0x60] sm:$0xf]
  %v139 = vld [vmem:[%s113 + $0x64] sm:$0xf]
  %v140 = vld [vmem:[%s113 + $0x68] sm:$0xf]
  %v141 = vld [vmem:[%s113 + $0x6c] sm:$0xf]
  %v142 = vld [vmem:[%s113 + $0x70] sm:$0xf]
  %v143 = vld [vmem:[%s113 + $0x74] sm:$0xf]
  %v144 = vld [vmem:[%s113 + $0x78] sm:$0xf]
  %v145 = vld [vmem:[%s113 + $0x7c] sm:$0xf]
  %v146 = vld [vmem:[#allocation2] sm:$0xff]
  %v147 = vld [vmem:[#allocation2 + $0x8] sm:$0xff]
  %v148 = vld [vmem:[#allocation2 + $0x10] sm:$0xff]
  %v149 = vld [vmem:[#allocation2 + $0x18] sm:$0xff]
  %v150 = vld [vmem:[#allocation2 + $0x20] sm:$0xff]
  %v151 = vld [vmem:[#allocation2 + $0x28] sm:$0xff]
  %v152 = vld [vmem:[#allocation2 + $0x30] sm:$0xff]
  %v153 = vld [vmem:[#allocation2 + $0x38] sm:$0xff]
  %v154 = vld [vmem:[#allocation2 + $0x40] sm:$0xff]
  %v155 = vld [vmem:[#allocation2 + $0x48] sm:$0xff]
  %v156 = vld [vmem:[#allocation2 + $0x50] sm:$0xff]
  %v157 = vld [vmem:[#allocation2 + $0x58] sm:$0xff]
  %v158 = vld [vmem:[#allocation2 + $0x60] sm:$0xff]
  %v159 = vld [vmem:[#allocation2 + $0x68] sm:$0xff]
  %v160 = vld [vmem:[#allocation2 + $0x70] sm:$0xff]
  %v161 = vld [vmem:[#allocation2 + $0x78] sm:$0xff]
  %v162 = vld [vmem:[#allocation2 + $0x80] sm:$0xff]
  %v163 = vld [vmem:[#allocation2 + $0x88] sm:$0xff]
  %v164 = vld [vmem:[#allocation2 + $0x90] sm:$0xff]
  %v165 = vld [vmem:[#allocation2 + $0x98] sm:$0xff]
  %v166 = vld [vmem:[#allocation2 + $0xa0] sm:$0xff]
  %v167 = vld [vmem:[#allocation2 + $0xa8] sm:$0xff]
  %v168 = vld [vmem:[#allocation2 + $0xb0] sm:$0xff]
  %v169 = vld [vmem:[#allocation2 + $0xb8] sm:$0xff]
  %v170 = vld [vmem:[#allocation2 + $0xc0] sm:$0xff]
  %v171 = vld [vmem:[#allocation2 + $0xc8] sm:$0xff]
  %v172 = vld [vmem:[#allocation2 + $0xd0] sm:$0xff]
  %v173 = vld [vmem:[#allocation2 + $0xd8] sm:$0xff]
  %v174 = vld [vmem:[#allocation2 + $0xe0] sm:$0xff]
  %v175 = vld [vmem:[#allocation2 + $0xe8] sm:$0xff]
  %v176 = vld [vmem:[#allocation2 + $0xf0] sm:$0xff]
  %v177 = vld [vmem:[#allocation2 + $0xf8] sm:$0xff]
  %v210 = vunpack.c.l.b16 %v114
  %v211 = vunpack.c.l.b16 %v115
  %v212 = vunpack.c.l.b16 %v116
  %v213 = vunpack.c.l.b16 %v117
  %v214 = vunpack.c.l.b16 %v118
  %v215 = vunpack.c.l.b16 %v119
  %v216 = vunpack.c.l.b16 %v120
  %v217 = vunpack.c.l.b16 %v121
  %v218 = vunpack.c.l.b16 %v122
  %v219 = vunpack.c.l.b16 %v123
  %v220 = vunpack.c.l.b16 %v124
  %v221 = vunpack.c.l.b16 %v125
  %v222 = vunpack.c.l.b16 %v126
  %v223 = vunpack.c.l.b16 %v127
  %v224 = vunpack.c.l.b16 %v128
  %v225 = vunpack.c.l.b16 %v129
  %v226 = vunpack.c.l.b16 %v130
  %v227 = vunpack.c.l.b16 %v131
  %v228 = vunpack.c.l.b16 %v132
  %v229 = vunpack.c.l.b16 %v133
  %v230 = vunpack.c.l.b16 %v134
  %v231 = vunpack.c.l.b16 %v135
  %v232 = vunpack.c.l.b16 %v136
  %v233 = vunpack.c.l.b16 %v137
  %v234 = vunpack.c.l.b16 %v138
  %v235 = vunpack.c.l.b16 %v139
  %v236 = vunpack.c.l.b16 %v140
  %v237 = vunpack.c.l.b16 %v141
  %v238 = vunpack.c.l.b16 %v142
  %v239 = vunpack.c.l.b16 %v143
  %v240 = vunpack.c.l.b16 %v144
  %v241 = vunpack.c.l.b16 %v145
  %v242 = vpack.c.b16 %v211, %v210
  %v243 = vpack.c.b16 %v213, %v212
  %v244 = vpack.c.b16 %v215, %v214
  %v245 = vpack.c.b16 %v217, %v216
  %v246 = vpack.c.b16 %v219, %v218
  %v247 = vpack.c.b16 %v221, %v220
  %v248 = vpack.c.b16 %v223, %v222
  %v249 = vpack.c.b16 %v225, %v224
  %v250 = vpack.c.b16 %v227, %v226
  %v251 = vpack.c.b16 %v229, %v228
  %v252 = vpack.c.b16 %v231, %v230
  %v253 = vpack.c.b16 %v233, %v232
  %v254 = vpack.c.b16 %v235, %v234
  %v255 = vpack.c.b16 %v237, %v236
  %v256 = vpack.c.b16 %v239, %v238
  %v257 = vpack.c.b16 %v241, %v240
  %274 = vmatprep.subr.bf16.mxu0 0
  %275 = vmatpush1.bf16.msra.mxu0 %v242
  %276 = vmatprep.subr.bf16.mxu0 0
  %277 = vmatpush1.bf16.msra.mxu0 %v243
  %278 = vmatprep.subr.bf16.mxu0 0
  %279 = vmatpush1.bf16.msra.mxu0 %v244
  %280 = vmatprep.subr.bf16.mxu0 0
  %281 = vmatpush1.bf16.msra.mxu0 %v245
  %282 = vmatprep.subr.bf16.mxu0 0
  %283 = vmatpush1.bf16.msra.mxu0 %v246
  %284 = vmatprep.subr.bf16.mxu0 0
  %285 = vmatpush1.bf16.msra.mxu0 %v247
  %286 = vmatprep.subr.bf16.mxu0 0
  %287 = vmatpush1.bf16.msra.mxu0 %v248
  %288 = vmatprep.subr.bf16.mxu0 0
  %289 = vmatpush1.bf16.msra.mxu0 %v249
  %290 = vmatprep.subr.bf16.mxu0 0
  %291 = vmatpush1.bf16.msra.mxu0 %v250
  %292 = vmatprep.subr.bf16.mxu0 0
  %293 = vmatpush1.bf16.msra.mxu0 %v251
  %294 = vmatprep.subr.bf16.mxu0 0
  %295 = vmatpush1.bf16.msra.mxu0 %v252
  %296 = vmatprep.subr.bf16.mxu0 0
  %297 = vmatpush1.bf16.msra.mxu0 %v253
  %298 = vmatprep.subr.bf16.mxu0 0
  %299 = vmatpush1.bf16.msra.mxu0 %v254
  %300 = vmatprep.subr.bf16.mxu0 0
  %301 = vmatpush1.bf16.msra.mxu0 %v255
  %302 = vmatprep.subr.bf16.mxu0 0
  %303 = vmatpush1.bf16.msra.mxu0 %v256
  %304 = vmatprep.subr.bf16.mxu0 0
  %305 = vmatpush1.bf16.msra.mxu0 %v257
  %306 = vmatprep.mubr.bf16.mxu0 %v78
  %307 = vmatmul.mubr.bf16.gmra.mrb[0].mxu0 %v77
  %v308 = vpop.f32.mrb[0].mxu0
  %v309 = vadd.f32 0.0, %v308
  %v310 = vpop.f32.mrb[0].mxu0
  %v311 = vpop.f32.mrb[0].mxu0
  %v312 = vadd.f32 0.0, %v311
  %v313 = vpop.f32.mrb[0].mxu0
  %314 = vmatprep.mubr.bf16.mxu0 %v80
  %315 = vmatmul.mubr.bf16.gmra.mrb[0].mxu0 %v79
  %v316 = vpop.f32.mrb[0].mxu0
  %v317 = vadd.f32 0.0, %v316
  %v318 = vpop.f32.mrb[0].mxu0
  %v319 = vpop.f32.mrb[0].mxu0
  %v320 = vadd.f32 0.0, %v319
  %v321 = vpop.f32.mrb[0].mxu0
  %322 = vmatprep.mubr.bf16.mxu0 %v82
  %323 = vmatmul.mubr.bf16.gmra.mrb[0].mxu0 %v81
  %v324 = vpop.f32.mrb[0].mxu0
  %v325 = vadd.f32 0.0, %v324
  %v326 = vpop.f32.mrb[0].mxu0
  %v327 = vpop.f32.mrb[0].mxu0
  %v328 = vadd.f32 0.0, %v327
  %v329 = vpop.f32.mrb[0].mxu0
  %330 = vmatprep.mubr.bf16.mxu0 %v84
  %331 = vmatmul.mubr.bf16.gmra.mrb[0].mxu0 %v83
  %v332 = vpop.f32.mrb[0].mxu0
  %v333 = vadd.f32 0.0, %v332
  %v334 = vpop.f32.mrb[0].mxu0
  %v335 = vpop.f32.mrb[0].mxu0
  %v336 = vadd.f32 0.0, %v335
  %v337 = vpop.f32.mrb[0].mxu0
  %338 = vmatprep.mubr.bf16.mxu0 %v86
  %339 = vmatmul.mubr.bf16.gmra.mrb[0].mxu0 %v85
  %v340 = vpop.f32.mrb[0].mxu0
  %v341 = vadd.f32 0.0, %v340
  %v342 = vpop.f32.mrb[0].mxu0
  %v343 = vpop.f32.mrb[0].mxu0
  %v344 = vadd.f32 0.0, %v343
  %v345 = vpop.f32.mrb[0].mxu0
  %346 = vmatprep.mubr.bf16.mxu0 %v88
  %347 = vmatmul.mubr.bf16.gmra.mrb[0].mxu0 %v87
  %v348 = vpop.f32.mrb[0].mxu0
  %v349 = vadd.f32 0.0, %v348
  %v350 = vpop.f32.mrb[0].mxu0
  %v351 = vpop.f32.mrb[0].mxu0
  %v352 = vadd.f32 0.0, %v351
  %v353 = vpop.f32.mrb[0].mxu0
  %354 = vmatprep.mubr.bf16.mxu0 %v90
  %355 = vmatmul.mubr.bf16.gmra.mrb[0].mxu0 %v89
  %v356 = vpop.f32.mrb[0].mxu0
  %v357 = vadd.f32 0.0, %v356
  %v358 = vpop.f32.mrb[0].mxu0
  %v359 = vpop.f32.mrb[0].mxu0
  %v360 = vadd.f32 0.0, %v359
  %v361 = vpop.f32.mrb[0].mxu0
  %362 = vmatprep.mubr.bf16.mxu0 %v92
  %363 = vmatmul.mubr.bf16.gmra.mrb[0].mxu0 %v91
  %v364 = vpop.f32.mrb[0].mxu0
  %v365 = vadd.f32 0.0, %v364
  %v366 = vpop.f32.mrb[0].mxu0
  %v367 = vpop.f32.mrb[0].mxu0
  %v368 = vadd.f32 0.0, %v367
  %v369 = vpop.f32.mrb[0].mxu0
  %370 = vmatprep.mubr.bf16.mxu0 %v94
  %371 = vmatmul.mubr.bf16.gmra.mrb[0].mxu0 %v93
  %v372 = vpop.f32.mrb[0].mxu0
  %v373 = vadd.f32 0.0, %v372
  %v374 = vpop.f32.mrb[0].mxu0
  %v375 = vpop.f32.mrb[0].mxu0
  %v376 = vadd.f32 0.0, %v375
  %v377 = vpop.f32.mrb[0].mxu0
  %378 = vmatprep.mubr.bf16.mxu0 %v96
  %379 = vmatmul.mubr.bf16.gmra.mrb[0].mxu0 %v95
  %v380 = vpop.f32.mrb[0].mxu0
  %v381 = vadd.f32 0.0, %v380
  %v382 = vpop.f32.mrb[0].mxu0
  %v383 = vpop.f32.mrb[0].mxu0
  %v384 = vadd.f32 0.0, %v383
  %v385 = vpop.f32.mrb[0].mxu0
  %386 = vmatprep.mubr.bf16.mxu0 %v98
  %387 = vmatmul.mubr.bf16.gmra.mrb[0].mxu0 %v97
  %v388 = vpop.f32.mrb[0].mxu0
  %v389 = vadd.f32 0.0, %v388
  %v390 = vpop.f32.mrb[0].mxu0
  %v391 = vpop.f32.mrb[0].mxu0
  %v392 = vadd.f32 0.0, %v391
  %v393 = vpop.f32.mrb[0].mxu0
  %394 = vmatprep.mubr.bf16.mxu0 %v100
  %395 = vmatmul.mubr.bf16.gmra.mrb[0].mxu0 %v99
  %v396 = vpop.f32.mrb[0].mxu0
  %v397 = vadd.f32 0.0, %v396
  %v398 = vpop.f32.mrb[0].mxu0
  %v399 = vpop.f32.mrb[0].mxu0
  %v400 = vadd.f32 0.0, %v399
  %v401 = vpop.f32.mrb[0].mxu0
  %402 = vmatprep.mubr.bf16.mxu0 %v102
  %403 = vmatmul.mubr.bf16.gmra.mrb[0].mxu0 %v101
  %v404 = vpop.f32.mrb[0].mxu0
  %v405 = vadd.f32 0.0, %v404
  %v406 = vpop.f32.mrb[0].mxu0
  %v407 = vpop.f32.mrb[0].mxu0
  %v408 = vadd.f32 0.0, %v407
  %v409 = vpop.f32.mrb[0].mxu0
  %410 = vmatprep.mubr.bf16.mxu0 %v104
  %411 = vmatmul.mubr.bf16.gmra.mrb[0].mxu0 %v103
  %v412 = vpop.f32.mrb[0].mxu0
  %v413 = vadd.f32 0.0, %v412
  %v414 = vpop.f32.mrb[0].mxu0
  %v415 = vpop.f32.mrb[0].mxu0
  %v416 = vadd.f32 0.0, %v415
  %v417 = vpop.f32.mrb[0].mxu0
  %418 = vmatprep.mubr.bf16.mxu0 %v106
  %419 = vmatmul.mubr.bf16.gmra.mrb[0].mxu0 %v105
  %v420 = vpop.f32.mrb[0].mxu0
  %v421 = vadd.f32 0.0, %v420
  %v422 = vpop.f32.mrb[0].mxu0
  %v423 = vpop.f32.mrb[0].mxu0
  %v424 = vadd.f32 0.0, %v423
  %v425 = vpop.f32.mrb[0].mxu0
  %426 = vmatprep.mubr.bf16.mxu0 %v108
  %427 = vmatmul.mubr.bf16.gmra.mrb[0].mxu0 %v107
  %v428 = vpop.f32.mrb[0].mxu0
  %v429 = vadd.f32 0.0, %v428
  %v430 = vpop.f32.mrb[0].mxu0
  %v431 = vpop.f32.mrb[0].mxu0
  %v432 = vadd.f32 0.0, %v431
  %v433 = vpop.f32.mrb[0].mxu0
  %434 = vdwg.mxu0
  %v435 = vadd.f32 %v146, %v309
  %v436 = vadd.f32 %v147, %v312
  %v437 = vadd.f32 %v148, %v317
  %v438 = vadd.f32 %v149, %v320
  %v439 = vadd.f32 %v150, %v325
  %v440 = vadd.f32 %v151, %v328
  %v441 = vadd.f32 %v152, %v333
  %v442 = vadd.f32 %v153, %v336
  %v443 = vadd.f32 %v154, %v341
  %v444 = vadd.f32 %v155, %v344
  %v445 = vadd.f32 %v156, %v349
  %v446 = vadd.f32 %v157, %v352
  %v447 = vadd.f32 %v158, %v357
  %v448 = vadd.f32 %v159, %v360
  %v449 = vadd.f32 %v160, %v365
  %v450 = vadd.f32 %v161, %v368
  %v451 = vadd.f32 %v162, %v373
  %v452 = vadd.f32 %v163, %v376
  %v453 = vadd.f32 %v164, %v381
  %v454 = vadd.f32 %v165, %v384
  %v455 = vadd.f32 %v166, %v389
  %v456 = vadd.f32 %v167, %v392
  %v457 = vadd.f32 %v168, %v397
  %v458 = vadd.f32 %v169, %v400
  %v459 = vadd.f32 %v170, %v405
  %v460 = vadd.f32 %v171, %v408
  %v461 = vadd.f32 %v172, %v413
  %v462 = vadd.f32 %v173, %v416
  %v463 = vadd.f32 %v174, %v421
  %v464 = vadd.f32 %v175, %v424
  %v465 = vadd.f32 %v176, %v429
  %v466 = vadd.f32 %v177, %v432
  %467 = vst [vmem:[#allocation2] sm:$0xff] %v435
  %468 = vst [vmem:[#allocation2 + $0x8] sm:$0xff] %v436
  %469 = vst [vmem:[#allocation2 + $0x10] sm:$0xff] %v437
  %470 = vst [vmem:[#allocation2 + $0x18] sm:$0xff] %v438
  %471 = vst [vmem:[#allocation2 + $0x20] sm:$0xff] %v439
  %472 = vst [vmem:[#allocation2 + $0x28] sm:$0xff] %v440
  %473 = vst [vmem:[#allocation2 + $0x30] sm:$0xff] %v441
  %474 = vst [vmem:[#allocation2 + $0x38] sm:$0xff] %v442
  %475 = vst [vmem:[#allocation2 + $0x40] sm:$0xff] %v443
  %476 = vst [vmem:[#allocation2 + $0x48] sm:$0xff] %v444
  %477 = vst [vmem:[#allocation2 + $0x50] sm:$0xff] %v445
  %478 = vst [vmem:[#allocation2 + $0x58] sm:$0xff] %v446
  %479 = vst [vmem:[#allocation2 + $0x60] sm:$0xff] %v447
  %480 = vst [vmem:[#allocation2 + $0x68] sm:$0xff] %v448
  %481 = vst [vmem:[#allocation2 + $0x70] sm:$0xff] %v449
  %482 = vst [vmem:[#allocation2 + $0x78] sm:$0xff] %v450
  %483 = vst [vmem:[#allocation2 + $0x80] sm:$0xff] %v451
  %484 = vst [vmem:[#allocation2 + $0x88] sm:$0xff] %v452
  %485 = vst [vmem:[#allocation2 + $0x90] sm:$0xff] %v453
  %486 = vst [vmem:[#allocation2 + $0x98] sm:$0xff] %v454
  %487 = vst [vmem:[#allocation2 + $0xa0] sm:$0xff] %v455
  %488 = vst [vmem:[#allocation2 + $0xa8] sm:$0xff] %v456
  %489 = vst [vmem:[#allocation2 + $0xb0] sm:$0xff] %v457
  %490 = vst [vmem:[#allocation2 + $0xb8] sm:$0xff] %v458
  %491 = vst [vmem:[#allocation2 + $0xc0] sm:$0xff] %v459
  %492 = vst [vmem:[#allocation2 + $0xc8] sm:$0xff] %v460
  %493 = vst [vmem:[#allocation2 + $0xd0] sm:$0xff] %v461
  %494 = vst [vmem:[#allocation2 + $0xd8] sm:$0xff] %v462
  %495 = vst [vmem:[#allocation2 + $0xe0] sm:$0xff] %v463
  %496 = vst [vmem:[#allocation2 + $0xe8] sm:$0xff] %v464
  %497 = vst [vmem:[#allocation2 + $0xf0] sm:$0xff] %v465
  %498 = vst [vmem:[#allocation2 + $0xf8] sm:$0xff] %v466
  // Predicated region
  $region30: #{predictor_unisage_forward.12} parent=0 // pred_check
    %p499 = pneg %p25
  $region31: #{predictor_unisage_forward.12} parent=0 // pred_check_branch
    %501 = sbr.rel (%p499) target = $region33
  $region32: #{predictor_unisage_forward.12} parent=0 // pred_region
    %v502 = vld [vmem:[%s1] sm:$0xf]
    %v503 = vld [vmem:[%s1 + $0x4] sm:$0xf]
    %v504 = vld [vmem:[%s1 + $0x8] sm:$0xf]
    %v505 = vld [vmem:[%s1 + $0xc] sm:$0xf]
    %v506 = vld [vmem:[%s1 + $0x10] sm:$0xf]
    %v507 = vld [vmem:[%s1 + $0x14] sm:$0xf]
    %v508 = vld [vmem:[%s1 + $0x18] sm:$0xf]
    %v509 = vld [vmem:[%s1 + $0x1c] sm:$0xf]
    %v510 = vld [vmem:[%s1 + $0x20] sm:$0xf]
    %v511 = vld [vmem:[%s1 + $0x24] sm:$0xf]
    %v512 = vld [vmem:[%s1 + $0x28] sm:$0xf]
    %v513 = vld [vmem:[%s1 + $0x2c] sm:$0xf]
    %v514 = vld [vmem:[%s1 + $0x30] sm:$0xf]
    %v515 = vld [vmem:[%s1 + $0x34] sm:$0xf]
    %v516 = vld [vmem:[%s1 + $0x38] sm:$0xf]
    %v517 = vld [vmem:[%s1 + $0x3c] sm:$0xf]
    %v518 = vld [vmem:[%s1 + $0x40] sm:$0xf]
    %v519 = vld [vmem:[%s1 + $0x44] sm:$0xf]
    %v520 = vld [vmem:[%s1 + $0x48] sm:$0xf]
    %v521 = vld [vmem:[%s1 + $0x4c] sm:$0xf]
    %v522 = vld [vmem:[%s1 + $0x50] sm:$0xf]
    %v523 = vld [vmem:[%s1 + $0x54] sm:$0xf]
    %v524 = vld [vmem:[%s1 + $0x58] sm:$0xf]
    %v525 = vld [vmem:[%s1 + $0x5c] sm:$0xf]
    %v526 = vld [vmem:[%s1 + $0x60] sm:$0xf]
    %v527 = vld [vmem:[%s1 + $0x64] sm:$0xf]
    %v528 = vld [vmem:[%s1 + $0x68] sm:$0xf]
    %v529 = vld [vmem:[%s1 + $0x6c] sm:$0xf]
    %v530 = vld [vmem:[%s1 + $0x70] sm:$0xf]
    %v531 = vld [vmem:[%s1 + $0x74] sm:$0xf]
    %v532 = vld [vmem:[%s1 + $0x78] sm:$0xf]
    %v533 = vld [vmem:[%s1 + $0x7c] sm:$0xf]
    %v534 = vunpack.c.l.bf16 %v502
    %v535 = vunpack.c.l.bf16 %v503
    %v536 = vunpack.c.l.bf16 %v504
    %v537 = vunpack.c.l.bf16 %v505
    %v538 = vunpack.c.l.bf16 %v506
    %v539 = vunpack.c.l.bf16 %v507
    %v540 = vunpack.c.l.bf16 %v508
    %v541 = vunpack.c.l.bf16 %v509
    %v542 = vunpack.c.l.bf16 %v510
    %v543 = vunpack.c.l.bf16 %v511
    %v544 = vunpack.c.l.bf16 %v512
    %v545 = vunpack.c.l.bf16 %v513
    %v546 = vunpack.c.l.bf16 %v514
    %v547 = vunpack.c.l.bf16 %v515
    %v548 = vunpack.c.l.bf16 %v516
    %v549 = vunpack.c.l.bf16 %v517
    %v550 = vunpack.c.l.bf16 %v518
    %v551 = vunpack.c.l.bf16 %v519
    %v552 = vunpack.c.l.bf16 %v520
    %v553 = vunpack.c.l.bf16 %v521
    %v554 = vunpack.c.l.bf16 %v522
    %v555 = vunpack.c.l.bf16 %v523
    %v556 = vunpack.c.l.bf16 %v524
    %v557 = vunpack.c.l.bf16 %v525
    %v558 = vunpack.c.l.bf16 %v526
    %v559 = vunpack.c.l.bf16 %v527
    %v560 = vunpack.c.l.bf16 %v528
    %v561 = vunpack.c.l.bf16 %v529
    %v562 = vunpack.c.l.bf16 %v530
    %v563 = vunpack.c.l.bf16 %v531
    %v564 = vunpack.c.l.bf16 %v532
    %v565 = vunpack.c.l.bf16 %v533
    %v566 = vld [vmem:[#allocation2] sm:$0xff]
    %v567 = vld [vmem:[#allocation2 + $0x8] sm:$0xff]
    %v568 = vld [vmem:[#allocation2 + $0x10] sm:$0xff]
    %v569 = vld [vmem:[#allocation2 + $0x18] sm:$0xff]
    %v570 = vld [vmem:[#allocation2 + $0x20] sm:$0xff]
    %v571 = vld [vmem:[#allocation2 + $0x28] sm:$0xff]
    %v572 = vld [vmem:[#allocation2 + $0x30] sm:$0xff]
    %v573 = vld [vmem:[#allocation2 + $0x38] sm:$0xff]
    %v574 = vld [vmem:[#allocation2 + $0x40] sm:$0xff]
    %v575 = vld [vmem:[#allocation2 + $0x48] sm:$0xff]
    %v576 = vld [vmem:[#allocation2 + $0x50] sm:$0xff]
    %v577 = vld [vmem:[#allocation2 + $0x58] sm:$0xff]
    %v578 = vld [vmem:[#allocation2 + $0x60] sm:$0xff]
    %v579 = vld [vmem:[#allocation2 + $0x68] sm:$0xff]
    %v580 = vld [vmem:[#allocation2 + $0x70] sm:$0xff]
    %v581 = vld [vmem:[#allocation2 + $0x78] sm:$0xff]
    %v582 = vld [vmem:[#allocation2 + $0x80] sm:$0xff]
    %v583 = vld [vmem:[#allocation2 + $0x88] sm:$0xff]
    %v584 = vld [vmem:[#allocation2 + $0x90] sm:$0xff]
    %v585 = vld [vmem:[#allocation2 + $0x98] sm:$0xff]
    %v586 = vld [vmem:[#allocation2 + $0xa0] sm:$0xff]
    %v587 = vld [vmem:[#allocation2 + $0xa8] sm:$0xff]
    %v588 = vld [vmem:[#allocation2 + $0xb0] sm:$0xff]
    %v589 = vld [vmem:[#allocation2 + $0xb8] sm:$0xff]
    %v590 = vld [vmem:[#allocation2 + $0xc0] sm:$0xff]
    %v591 = vld [vmem:[#allocation2 + $0xc8] sm:$0xff]
    %v592 = vld [vmem:[#allocation2 + $0xd0] sm:$0xff]
    %v593 = vld [vmem:[#allocation2 + $0xd8] sm:$0xff]
    %v594 = vld [vmem:[#allocation2 + $0xe0] sm:$0xff]
    %v595 = vld [vmem:[#allocation2 + $0xe8] sm:$0xff]
    %v596 = vld [vmem:[#allocation2 + $0xf0] sm:$0xff]
    %v597 = vld [vmem:[#allocation2 + $0xf8] sm:$0xff]
    %v598 = vadd.f32 %v534, %v566
    %v599 = vadd.f32 %v535, %v567
    %v600 = vadd.f32 %v536, %v568
    %v601 = vadd.f32 %v537, %v569
    %v602 = vadd.f32 %v538, %v570
    %v603 = vadd.f32 %v539, %v571
    %v604 = vadd.f32 %v540, %v572
    %v605 = vadd.f32 %v541, %v573
    %v606 = vadd.f32 %v542, %v574
    %v607 = vadd.f32 %v543, %v575
    %v608 = vadd.f32 %v544, %v576
    %v609 = vadd.f32 %v545, %v577
    %v610 = vadd.f32 %v546, %v578
    %v611 = vadd.f32 %v547, %v579
    %v612 = vadd.f32 %v548, %v580
    %v613 = vadd.f32 %v549, %v581
    %v614 = vadd.f32 %v550, %v582
    %v615 = vadd.f32 %v551, %v583
    %v616 = vadd.f32 %v552, %v584
    %v617 = vadd.f32 %v553, %v585
    %v618 = vadd.f32 %v554, %v586
    %v619 = vadd.f32 %v555, %v587
    %v620 = vadd.f32 %v556, %v588
    %v621 = vadd.f32 %v557, %v589
    %v622 = vadd.f32 %v558, %v590
    %v623 = vadd.f32 %v559, %v591
    %v624 = vadd.f32 %v560, %v592
    %v625 = vadd.f32 %v561, %v593
    %v626 = vadd.f32 %v562, %v594
    %v627 = vadd.f32 %v563, %v595
    %v628 = vadd.f32 %v564, %v596
    %v629 = vadd.f32 %v565, %v597
    %v630 = vpack.c.bf16 %v599, %v598
    %v631 = vpack.c.bf16 %v601, %v600
    %v632 = vpack.c.bf16 %v603, %v602
    %v633 = vpack.c.bf16 %v605, %v604
    %v634 = vpack.c.bf16 %v607, %v606
    %v635 = vpack.c.bf16 %v609, %v608
    %v636 = vpack.c.bf16 %v611, %v610
    %v637 = vpack.c.bf16 %v613, %v612
    %v638 = vpack.c.bf16 %v615, %v614
    %v639 = vpack.c.bf16 %v617, %v616
    %v640 = vpack.c.bf16 %v619, %v618
    %v641 = vpack.c.bf16 %v621, %v620
    %v642 = vpack.c.bf16 %v623, %v622
    %v643 = vpack.c.bf16 %v625, %v624
    %v644 = vpack.c.bf16 %v627, %v626
    %v645 = vpack.c.bf16 %v629, %v628
    %v646 = vld [vmem:[%s4] sm:$0xf]
    %v647 = vld [vmem:[%s4 + $0x4] sm:$0xf]
    %v648 = vld [vmem:[%s4 + $0x8] sm:$0xf]
    %v649 = vld [vmem:[%s4 + $0xc] sm:$0xf]
    %v650 = vld [vmem:[%s4 + $0x10] sm:$0xf]
    %v651 = vld [vmem:[%s4 + $0x14] sm:$0xf]
    %v652 = vld [vmem:[%s4 + $0x18] sm:$0xf]
    %v653 = vld [vmem:[%s4 + $0x1c] sm:$0xf]
    %v654 = vld [vmem:[%s4 + $0x20] sm:$0xf]
    %v655 = vld [vmem:[%s4 + $0x24] sm:$0xf]
    %v656 = vld [vmem:[%s4 + $0x28] sm:$0xf]
    %v657 = vld [vmem:[%s4 + $0x2c] sm:$0xf]
    %v658 = vld [vmem:[%s4 + $0x30] sm:$0xf]
    %v659 = vld [vmem:[%s4 + $0x34] sm:$0xf]
    %v660 = vld [vmem:[%s4 + $0x38] sm:$0xf]
    %v661 = vld [vmem:[%s4 + $0x3c] sm:$0xf]
    %v662 = vld [vmem:[%s5] sm:$0x1]
    %v664 = vlaneseq
    %v665 = vshrl.u32 %v664, 7
    %v666 = vsub.s32 0, %v665
    %v667 = vrot.slane %v662, %v666
    %v685 = vunpack.c.l.b16 %v646
    %v686 = vunpack.c.l.b16 %v647
    %v687 = vunpack.c.l.b16 %v648
    %v688 = vunpack.c.l.b16 %v649
    %v689 = vunpack.c.l.b16 %v650
    %v690 = vunpack.c.l.b16 %v651
    %v691 = vunpack.c.l.b16 %v652
    %v692 = vunpack.c.l.b16 %v653
    %v693 = vunpack.c.l.b16 %v654
    %v694 = vunpack.c.l.b16 %v655
    %v695 = vunpack.c.l.b16 %v656
    %v696 = vunpack.c.l.b16 %v657
    %v697 = vunpack.c.l.b16 %v658
    %v698 = vunpack.c.l.b16 %v659
    %v699 = vunpack.c.l.b16 %v660
    %v700 = vunpack.c.l.b16 %v661
    %v701 = vpack.c.b16 %v686, %v685
    %v702 = vpack.c.b16 %v688, %v687
    %v703 = vpack.c.b16 %v690, %v689
    %v704 = vpack.c.b16 %v692, %v691
    %v705 = vpack.c.b16 %v694, %v693
    %v706 = vpack.c.b16 %v696, %v695
    %v707 = vpack.c.b16 %v698, %v697
    %v708 = vpack.c.b16 %v700, %v699
    %717 = vmatprep.subr.bf16.mxu0 0
    %718 = vmatpush1.bf16.msra.mxu0 %v701
    %719 = vmatprep.subr.bf16.mxu0 0
    %720 = vmatpush1.bf16.msra.mxu0 %v702
    %721 = vmatprep.subr.bf16.mxu0 0
    %722 = vmatpush1.bf16.msra.mxu0 %v703
    %723 = vmatprep.subr.bf16.mxu0 0
    %724 = vmatpush1.bf16.msra.mxu0 %v704
    %725 = vmatprep.subr.bf16.mxu0 0
    %726 = vmatpush1.bf16.msra.mxu0 %v705
    %727 = vmatprep.subr.bf16.mxu0 0
    %728 = vmatpush1.bf16.msra.mxu0 %v706
    %729 = vmatprep.subr.bf16.mxu0 0
    %730 = vmatpush1.bf16.msra.mxu0 %v707
    %731 = vmatprep.subr.bf16.mxu0 0
    %732 = vmatpush1.bf16.msra.mxu0 %v708
    %733 = vmatprep.subr.bf16.mxu0 0
    %734 = vmatpush1.bf16.msra.mxu0 0
    %735 = vmatprep.subr.bf16.mxu0 0
    %736 = vmatpush1.bf16.msra.mxu0 0
    %737 = vmatprep.subr.bf16.mxu0 0
    %738 = vmatpush1.bf16.msra.mxu0 0
    %739 = vmatprep.subr.bf16.mxu0 0
    %740 = vmatpush1.bf16.msra.mxu0 0
    %741 = vmatprep.subr.bf16.mxu0 0
    %742 = vmatpush1.bf16.msra.mxu0 0
    %743 = vmatprep.subr.bf16.mxu0 0
    %744 = vmatpush1.bf16.msra.mxu0 0
    %745 = vmatprep.subr.bf16.mxu0 0
    %746 = vmatpush1.bf16.msra.mxu0 0
    %747 = vmatprep.subr.bf16.mxu0 0
    %748 = vmatpush1.bf16.msra.mxu0 0
    %749 = vmatprep.mubr.bf16.mxu0 0
    %750 = vmatmul.mubr.bf16.gmra.mrb[0].mxu0 %v630
    %v751 = vpop.f32.mrb[0].mxu0
    %v752 = vadd.f32 %v667, %v751
    %v753 = vpop.f32.mrb[0].mxu0
    %v754 = vpop.f32.mrb[0].mxu0
    %v755 = vadd.f32 %v667, %v754
    %v756 = vpop.f32.mrb[0].mxu0
    %757 = vmatprep.mubr.bf16.mxu0 0
    %758 = vmatmul.mubr.bf16.gmra.mrb[0].mxu0 %v631
    %v759 = vpop.f32.mrb[0].mxu0
    %v760 = vadd.f32 %v667, %v759
    %v761 = vpop.f32.mrb[0].mxu0
    %v762 = vpop.f32.mrb[0].mxu0
    %v763 = vadd.f32 %v667, %v762
    %v764 = vpop.f32.mrb[0].mxu0
    %765 = vmatprep.mubr.bf16.mxu0 0
    %766 = vmatmul.mubr.bf16.gmra.mrb[0].mxu0 %v632
    %v767 = vpop.f32.mrb[0].mxu0
    %v768 = vadd.f32 %v667, %v767
    %v769 = vpop.f32.mrb[0].mxu0
    %v770 = vpop.f32.mrb[0].mxu0
    %v771 = vadd.f32 %v667, %v770
    %v772 = vpop.f32.mrb[0].mxu0
    %773 = vmatprep.mubr.bf16.mxu0 0
    %774 = vmatmul.mubr.bf16.gmra.mrb[0].mxu0 %v633
    %v775 = vpop.f32.mrb[0].mxu0
    %v776 = vadd.f32 %v667, %v775
    %v777 = vpop.f32.mrb[0].mxu0
    %v778 = vpop.f32.mrb[0].mxu0
    %v779 = vadd.f32 %v667, %v778
    %v780 = vpop.f32.mrb[0].mxu0
    %781 = vmatprep.mubr.bf16.mxu0 0
    %782 = vmatmul.mubr.bf16.gmra.mrb[0].mxu0 %v634
    %v783 = vpop.f32.mrb[0].mxu0
    %v784 = vadd.f32 %v667, %v783
    %v785 = vpop.f32.mrb[0].mxu0
    %v786 = vpop.f32.mrb[0].mxu0
    %v787 = vadd.f32 %v667, %v786
    %v788 = vpop.f32.mrb[0].mxu0
    %789 = vmatprep.mubr.bf16.mxu0 0
    %790 = vmatmul.mubr.bf16.gmra.mrb[0].mxu0 %v635
    %v791 = vpop.f32.mrb[0].mxu0
    %v792 = vadd.f32 %v667, %v791
    %v793 = vpop.f32.mrb[0].mxu0
    %v794 = vpop.f32.mrb[0].mxu0
    %v795 = vadd.f32 %v667, %v794
    %v796 = vpop.f32.mrb[0].mxu0
    %797 = vmatprep.mubr.bf16.mxu0 0
    %798 = vmatmul.mubr.bf16.gmra.mrb[0].mxu0 %v636
    %v799 = vpop.f32.mrb[0].mxu0
    %v800 = vadd.f32 %v667, %v799
    %v801 = vpop.f32.mrb[0].mxu0
    %v802 = vpop.f32.mrb[0].mxu0
    %v803 = vadd.f32 %v667, %v802
    %v804 = vpop.f32.mrb[0].mxu0
    %805 = vmatprep.mubr.bf16.mxu0 0
    %806 = vmatmul.mubr.bf16.gmra.mrb[0].mxu0 %v637
    %v807 = vpop.f32.mrb[0].mxu0
    %v808 = vadd.f32 %v667, %v807
    %v809 = vpop.f32.mrb[0].mxu0
    %v810 = vpop.f32.mrb[0].mxu0
    %v811 = vadd.f32 %v667, %v810
    %v812 = vpop.f32.mrb[0].mxu0
    %813 = vmatprep.mubr.bf16.mxu0 0
    %814 = vmatmul.mubr.bf16.gmra.mrb[0].mxu0 %v638
    %v815 = vpop.f32.mrb[0].mxu0
    %v816 = vadd.f32 %v667, %v815
    %v817 = vpop.f32.mrb[0].mxu0
    %v818 = vpop.f32.mrb[0].mxu0
    %v819 = vadd.f32 %v667, %v818
    %v820 = vpop.f32.mrb[0].mxu0
    %821 = vmatprep.mubr.bf16.mxu0 0
    %822 = vmatmul.mubr.bf16.gmra.mrb[0].mxu0 %v639
    %v823 = vpop.f32.mrb[0].mxu0
    %v824 = vadd.f32 %v667, %v823
    %v825 = vpop.f32.mrb[0].mxu0
    %v826 = vpop.f32.mrb[0].mxu0
    %v827 = vadd.f32 %v667, %v826
    %v828 = vpop.f32.mrb[0].mxu0
    %829 = vmatprep.mubr.bf16.mxu0 0
    %830 = vmatmul.mubr.bf16.gmra.mrb[0].mxu0 %v640
    %v831 = vpop.f32.mrb[0].mxu0
    %v832 = vadd.f32 %v667, %v831
    %v833 = vpop.f32.mrb[0].mxu0
    %v834 = vpop.f32.mrb[0].mxu0
    %v835 = vadd.f32 %v667, %v834
    %v836 = vpop.f32.mrb[0].mxu0
    %837 = vmatprep.mubr.bf16.mxu0 0
    %838 = vmatmul.mubr.bf16.gmra.mrb[0].mxu0 %v641
    %v839 = vpop.f32.mrb[0].mxu0
    %v840 = vadd.f32 %v667, %v839
    %v841 = vpop.f32.mrb[0].mxu0
    %v842 = vpop.f32.mrb[0].mxu0
    %v843 = vadd.f32 %v667, %v842
    %v844 = vpop.f32.mrb[0].mxu0
    %845 = vmatprep.mubr.bf16.mxu0 0
    %846 = vmatmul.mubr.bf16.gmra.mrb[0].mxu0 %v642
    %v847 = vpop.f32.mrb[0].mxu0
    %v848 = vadd.f32 %v667, %v847
    %v849 = vpop.f32.mrb[0].mxu0
    %v850 = vpop.f32.mrb[0].mxu0
    %v851 = vadd.f32 %v667, %v850
    %v852 = vpop.f32.mrb[0].mxu0
    %853 = vmatprep.mubr.bf16.mxu0 0
    %854 = vmatmul.mubr.bf16.gmra.mrb[0].mxu0 %v643
    %v855 = vpop.f32.mrb[0].mxu0
    %v856 = vadd.f32 %v667, %v855
    %v857 = vpop.f32.mrb[0].mxu0
    %v858 = vpop.f32.mrb[0].mxu0
    %v859 = vadd.f32 %v667, %v858
    %v860 = vpop.f32.mrb[0].mxu0
    %861 = vmatprep.mubr.bf16.mxu0 0
    %862 = vmatmul.mubr.bf16.gmra.mrb[0].mxu0 %v644
    %v863 = vpop.f32.mrb[0].mxu0
    %v864 = vadd.f32 %v667, %v863
    %v865 = vpop.f32.mrb[0].mxu0
    %v866 = vpop.f32.mrb[0].mxu0
    %v867 = vadd.f32 %v667, %v866
    %v868 = vpop.f32.mrb[0].mxu0
    %869 = vmatprep.mubr.bf16.mxu0 0
    %870 = vmatmul.mubr.bf16.gmra.mrb[0].mxu0 %v645
    %v871 = vpop.f32.mrb[0].mxu0
    %v872 = vadd.f32 %v667, %v871
    %v873 = vpop.f32.mrb[0].mxu0
    %v874 = vpop.f32.mrb[0].mxu0
    %v875 = vadd.f32 %v667, %v874
    %v876 = vpop.f32.mrb[0].mxu0
    %877 = vdwg.mxu0
    %v878 = vpack.c.bf16 %v755, %v752
    %v879 = vpack.c.bf16 %v763, %v760
    %v880 = vpack.c.bf16 %v771, %v768
    %v881 = vpack.c.bf16 %v779, %v776
    %v882 = vpack.c.bf16 %v787, %v784
    %v883 = vpack.c.bf16 %v795, %v792
    %v884 = vpack.c.bf16 %v803, %v800
    %v885 = vpack.c.bf16 %v811, %v808
    %v886 = vpack.c.bf16 %v819, %v816
    %v887 = vpack.c.bf16 %v827, %v824
    %v888 = vpack.c.bf16 %v835, %v832
    %v889 = vpack.c.bf16 %v843, %v840
    %v890 = vpack.c.bf16 %v851, %v848
    %v891 = vpack.c.bf16 %v859, %v856
    %v892 = vpack.c.bf16 %v867, %v864
    %v893 = vpack.c.bf16 %v875, %v872
    %v910 = vunpack.c.l.b16 %v878
    %v911 = vunpack.c.h.b16 %v878
    %v912 = vunpack.c.l.b16 %v879
    %v913 = vunpack.c.h.b16 %v879
    %v914 = vunpack.c.l.b16 %v880
    %v915 = vunpack.c.h.b16 %v880
    %v916 = vunpack.c.l.b16 %v881
    %v917 = vunpack.c.h.b16 %v881
    %v918 = vunpack.c.l.b16 %v882
    %v919 = vunpack.c.h.b16 %v882
    %v920 = vunpack.c.l.b16 %v883
    %v921 = vunpack.c.h.b16 %v883
    %v922 = vunpack.c.l.b16 %v884
    %v923 = vunpack.c.h.b16 %v884
    %v924 = vunpack.c.l.b16 %v885
    %v925 = vunpack.c.h.b16 %v885
    %v926 = vunpack.c.l.b16 %v886
    %v927 = vunpack.c.h.b16 %v886
    %v928 = vunpack.c.l.b16 %v887
    %v929 = vunpack.c.h.b16 %v887
    %v930 = vunpack.c.l.b16 %v888
    %v931 = vunpack.c.h.b16 %v888
    %v932 = vunpack.c.l.b16 %v889
    %v933 = vunpack.c.h.b16 %v889
    %v934 = vunpack.c.l.b16 %v890
    %v935 = vunpack.c.h.b16 %v890
    %v936 = vunpack.c.l.b16 %v891
    %v937 = vunpack.c.h.b16 %v891
    %v938 = vunpack.c.l.b16 %v892
    %v939 = vunpack.c.h.b16 %v892
    %v940 = vunpack.c.l.b16 %v893
    %v941 = vunpack.c.h.b16 %v893
    %v942 = vpack.c.b16 %v910, %v910
    %v943 = vpack.c.b16 %v911, %v911
    %v944 = vpack.c.b16 %v912, %v912
    %v945 = vpack.c.b16 %v913, %v913
    %v946 = vpack.c.b16 %v914, %v914
    %v947 = vpack.c.b16 %v915, %v915
    %v948 = vpack.c.b16 %v916, %v916
    %v949 = vpack.c.b16 %v917, %v917
    %v950 = vpack.c.b16 %v918, %v918
    %v951 = vpack.c.b16 %v919, %v919
    %v952 = vpack.c.b16 %v920, %v920
    %v953 = vpack.c.b16 %v921, %v921
    %v954 = vpack.c.b16 %v922, %v922
    %v955 = vpack.c.b16 %v923, %v923
    %v956 = vpack.c.b16 %v924, %v924
    %v957 = vpack.c.b16 %v925, %v925
    %v958 = vpack.c.b16 %v926, %v926
    %v959 = vpack.c.b16 %v927, %v927
    %v960 = vpack.c.b16 %v928, %v928
    %v961 = vpack.c.b16 %v929, %v929
    %v962 = vpack.c.b16 %v930, %v930
    %v963 = vpack.c.b16 %v931, %v931
    %v964 = vpack.c.b16 %v932, %v932
    %v965 = vpack.c.b16 %v933, %v933
    %v966 = vpack.c.b16 %v934, %v934
    %v967 = vpack.c.b16 %v935, %v935
    %v968 = vpack.c.b16 %v936, %v936
    %v969 = vpack.c.b16 %v937, %v937
    %v970 = vpack.c.b16 %v938, %v938
    %v971 = vpack.c.b16 %v939, %v939
    %v972 = vpack.c.b16 %v940, %v940
    %v973 = vpack.c.b16 %v941, %v941
    %1006 = vst [vmem:[%s6] sm:$0xf] %v942
    %1007 = vst [vmem:[%s6 + $0x4] sm:$0xf] %v943
    %1008 = vst [vmem:[%s6 + $0x8] sm:$0xf] %v944
    %1009 = vst [vmem:[%s6 + $0xc] sm:$0xf] %v945
    %1010 = vst [vmem:[%s6 + $0x10] sm:$0xf] %v946
    %1011 = vst [vmem:[%s6 + $0x14] sm:$0xf] %v947
    %1012 = vst [vmem:[%s6 + $0x18] sm:$0xf] %v948
    %1013 = vst [vmem:[%s6 + $0x1c] sm:$0xf] %v949
    %1014 = vst [vmem:[%s6 + $0x20] sm:$0xf] %v950
    %1015 = vst [vmem:[%s6 + $0x24] sm:$0xf] %v951
    %1016 = vst [vmem:[%s6 + $0x28] sm:$0xf] %v952
    %1017 = vst [vmem:[%s6 + $0x2c] sm:$0xf] %v953
    %1018 = vst [vmem:[%s6 + $0x30] sm:$0xf] %v954
    %1019 = vst [vmem:[%s6 + $0x34] sm:$0xf] %v955
    %1020 = vst [vmem:[%s6 + $0x38] sm:$0xf] %v956
    %1021 = vst [vmem:[%s6 + $0x3c] sm:$0xf] %v957
    %1022 = vst [vmem:[%s6 + $0x40] sm:$0xf] %v958
    %1023 = vst [vmem:[%s6 + $0x44] sm:$0xf] %v959
    %1024 = vst [vmem:[%s6 + $0x48] sm:$0xf] %v960
    %1025 = vst [vmem:[%s6 + $0x4c] sm:$0xf] %v961
    %1026 = vst [vmem:[%s6 + $0x50] sm:$0xf] %v962
    %1027 = vst [vmem:[%s6 + $0x54] sm:$0xf] %v963
    %1028 = vst [vmem:[%s6 + $0x58] sm:$0xf] %v964
    %1029 = vst [vmem:[%s6 + $0x5c] sm:$0xf] %v965
    %1030 = vst [vmem:[%s6 + $0x60] sm:$0xf] %v966
    %1031 = vst [vmem:[%s6 + $0x64] sm:$0xf] %v967
    %1032 = vst [vmem:[%s6 + $0x68] sm:$0xf] %v968
    %1033 = vst [vmem:[%s6 + $0x6c] sm:$0xf] %v969
    %1034 = vst [vmem:[%s6 + $0x70] sm:$0xf] %v970
    %1035 = vst [vmem:[%s6 + $0x74] sm:$0xf] %v971
    %1036 = vst [vmem:[%s6 + $0x78] sm:$0xf] %v972
    %1037 = vst [vmem:[%s6 + $0x7c] sm:$0xf] %v973
  $region33: #{predictor_unisage_forward.12} parent=0 // pred_fallthru
    _
  // Predicated region
  $region34: #{predictor_unisage_forward.12} parent=0 // pred_check
    _
  $region35: #{predictor_unisage_forward.12} parent=0 // pred_check_branch
    %1039 = sbr.rel (0) target = $region37
  $region36: #{predictor_unisage_forward.12} parent=0 // pred_region
    _
  $region37: #{predictor_unisage_forward.12} parent=0 // pred_fallthru
    _
  // Predicated region
  $region38: #{predictor_unisage_forward.12} parent=0 // pred_check
    _
  $region39: #{predictor_unisage_forward.12} parent=0 // pred_check_branch
    %1041 = sbr.rel (0) target = $region41
  $region40: #{predictor_unisage_forward.12} parent=0 // pred_region
    _
  $region41: #{predictor_unisage_forward.12} parent=0 // pred_fallthru
    _

// kernel: predictor_unisage_forward.10
$region0: #{predictor_unisage_forward.10}
  #allocation0 [shape = 'u32[]', space=smem, size = 0x4, offset = 0x4, fixed_abs, tag = 'smem constant byte address 0x4 - core index']
  #allocation1 [shape = 'u32[144,128]{1,0:T(1,128)}', space=vmem, size = 0x12000, scoped, tag = 'internal scratch']
  #allocation2 [shape = 'f32[256,128]{1,0:T(8,128)}', space=vmem, size = 0x20000, scoped, tag = 'scratch operand']
  #allocation3 [shape = 'f32[1]{0:T(128)S(6)}', space=smem, size = 0x200, scoped, tag = 'scoped memory for predictor_unisage_forward.10']
  %s0 = inlined_call_operand.<no memory space> [shape: f32[1], index: 0, kind: input, shape index: {}]
  %s1 = inlined_call_operand.vmem [shape: bf16[256,128], index: 1, kind: input, shape index: {}]
  %s2 = inlined_call_operand.vmem [shape: s8[256,256], index: 2, kind: input, shape index: {}]
  %s3 = inlined_call_operand.vmem [shape: bf16[256,128], index: 3, kind: input, shape index: {}]
  %s4 = inlined_call_operand.vmem [shape: bf16[128,128], index: 4, kind: input, shape index: {}]
  %s5 = inlined_call_operand.vmem [shape: f32[1,128], index: 5, kind: input, shape index: {}]
  %s6 = inlined_call_operand.vmem [shape: bf16[256,128], index: 6, kind: output, shape index: {}]
  %s7 = sld [smem:[#allocation0]]
  $region42: #{predictor_unisage_forward.10} parent=0
    _
  %s9 = ssub.s32 1, %s7
  %s10 = scalar_select 0, %s9, %s7
  %11 = sst [smem:[#allocation3]] %s0
  // Predicated region
  $region2: #{predictor_unisage_forward.10} parent=0 // pred_check
    _
  $region3: #{predictor_unisage_forward.10} parent=0 // pred_check_branch
    %13 = sbr.rel (0) target = $region5
  $region4: #{predictor_unisage_forward.10} parent=0 // pred_region
    _
  $region5: #{predictor_unisage_forward.10} parent=0 // pred_fallthru
    _
  // Predicated region
  $region6: #{predictor_unisage_forward.10} parent=0 // pred_check
    _
  $region7: #{predictor_unisage_forward.10} parent=0 // pred_check_branch
    %15 = sbr.rel (0) target = $region9
  $region8: #{predictor_unisage_forward.10} parent=0 // pred_region
    _
  $region9: #{predictor_unisage_forward.10} parent=0 // pred_fallthru
    _
  // Predicated region
  $region10: #{predictor_unisage_forward.10} parent=0 // pred_check
    _
  $region11: #{predictor_unisage_forward.10} parent=0 // pred_check_branch
    %17 = sbr.rel (0) target = $region13
  $region12: #{predictor_unisage_forward.10} parent=0 // pred_region
    _
  $region13: #{predictor_unisage_forward.10} parent=0 // pred_fallthru
    _
  // Predicated region
  $region14: #{predictor_unisage_forward.10} parent=0 // pred_check
    _
  $region15: #{predictor_unisage_forward.10} parent=0 // pred_check_branch
    %19 = sbr.rel (0) target = $region17
  $region16: #{predictor_unisage_forward.10} parent=0 // pred_region
    _
  $region17: #{predictor_unisage_forward.10} parent=0 // pred_fallthru
    _
  // Predicated region
  $region18: #{predictor_unisage_forward.10} parent=0 // pred_check
    _
  $region19: #{predictor_unisage_forward.10} parent=0 // pred_check_branch
    %21 = sbr.rel (0) target = $region21
  $region20: #{predictor_unisage_forward.10} parent=0 // pred_region
    _
  $region21: #{predictor_unisage_forward.10} parent=0 // pred_fallthru
    _
  // Predicated region
  $region22: #{predictor_unisage_forward.10} parent=0 // pred_check
    _
  $region23: #{predictor_unisage_forward.10} parent=0 // pred_check_branch
    %23 = sbr.rel (0) target = $region25
  $region24: #{predictor_unisage_forward.10} parent=0 // pred_region
    _
  $region25: #{predictor_unisage_forward.10} parent=0 // pred_fallthru
    _
  %p25 = scmp.eq.s32.totalorder 0, 0
  // Predicated region
  $region26: #{predictor_unisage_forward.10} parent=0 // pred_check
    %p26 = pneg %p25
  $region27: #{predictor_unisage_forward.10} parent=0 // pred_check_branch
    %28 = sbr.rel (%p26) target = $region29
  $region28: #{predictor_unisage_forward.10} parent=0 // pred_region
    %29 = vst [vmem:[#allocation2] sm:$0xff] 0.0
    %30 = vst [vmem:[#allocation2 + $0x8] sm:$0xff] 0.0
    %31 = vst [vmem:[#allocation2 + $0x10] sm:$0xff] 0.0
    %32 = vst [vmem:[#allocation2 + $0x18] sm:$0xff] 0.0
    %33 = vst [vmem:[#allocation2 + $0x20] sm:$0xff] 0.0
    %34 = vst [vmem:[#allocation2 + $0x28] sm:$0xff] 0.0
    %35 = vst [vmem:[#allocation2 + $0x30] sm:$0xff] 0.0
    %36 = vst [vmem:[#allocation2 + $0x38] sm:$0xff] 0.0
    %37 = vst [vmem:[#allocation2 + $0x40] sm:$0xff] 0.0
    %38 = vst [vmem:[#allocation2 + $0x48] sm:$0xff] 0.0
    %39 = vst [vmem:[#allocation2 + $0x50] sm:$0xff] 0.0
    %40 = vst [vmem:[#allocation2 + $0x58] sm:$0xff] 0.0
    %41 = vst [vmem:[#allocation2 + $0x60] sm:$0xff] 0.0
    %42 = vst [vmem:[#allocation2 + $0x68] sm:$0xff] 0.0
    %43 = vst [vmem:[#allocation2 + $0x70] sm:$0xff] 0.0
    %44 = vst [vmem:[#allocation2 + $0x78] sm:$0xff] 0.0
    %45 = vst [vmem:[#allocation2 + $0x80] sm:$0xff] 0.0
    %46 = vst [vmem:[#allocation2 + $0x88] sm:$0xff] 0.0
    %47 = vst [vmem:[#allocation2 + $0x90] sm:$0xff] 0.0
    %48 = vst [vmem:[#allocation2 + $0x98] sm:$0xff] 0.0
    %49 = vst [vmem:[#allocation2 + $0xa0] sm:$0xff] 0.0
    %50 = vst [vmem:[#allocation2 + $0xa8] sm:$0xff] 0.0
    %51 = vst [vmem:[#allocation2 + $0xb0] sm:$0xff] 0.0
    %52 = vst [vmem:[#allocation2 + $0xb8] sm:$0xff] 0.0
    %53 = vst [vmem:[#allocation2 + $0xc0] sm:$0xff] 0.0
    %54 = vst [vmem:[#allocation2 + $0xc8] sm:$0xff] 0.0
    %55 = vst [vmem:[#allocation2 + $0xd0] sm:$0xff] 0.0
    %56 = vst [vmem:[#allocation2 + $0xd8] sm:$0xff] 0.0
    %57 = vst [vmem:[#allocation2 + $0xe0] sm:$0xff] 0.0
    %58 = vst [vmem:[#allocation2 + $0xe8] sm:$0xff] 0.0
    %59 = vst [vmem:[#allocation2 + $0xf0] sm:$0xff] 0.0
    %60 = vst [vmem:[#allocation2 + $0xf8] sm:$0xff] 0.0
  $region29: #{predictor_unisage_forward.10} parent=0 // pred_fallthru
    _
  %v61 = vld [vmem:[%s2] sm:$0xff]
  %v62 = vld [vmem:[%s2 + $0x8] sm:$0xff]
  %v63 = vld [vmem:[%s2 + $0x10] sm:$0xff]
  %v64 = vld [vmem:[%s2 + $0x18] sm:$0xff]
  %v65 = vld [vmem:[%s2 + $0x20] sm:$0xff]
  %v66 = vld [vmem:[%s2 + $0x28] sm:$0xff]
  %v67 = vld [vmem:[%s2 + $0x30] sm:$0xff]
  %v68 = vld [vmem:[%s2 + $0x38] sm:$0xff]
  %v69 = vld [vmem:[%s2 + $0x40] sm:$0xff]
  %v70 = vld [vmem:[%s2 + $0x48] sm:$0xff]
  %v71 = vld [vmem:[%s2 + $0x50] sm:$0xff]
  %v72 = vld [vmem:[%s2 + $0x58] sm:$0xff]
  %v73 = vld [vmem:[%s2 + $0x60] sm:$0xff]
  %v74 = vld [vmem:[%s2 + $0x68] sm:$0xff]
  %v75 = vld [vmem:[%s2 + $0x70] sm:$0xff]
  %v76 = vld [vmem:[%s2 + $0x78] sm:$0xff]
  %v77 = vunpack.c.l.s8.bf16 %v61
  %v78 = vunpack.c.l.s8.bf16 %v62
  %v79 = vunpack.c.h.s8.bf16 %v61
  %v80 = vunpack.c.h.s8.bf16 %v62
  %v81 = vunpack.c.l.s8.bf16 %v63
  %v82 = vunpack.c.l.s8.bf16 %v64
  %v83 = vunpack.c.h.s8.bf16 %v63
  %v84 = vunpack.c.h.s8.bf16 %v64
  %v85 = vunpack.c.l.s8.bf16 %v65
  %v86 = vunpack.c.l.s8.bf16 %v66
  %v87 = vunpack.c.h.s8.bf16 %v65
  %v88 = vunpack.c.h.s8.bf16 %v66
  %v89 = vunpack.c.l.s8.bf16 %v67
  %v90 = vunpack.c.l.s8.bf16 %v68
  %v91 = vunpack.c.h.s8.bf16 %v67
  %v92 = vunpack.c.h.s8.bf16 %v68
  %v93 = vunpack.c.l.s8.bf16 %v69
  %v94 = vunpack.c.l.s8.bf16 %v70
  %v95 = vunpack.c.h.s8.bf16 %v69
  %v96 = vunpack.c.h.s8.bf16 %v70
  %v97 = vunpack.c.l.s8.bf16 %v71
  %v98 = vunpack.c.l.s8.bf16 %v72
  %v99 = vunpack.c.h.s8.bf16 %v71
  %v100 = vunpack.c.h.s8.bf16 %v72
  %v101 = vunpack.c.l.s8.bf16 %v73
  %v102 = vunpack.c.l.s8.bf16 %v74
  %v103 = vunpack.c.h.s8.bf16 %v73
  %v104 = vunpack.c.h.s8.bf16 %v74
  %v105 = vunpack.c.l.s8.bf16 %v75
  %v106 = vunpack.c.l.s8.bf16 %v76
  %v107 = vunpack.c.h.s8.bf16 %v75
  %v108 = vunpack.c.h.s8.bf16 %v76
  %s109 = smul.u32 0, 256
  %s110 = sshra.s32 %s109, 3
  %s111 = sand.u32 %s109, 7
  %s112 = smul.addr %s110, 4
  %s113 = scalar_lea.vmem %s3, %s112
  %v114 = vld [vmem:[%s113] sm:$0xf]
  %v115 = vld [vmem:[%s113 + $0x4] sm:$0xf]
  %v116 = vld [vmem:[%s113 + $0x8] sm:$0xf]
  %v117 = vld [vmem:[%s113 + $0xc] sm:$0xf]
  %v118 = vld [vmem:[%s113 + $0x10] sm:$0xf]
  %v119 = vld [vmem:[%s113 + $0x14] sm:$0xf]
  %v120 = vld [vmem:[%s113 + $0x18] sm:$0xf]
  %v121 = vld [vmem:[%s113 + $0x1c] sm:$0xf]
  %v122 = vld [vmem:[%s113 + $0x20] sm:$0xf]
  %v123 = vld [vmem:[%s113 + $0x24] sm:$0xf]
  %v124 = vld [vmem:[%s113 + $0x28] sm:$0xf]
  %v125 = vld [vmem:[%s113 + $0x2c] sm:$0xf]
  %v126 = vld [vmem:[%s113 + $0x30] sm:$0xf]
  %v127 = vld [vmem:[%s113 + $0x34] sm:$0xf]
  %v128 = vld [vmem:[%s113 + $0x38] sm:$0xf]
  %v129 = vld [vmem:[%s113 + $0x3c] sm:$0xf]
  %v130 = vld [vmem:[%s113 + $0x40] sm:$0xf]
  %v131 = vld [vmem:[%s113 + $0x44] sm:$0xf]
  %v132 = vld [vmem:[%s113 + $0x48] sm:$0xf]
  %v133 = vld [vmem:[%s113 + $0x4c] sm:$0xf]
  %v134 = vld [vmem:[%s113 + $0x50] sm:$0xf]
  %v135 = vld [vmem:[%s113 + $0x54] sm:$0xf]
  %v136 = vld [vmem:[%s113 + $0x58] sm:$0xf]
  %v137 = vld [vmem:[%s113 + $0x5c] sm:$0xf]
  %v138 = vld [vmem:[%s113 + $0x60] sm:$0xf]
  %v139 = vld [vmem:[%s113 + $0x64] sm:$0xf]
  %v140 = vld [vmem:[%s113 + $0x68] sm:$0xf]
  %v141 = vld [vmem:[%s113 + $0x6c] sm:$0xf]
  %v142 = vld [vmem:[%s113 + $0x70] sm:$0xf]
  %v143 = vld [vmem:[%s113 + $0x74] sm:$0xf]
  %v144 = vld [vmem:[%s113 + $0x78] sm:$0xf]
  %v145 = vld [vmem:[%s113 + $0x7c] sm:$0xf]
  %v146 = vld [vmem:[#allocation2] sm:$0xff]
  %v147 = vld [vmem:[#allocation2 + $0x8] sm:$0xff]
  %v148 = vld [vmem:[#allocation2 + $0x10] sm:$0xff]
  %v149 = vld [vmem:[#allocation2 + $0x18] sm:$0xff]
  %v150 = vld [vmem:[#allocation2 + $0x20] sm:$0xff]
  %v151 = vld [vmem:[#allocation2 + $0x28] sm:$0xff]
  %v152 = vld [vmem:[#allocation2 + $0x30] sm:$0xff]
  %v153 = vld [vmem:[#allocation2 + $0x38] sm:$0xff]
  %v154 = vld [vmem:[#allocation2 + $0x40] sm:$0xff]
  %v155 = vld [vmem:[#allocation2 + $0x48] sm:$0xff]
  %v156 = vld [vmem:[#allocation2 + $0x50] sm:$0xff]
  %v157 = vld [vmem:[#allocation2 + $0x58] sm:$0xff]
  %v158 = vld [vmem:[#allocation2 + $0x60] sm:$0xff]
  %v159 = vld [vmem:[#allocation2 + $0x68] sm:$0xff]
  %v160 = vld [vmem:[#allocation2 + $0x70] sm:$0xff]
  %v161 = vld [vmem:[#allocation2 + $0x78] sm:$0xff]
  %v162 = vld [vmem:[#allocation2 + $0x80] sm:$0xff]
  %v163 = vld [vmem:[#allocation2 + $0x88] sm:$0xff]
  %v164 = vld [vmem:[#allocation2 + $0x90] sm:$0xff]
  %v165 = vld [vmem:[#allocation2 + $0x98] sm:$0xff]
  %v166 = vld [vmem:[#allocation2 + $0xa0] sm:$0xff]
  %v167 = vld [vmem:[#allocation2 + $0xa8] sm:$0xff]
  %v168 = vld [vmem:[#allocation2 + $0xb0] sm:$0xff]
  %v169 = vld [vmem:[#allocation2 + $0xb8] sm:$0xff]
  %v170 = vld [vmem:[#allocation2 + $0xc0] sm:$0xff]
  %v171 = vld [vmem:[#allocation2 + $0xc8] sm:$0xff]
  %v172 = vld [vmem:[#allocation2 + $0xd0] sm:$0xff]
  %v173 = vld [vmem:[#allocation2 + $0xd8] sm:$0xff]
  %v174 = vld [vmem:[#allocation2 + $0xe0] sm:$0xff]
  %v175 = vld [vmem:[#allocation2 + $0xe8] sm:$0xff]
  %v176 = vld [vmem:[#allocation2 + $0xf0] sm:$0xff]
  %v177 = vld [vmem:[#allocation2 + $0xf8] sm:$0xff]
  %v210 = vunpack.c.l.b16 %v114
  %v211 = vunpack.c.l.b16 %v115
  %v212 = vunpack.c.l.b16 %v116
  %v213 = vunpack.c.l.b16 %v117
  %v214 = vunpack.c.l.b16 %v118
  %v215 = vunpack.c.l.b16 %v119
  %v216 = vunpack.c.l.b16 %v120
  %v217 = vunpack.c.l.b16 %v121
  %v218 = vunpack.c.l.b16 %v122
  %v219 = vunpack.c.l.b16 %v123
  %v220 = vunpack.c.l.b16 %v124
  %v221 = vunpack.c.l.b16 %v125
  %v222 = vunpack.c.l.b16 %v126
  %v223 = vunpack.c.l.b16 %v127
  %v224 = vunpack.c.l.b16 %v128
  %v225 = vunpack.c.l.b16 %v129
  %v226 = vunpack.c.l.b16 %v130
  %v227 = vunpack.c.l.b16 %v131
  %v228 = vunpack.c.l.b16 %v132
  %v229 = vunpack.c.l.b16 %v133
  %v230 = vunpack.c.l.b16 %v134
  %v231 = vunpack.c.l.b16 %v135
  %v232 = vunpack.c.l.b16 %v136
  %v233 = vunpack.c.l.b16 %v137
  %v234 = vunpack.c.l.b16 %v138
  %v235 = vunpack.c.l.b16 %v139
  %v236 = vunpack.c.l.b16 %v140
  %v237 = vunpack.c.l.b16 %v141
  %v238 = vunpack.c.l.b16 %v142
  %v239 = vunpack.c.l.b16 %v143
  %v240 = vunpack.c.l.b16 %v144
  %v241 = vunpack.c.l.b16 %v145
  %v242 = vpack.c.b16 %v211, %v210
  %v243 = vpack.c.b16 %v213, %v212
  %v244 = vpack.c.b16 %v215, %v214
  %v245 = vpack.c.b16 %v217, %v216
  %v246 = vpack.c.b16 %v219, %v218
  %v247 = vpack.c.b16 %v221, %v220
  %v248 = vpack.c.b16 %v223, %v222
  %v249 = vpack.c.b16 %v225, %v224
  %v250 = vpack.c.b16 %v227, %v226
  %v251 = vpack.c.b16 %v229, %v228
  %v252 = vpack.c.b16 %v231, %v230
  %v253 = vpack.c.b16 %v233, %v232
  %v254 = vpack.c.b16 %v235, %v234
  %v255 = vpack.c.b16 %v237, %v236
  %v256 = vpack.c.b16 %v239, %v238
  %v257 = vpack.c.b16 %v241, %v240
  %274 = vmatprep.subr.bf16.mxu0 0
  %275 = vmatpush1.bf16.msra.mxu0 %v242
  %276 = vmatprep.subr.bf16.mxu0 0
  %277 = vmatpush1.bf16.msra.mxu0 %v243
  %278 = vmatprep.subr.bf16.mxu0 0
  %279 = vmatpush1.bf16.msra.mxu0 %v244
  %280 = vmatprep.subr.bf16.mxu0 0
  %281 = vmatpush1.bf16.msra.mxu0 %v245
  %282 = vmatprep.subr.bf16.mxu0 0
  %283 = vmatpush1.bf16.msra.mxu0 %v246
  %284 = vmatprep.subr.bf16.mxu0 0
  %285 = vmatpush1.bf16.msra.mxu0 %v247
  %286 = vmatprep.subr.bf16.mxu0 0
  %287 = vmatpush1.bf16.msra.mxu0 %v248
  %288 = vmatprep.subr.bf16.mxu0 0
  %289 = vmatpush1.bf16.msra.mxu0 %v249
  %290 = vmatprep.subr.bf16.mxu0 0
  %291 = vmatpush1.bf16.msra.mxu0 %v250
  %292 = vmatprep.subr.bf16.mxu0 0
  %293 = vmatpush1.bf16.msra.mxu0 %v251
  %294 = vmatprep.subr.bf16.mxu0 0
  %295 = vmatpush1.bf16.msra.mxu0 %v252
  %296 = vmatprep.subr.bf16.mxu0 0
  %297 = vmatpush1.bf16.msra.mxu0 %v253
  %298 = vmatprep.subr.bf16.mxu0 0
  %299 = vmatpush1.bf16.msra.mxu0 %v254
  %300 = vmatprep.subr.bf16.mxu0 0
  %301 = vmatpush1.bf16.msra.mxu0 %v255
  %302 = vmatprep.subr.bf16.mxu0 0
  %303 = vmatpush1.bf16.msra.mxu0 %v256
  %304 = vmatprep.subr.bf16.mxu0 0
  %305 = vmatpush1.bf16.msra.mxu0 %v257
  %306 = vmatprep.mubr.bf16.mxu0 %v78
  %307 = vmatmul.mubr.bf16.gmra.mrb[0].mxu0 %v77
  %v308 = vpop.f32.mrb[0].mxu0
  %v309 = vadd.f32 0.0, %v308
  %v310 = vpop.f32.mrb[0].mxu0
  %v311 = vpop.f32.mrb[0].mxu0
  %v312 = vadd.f32 0.0, %v311
  %v313 = vpop.f32.mrb[0].mxu0
  %314 = vmatprep.mubr.bf16.mxu0 %v80
  %315 = vmatmul.mubr.bf16.gmra.mrb[0].mxu0 %v79
  %v316 = vpop.f32.mrb[0].mxu0
  %v317 = vadd.f32 0.0, %v316
  %v318 = vpop.f32.mrb[0].mxu0
  %v319 = vpop.f32.mrb[0].mxu0
  %v320 = vadd.f32 0.0, %v319
  %v321 = vpop.f32.mrb[0].mxu0
  %322 = vmatprep.mubr.bf16.mxu0 %v82
  %323 = vmatmul.mubr.bf16.gmra.mrb[0].mxu0 %v81
  %v324 = vpop.f32.mrb[0].mxu0
  %v325 = vadd.f32 0.0, %v324
  %v326 = vpop.f32.mrb[0].mxu0
  %v327 = vpop.f32.mrb[0].mxu0
  %v328 = vadd.f32 0.0, %v327
  %v329 = vpop.f32.mrb[0].mxu0
  %330 = vmatprep.mubr.bf16.mxu0 %v84
  %331 = vmatmul.mubr.bf16.gmra.mrb[0].mxu0 %v83
  %v332 = vpop.f32.mrb[0].mxu0
  %v333 = vadd.f32 0.0, %v332
  %v334 = vpop.f32.mrb[0].mxu0
  %v335 = vpop.f32.mrb[0].mxu0
  %v336 = vadd.f32 0.0, %v335
  %v337 = vpop.f32.mrb[0].mxu0
  %338 = vmatprep.mubr.bf16.mxu0 %v86
  %339 = vmatmul.mubr.bf16.gmra.mrb[0].mxu0 %v85
  %v340 = vpop.f32.mrb[0].mxu0
  %v341 = vadd.f32 0.0, %v340
  %v342 = vpop.f32.mrb[0].mxu0
  %v343 = vpop.f32.mrb[0].mxu0
  %v344 = vadd.f32 0.0, %v343
  %v345 = vpop.f32.mrb[0].mxu0
  %346 = vmatprep.mubr.bf16.mxu0 %v88
  %347 = vmatmul.mubr.bf16.gmra.mrb[0].mxu0 %v87
  %v348 = vpop.f32.mrb[0].mxu0
  %v349 = vadd.f32 0.0, %v348
  %v350 = vpop.f32.mrb[0].mxu0
  %v351 = vpop.f32.mrb[0].mxu0
  %v352 = vadd.f32 0.0, %v351
  %v353 = vpop.f32.mrb[0].mxu0
  %354 = vmatprep.mubr.bf16.mxu0 %v90
  %355 = vmatmul.mubr.bf16.gmra.mrb[0].mxu0 %v89
  %v356 = vpop.f32.mrb[0].mxu0
  %v357 = vadd.f32 0.0, %v356
  %v358 = vpop.f32.mrb[0].mxu0
  %v359 = vpop.f32.mrb[0].mxu0
  %v360 = vadd.f32 0.0, %v359
  %v361 = vpop.f32.mrb[0].mxu0
  %362 = vmatprep.mubr.bf16.mxu0 %v92
  %363 = vmatmul.mubr.bf16.gmra.mrb[0].mxu0 %v91
  %v364 = vpop.f32.mrb[0].mxu0
  %v365 = vadd.f32 0.0, %v364
  %v366 = vpop.f32.mrb[0].mxu0
  %v367 = vpop.f32.mrb[0].mxu0
  %v368 = vadd.f32 0.0, %v367
  %v369 = vpop.f32.mrb[0].mxu0
  %370 = vmatprep.mubr.bf16.mxu0 %v94
  %371 = vmatmul.mubr.bf16.gmra.mrb[0].mxu0 %v93
  %v372 = vpop.f32.mrb[0].mxu0
  %v373 = vadd.f32 0.0, %v372
  %v374 = vpop.f32.mrb[0].mxu0
  %v375 = vpop.f32.mrb[0].mxu0
  %v376 = vadd.f32 0.0, %v375
  %v377 = vpop.f32.mrb[0].mxu0
  %378 = vmatprep.mubr.bf16.mxu0 %v96
  %379 = vmatmul.mubr.bf16.gmra.mrb[0].mxu0 %v95
  %v380 = vpop.f32.mrb[0].mxu0
  %v381 = vadd.f32 0.0, %v380
  %v382 = vpop.f32.mrb[0].mxu0
  %v383 = vpop.f32.mrb[0].mxu0
  %v384 = vadd.f32 0.0, %v383
  %v385 = vpop.f32.mrb[0].mxu0
  %386 = vmatprep.mubr.bf16.mxu0 %v98
  %387 = vmatmul.mubr.bf16.gmra.mrb[0].mxu0 %v97
  %v388 = vpop.f32.mrb[0].mxu0
  %v389 = vadd.f32 0.0, %v388
  %v390 = vpop.f32.mrb[0].mxu0
  %v391 = vpop.f32.mrb[0].mxu0
  %v392 = vadd.f32 0.0, %v391
  %v393 = vpop.f32.mrb[0].mxu0
  %394 = vmatprep.mubr.bf16.mxu0 %v100
  %395 = vmatmul.mubr.bf16.gmra.mrb[0].mxu0 %v99
  %v396 = vpop.f32.mrb[0].mxu0
  %v397 = vadd.f32 0.0, %v396
  %v398 = vpop.f32.mrb[0].mxu0
  %v399 = vpop.f32.mrb[0].mxu0
  %v400 = vadd.f32 0.0, %v399
  %v401 = vpop.f32.mrb[0].mxu0
  %402 = vmatprep.mubr.bf16.mxu0 %v102
  %403 = vmatmul.mubr.bf16.gmra.mrb[0].mxu0 %v101
  %v404 = vpop.f32.mrb[0].mxu0
  %v405 = vadd.f32 0.0, %v404
  %v406 = vpop.f32.mrb[0].mxu0
  %v407 = vpop.f32.mrb[0].mxu0
  %v408 = vadd.f32 0.0, %v407
  %v409 = vpop.f32.mrb[0].mxu0
  %410 = vmatprep.mubr.bf16.mxu0 %v104
  %411 = vmatmul.mubr.bf16.gmra.mrb[0].mxu0 %v103
  %v412 = vpop.f32.mrb[0].mxu0
  %v413 = vadd.f32 0.0, %v412
  %v414 = vpop.f32.mrb[0].mxu0
  %v415 = vpop.f32.mrb[0].mxu0
  %v416 = vadd.f32 0.0, %v415
  %v417 = vpop.f32.mrb[0].mxu0
  %418 = vmatprep.mubr.bf16.mxu0 %v106
  %419 = vmatmul.mubr.bf16.gmra.mrb[0].mxu0 %v105
  %v420 = vpop.f32.mrb[0].mxu0
  %v421 = vadd.f32 0.0, %v420
  %v422 = vpop.f32.mrb[0].mxu0
  %v423 = vpop.f32.mrb[0].mxu0
  %v424 = vadd.f32 0.0, %v423
  %v425 = vpop.f32.mrb[0].mxu0
  %426 = vmatprep.mubr.bf16.mxu0 %v108
  %427 = vmatmul.mubr.bf16.gmra.mrb[0].mxu0 %v107
  %v428 = vpop.f32.mrb[0].mxu0
  %v429 = vadd.f32 0.0, %v428
  %v430 = vpop.f32.mrb[0].mxu0
  %v431 = vpop.f32.mrb[0].mxu0
  %v432 = vadd.f32 0.0, %v431
  %v433 = vpop.f32.mrb[0].mxu0
  %434 = vdwg.mxu0
  %v435 = vadd.f32 %v146, %v309
  %v436 = vadd.f32 %v147, %v312
  %v437 = vadd.f32 %v148, %v317
  %v438 = vadd.f32 %v149, %v320
  %v439 = vadd.f32 %v150, %v325
  %v440 = vadd.f32 %v151, %v328
  %v441 = vadd.f32 %v152, %v333
  %v442 = vadd.f32 %v153, %v336
  %v443 = vadd.f32 %v154, %v341
  %v444 = vadd.f32 %v155, %v344
  %v445 = vadd.f32 %v156, %v349
  %v446 = vadd.f32 %v157, %v352
  %v447 = vadd.f32 %v158, %v357
  %v448 = vadd.f32 %v159, %v360
  %v449 = vadd.f32 %v160, %v365
  %v450 = vadd.f32 %v161, %v368
  %v451 = vadd.f32 %v162, %v373
  %v452 = vadd.f32 %v163, %v376
  %v453 = vadd.f32 %v164, %v381
  %v454 = vadd.f32 %v165, %v384
  %v455 = vadd.f32 %v166, %v389
  %v456 = vadd.f32 %v167, %v392
  %v457 = vadd.f32 %v168, %v397
  %v458 = vadd.f32 %v169, %v400
  %v459 = vadd.f32 %v170, %v405
  %v460 = vadd.f32 %v171, %v408
  %v461 = vadd.f32 %v172, %v413
  %v462 = vadd.f32 %v173, %v416
  %v463 = vadd.f32 %v174, %v421
  %v464 = vadd.f32 %v175, %v424
  %v465 = vadd.f32 %v176, %v429
  %v466 = vadd.f32 %v177, %v432
  %467 = vst [vmem:[#allocation2] sm:$0xff] %v435
  %468 = vst [vmem:[#allocation2 + $0x8] sm:$0xff] %v436
  %469 = vst [vmem:[#allocation2 + $0x10] sm:$0xff] %v437
  %470 = vst [vmem:[#allocation2 + $0x18] sm:$0xff] %v438
  %471 = vst [vmem:[#allocation2 + $0x20] sm:$0xff] %v439
  %472 = vst [vmem:[#allocation2 + $0x28] sm:$0xff] %v440
  %473 = vst [vmem:[#allocation2 + $0x30] sm:$0xff] %v441
  %474 = vst [vmem:[#allocation2 + $0x38] sm:$0xff] %v442
  %475 = vst [vmem:[#allocation2 + $0x40] sm:$0xff] %v443
  %476 = vst [vmem:[#allocation2 + $0x48] sm:$0xff] %v444
  %477 = vst [vmem:[#allocation2 + $0x50] sm:$0xff] %v445
  %478 = vst [vmem:[#allocation2 + $0x58] sm:$0xff] %v446
  %479 = vst [vmem:[#allocation2 + $0x60] sm:$0xff] %v447
  %480 = vst [vmem:[#allocation2 + $0x68] sm:$0xff] %v448
  %481 = vst [vmem:[#allocation2 + $0x70] sm:$0xff] %v449
  %482 = vst [vmem:[#allocation2 + $0x78] sm:$0xff] %v450
  %483 = vst [vmem:[#allocation2 + $0x80] sm:$0xff] %v451
  %484 = vst [vmem:[#allocation2 + $0x88] sm:$0xff] %v452
  %485 = vst [vmem:[#allocation2 + $0x90] sm:$0xff] %v453
  %486 = vst [vmem:[#allocation2 + $0x98] sm:$0xff] %v454
  %487 = vst [vmem:[#allocation2 + $0xa0] sm:$0xff] %v455
  %488 = vst [vmem:[#allocation2 + $0xa8] sm:$0xff] %v456
  %489 = vst [vmem:[#allocation2 + $0xb0] sm:$0xff] %v457
  %490 = vst [vmem:[#allocation2 + $0xb8] sm:$0xff] %v458
  %491 = vst [vmem:[#allocation2 + $0xc0] sm:$0xff] %v459
  %492 = vst [vmem:[#allocation2 + $0xc8] sm:$0xff] %v460
  %493 = vst [vmem:[#allocation2 + $0xd0] sm:$0xff] %v461
  %494 = vst [vmem:[#allocation2 + $0xd8] sm:$0xff] %v462
  %495 = vst [vmem:[#allocation2 + $0xe0] sm:$0xff] %v463
  %496 = vst [vmem:[#allocation2 + $0xe8] sm:$0xff] %v464
  %497 = vst [vmem:[#allocation2 + $0xf0] sm:$0xff] %v465
  %498 = vst [vmem:[#allocation2 + $0xf8] sm:$0xff] %v466
  // Predicated region
  $region30: #{predictor_unisage_forward.10} parent=0 // pred_check
    %p499 = pneg %p25
  $region31: #{predictor_unisage_forward.10} parent=0 // pred_check_branch
    %501 = sbr.rel (%p499) target = $region33
  $region32: #{predictor_unisage_forward.10} parent=0 // pred_region
    %v502 = vld [vmem:[%s1] sm:$0xf]
    %v503 = vld [vmem:[%s1 + $0x4] sm:$0xf]
    %v504 = vld [vmem:[%s1 + $0x8] sm:$0xf]
    %v505 = vld [vmem:[%s1 + $0xc] sm:$0xf]
    %v506 = vld [vmem:[%s1 + $0x10] sm:$0xf]
    %v507 = vld [vmem:[%s1 + $0x14] sm:$0xf]
    %v508 = vld [vmem:[%s1 + $0x18] sm:$0xf]
    %v509 = vld [vmem:[%s1 + $0x1c] sm:$0xf]
    %v510 = vld [vmem:[%s1 + $0x20] sm:$0xf]
    %v511 = vld [vmem:[%s1 + $0x24] sm:$0xf]
    %v512 = vld [vmem:[%s1 + $0x28] sm:$0xf]
    %v513 = vld [vmem:[%s1 + $0x2c] sm:$0xf]
    %v514 = vld [vmem:[%s1 + $0x30] sm:$0xf]
    %v515 = vld [vmem:[%s1 + $0x34] sm:$0xf]
    %v516 = vld [vmem:[%s1 + $0x38] sm:$0xf]
    %v517 = vld [vmem:[%s1 + $0x3c] sm:$0xf]
    %v518 = vld [vmem:[%s1 + $0x40] sm:$0xf]
    %v519 = vld [vmem:[%s1 + $0x44] sm:$0xf]
    %v520 = vld [vmem:[%s1 + $0x48] sm:$0xf]
    %v521 = vld [vmem:[%s1 + $0x4c] sm:$0xf]
    %v522 = vld [vmem:[%s1 + $0x50] sm:$0xf]
    %v523 = vld [vmem:[%s1 + $0x54] sm:$0xf]
    %v524 = vld [vmem:[%s1 + $0x58] sm:$0xf]
    %v525 = vld [vmem:[%s1 + $0x5c] sm:$0xf]
    %v526 = vld [vmem:[%s1 + $0x60] sm:$0xf]
    %v527 = vld [vmem:[%s1 + $0x64] sm:$0xf]
    %v528 = vld [vmem:[%s1 + $0x68] sm:$0xf]
    %v529 = vld [vmem:[%s1 + $0x6c] sm:$0xf]
    %v530 = vld [vmem:[%s1 + $0x70] sm:$0xf]
    %v531 = vld [vmem:[%s1 + $0x74] sm:$0xf]
    %v532 = vld [vmem:[%s1 + $0x78] sm:$0xf]
    %v533 = vld [vmem:[%s1 + $0x7c] sm:$0xf]
    %v534 = vunpack.c.l.bf16 %v502
    %v535 = vunpack.c.l.bf16 %v503
    %v536 = vunpack.c.l.bf16 %v504
    %v537 = vunpack.c.l.bf16 %v505
    %v538 = vunpack.c.l.bf16 %v506
    %v539 = vunpack.c.l.bf16 %v507
    %v540 = vunpack.c.l.bf16 %v508
    %v541 = vunpack.c.l.bf16 %v509
    %v542 = vunpack.c.l.bf16 %v510
    %v543 = vunpack.c.l.bf16 %v511
    %v544 = vunpack.c.l.bf16 %v512
    %v545 = vunpack.c.l.bf16 %v513
    %v546 = vunpack.c.l.bf16 %v514
    %v547 = vunpack.c.l.bf16 %v515
    %v548 = vunpack.c.l.bf16 %v516
    %v549 = vunpack.c.l.bf16 %v517
    %v550 = vunpack.c.l.bf16 %v518
    %v551 = vunpack.c.l.bf16 %v519
    %v552 = vunpack.c.l.bf16 %v520
    %v553 = vunpack.c.l.bf16 %v521
    %v554 = vunpack.c.l.bf16 %v522
    %v555 = vunpack.c.l.bf16 %v523
    %v556 = vunpack.c.l.bf16 %v524
    %v557 = vunpack.c.l.bf16 %v525
    %v558 = vunpack.c.l.bf16 %v526
    %v559 = vunpack.c.l.bf16 %v527
    %v560 = vunpack.c.l.bf16 %v528
    %v561 = vunpack.c.l.bf16 %v529
    %v562 = vunpack.c.l.bf16 %v530
    %v563 = vunpack.c.l.bf16 %v531
    %v564 = vunpack.c.l.bf16 %v532
    %v565 = vunpack.c.l.bf16 %v533
    %v566 = vld [vmem:[#allocation2] sm:$0xff]
    %v567 = vld [vmem:[#allocation2 + $0x8] sm:$0xff]
    %v568 = vld [vmem:[#allocation2 + $0x10] sm:$0xff]
    %v569 = vld [vmem:[#allocation2 + $0x18] sm:$0xff]
    %v570 = vld [vmem:[#allocation2 + $0x20] sm:$0xff]
    %v571 = vld [vmem:[#allocation2 + $0x28] sm:$0xff]
    %v572 = vld [vmem:[#allocation2 + $0x30] sm:$0xff]
    %v573 = vld [vmem:[#allocation2 + $0x38] sm:$0xff]
    %v574 = vld [vmem:[#allocation2 + $0x40] sm:$0xff]
    %v575 = vld [vmem:[#allocation2 + $0x48] sm:$0xff]
    %v576 = vld [vmem:[#allocation2 + $0x50] sm:$0xff]
    %v577 = vld [vmem:[#allocation2 + $0x58] sm:$0xff]
    %v578 = vld [vmem:[#allocation2 + $0x60] sm:$0xff]
    %v579 = vld [vmem:[#allocation2 + $0x68] sm:$0xff]
    %v580 = vld [vmem:[#allocation2 + $0x70] sm:$0xff]
    %v581 = vld [vmem:[#allocation2 + $0x78] sm:$0xff]
    %v582 = vld [vmem:[#allocation2 + $0x80] sm:$0xff]
    %v583 = vld [vmem:[#allocation2 + $0x88] sm:$0xff]
    %v584 = vld [vmem:[#allocation2 + $0x90] sm:$0xff]
    %v585 = vld [vmem:[#allocation2 + $0x98] sm:$0xff]
    %v586 = vld [vmem:[#allocation2 + $0xa0] sm:$0xff]
    %v587 = vld [vmem:[#allocation2 + $0xa8] sm:$0xff]
    %v588 = vld [vmem:[#allocation2 + $0xb0] sm:$0xff]
    %v589 = vld [vmem:[#allocation2 + $0xb8] sm:$0xff]
    %v590 = vld [vmem:[#allocation2 + $0xc0] sm:$0xff]
    %v591 = vld [vmem:[#allocation2 + $0xc8] sm:$0xff]
    %v592 = vld [vmem:[#allocation2 + $0xd0] sm:$0xff]
    %v593 = vld [vmem:[#allocation2 + $0xd8] sm:$0xff]
    %v594 = vld [vmem:[#allocation2 + $0xe0] sm:$0xff]
    %v595 = vld [vmem:[#allocation2 + $0xe8] sm:$0xff]
    %v596 = vld [vmem:[#allocation2 + $0xf0] sm:$0xff]
    %v597 = vld [vmem:[#allocation2 + $0xf8] sm:$0xff]
    %v598 = vadd.f32 %v534, %v566
    %v599 = vadd.f32 %v535, %v567
    %v600 = vadd.f32 %v536, %v568
    %v601 = vadd.f32 %v537, %v569
    %v602 = vadd.f32 %v538, %v570
    %v603 = vadd.f32 %v539, %v571
    %v604 = vadd.f32 %v540, %v572
    %v605 = vadd.f32 %v541, %v573
    %v606 = vadd.f32 %v542, %v574
    %v607 = vadd.f32 %v543, %v575
    %v608 = vadd.f32 %v544, %v576
    %v609 = vadd.f32 %v545, %v577
    %v610 = vadd.f32 %v546, %v578
    %v611 = vadd.f32 %v547, %v579
    %v612 = vadd.f32 %v548, %v580
    %v613 = vadd.f32 %v549, %v581
    %v614 = vadd.f32 %v550, %v582
    %v615 = vadd.f32 %v551, %v583
    %v616 = vadd.f32 %v552, %v584
    %v617 = vadd.f32 %v553, %v585
    %v618 = vadd.f32 %v554, %v586
    %v619 = vadd.f32 %v555, %v587
    %v620 = vadd.f32 %v556, %v588
    %v621 = vadd.f32 %v557, %v589
    %v622 = vadd.f32 %v558, %v590
    %v623 = vadd.f32 %v559, %v591
    %v624 = vadd.f32 %v560, %v592
    %v625 = vadd.f32 %v561, %v593
    %v626 = vadd.f32 %v562, %v594
    %v627 = vadd.f32 %v563, %v595
    %v628 = vadd.f32 %v564, %v596
    %v629 = vadd.f32 %v565, %v597
    %v630 = vpack.c.bf16 %v599, %v598
    %v631 = vpack.c.bf16 %v601, %v600
    %v632 = vpack.c.bf16 %v603, %v602
    %v633 = vpack.c.bf16 %v605, %v604
    %v634 = vpack.c.bf16 %v607, %v606
    %v635 = vpack.c.bf16 %v609, %v608
    %v636 = vpack.c.bf16 %v611, %v610
    %v637 = vpack.c.bf16 %v613, %v612
    %v638 = vpack.c.bf16 %v615, %v614
    %v639 = vpack.c.bf16 %v617, %v616
    %v640 = vpack.c.bf16 %v619, %v618
    %v641 = vpack.c.bf16 %v621, %v620
    %v642 = vpack.c.bf16 %v623, %v622
    %v643 = vpack.c.bf16 %v625, %v624
    %v644 = vpack.c.bf16 %v627, %v626
    %v645 = vpack.c.bf16 %v629, %v628
    %v646 = vld [vmem:[%s4] sm:$0xf]
    %v647 = vld [vmem:[%s4 + $0x4] sm:$0xf]
    %v648 = vld [vmem:[%s4 + $0x8] sm:$0xf]
    %v649 = vld [vmem:[%s4 + $0xc] sm:$0xf]
    %v650 = vld [vmem:[%s4 + $0x10] sm:$0xf]
    %v651 = vld [vmem:[%s4 + $0x14] sm:$0xf]
    %v652 = vld [vmem:[%s4 + $0x18] sm:$0xf]
    %v653 = vld [vmem:[%s4 + $0x1c] sm:$0xf]
    %v654 = vld [vmem:[%s4 + $0x20] sm:$0xf]
    %v655 = vld [vmem:[%s4 + $0x24] sm:$0xf]
    %v656 = vld [vmem:[%s4 + $0x28] sm:$0xf]
    %v657 = vld [vmem:[%s4 + $0x2c] sm:$0xf]
    %v658 = vld [vmem:[%s4 + $0x30] sm:$0xf]
    %v659 = vld [vmem:[%s4 + $0x34] sm:$0xf]
    %v660 = vld [vmem:[%s4 + $0x38] sm:$0xf]
    %v661 = vld [vmem:[%s4 + $0x3c] sm:$0xf]
    %v662 = vld [vmem:[%s5] sm:$0x1]
    %v664 = vlaneseq
    %v665 = vshrl.u32 %v664, 7
    %v666 = vsub.s32 0, %v665
    %v667 = vrot.slane %v662, %v666
    %v685 = vunpack.c.l.b16 %v646
    %v686 = vunpack.c.l.b16 %v647
    %v687 = vunpack.c.l.b16 %v648
    %v688 = vunpack.c.l.b16 %v649
    %v689 = vunpack.c.l.b16 %v650
    %v690 = vunpack.c.l.b16 %v651
    %v691 = vunpack.c.l.b16 %v652
    %v692 = vunpack.c.l.b16 %v653
    %v693 = vunpack.c.l.b16 %v654
    %v694 = vunpack.c.l.b16 %v655
    %v695 = vunpack.c.l.b16 %v656
    %v696 = vunpack.c.l.b16 %v657
    %v697 = vunpack.c.l.b16 %v658
    %v698 = vunpack.c.l.b16 %v659
    %v699 = vunpack.c.l.b16 %v660
    %v700 = vunpack.c.l.b16 %v661
    %v701 = vpack.c.b16 %v686, %v685
    %v702 = vpack.c.b16 %v688, %v687
    %v703 = vpack.c.b16 %v690, %v689
    %v704 = vpack.c.b16 %v692, %v691
    %v705 = vpack.c.b16 %v694, %v693
    %v706 = vpack.c.b16 %v696, %v695
    %v707 = vpack.c.b16 %v698, %v697
    %v708 = vpack.c.b16 %v700, %v699
    %717 = vmatprep.subr.bf16.mxu0 0
    %718 = vmatpush1.bf16.msra.mxu0 %v701
    %719 = vmatprep.subr.bf16.mxu0 0
    %720 = vmatpush1.bf16.msra.mxu0 %v702
    %721 = vmatprep.subr.bf16.mxu0 0
    %722 = vmatpush1.bf16.msra.mxu0 %v703
    %723 = vmatprep.subr.bf16.mxu0 0
    %724 = vmatpush1.bf16.msra.mxu0 %v704
    %725 = vmatprep.subr.bf16.mxu0 0
    %726 = vmatpush1.bf16.msra.mxu0 %v705
    %727 = vmatprep.subr.bf16.mxu0 0
    %728 = vmatpush1.bf16.msra.mxu0 %v706
    %729 = vmatprep.subr.bf16.mxu0 0
    %730 = vmatpush1.bf16.msra.mxu0 %v707
    %731 = vmatprep.subr.bf16.mxu0 0
    %732 = vmatpush1.bf16.msra.mxu0 %v708
    %733 = vmatprep.subr.bf16.mxu0 0
    %734 = vmatpush1.bf16.msra.mxu0 0
    %735 = vmatprep.subr.bf16.mxu0 0
    %736 = vmatpush1.bf16.msra.mxu0 0
    %737 = vmatprep.subr.bf16.mxu0 0
    %738 = vmatpush1.bf16.msra.mxu0 0
    %739 = vmatprep.subr.bf16.mxu0 0
    %740 = vmatpush1.bf16.msra.mxu0 0
    %741 = vmatprep.subr.bf16.mxu0 0
    %742 = vmatpush1.bf16.msra.mxu0 0
    %743 = vmatprep.subr.bf16.mxu0 0
    %744 = vmatpush1.bf16.msra.mxu0 0
    %745 = vmatprep.subr.bf16.mxu0 0
    %746 = vmatpush1.bf16.msra.mxu0 0
    %747 = vmatprep.subr.bf16.mxu0 0
    %748 = vmatpush1.bf16.msra.mxu0 0
    %749 = vmatprep.mubr.bf16.mxu0 0
    %750 = vmatmul.mubr.bf16.gmra.mrb[0].mxu0 %v630
    %v751 = vpop.f32.mrb[0].mxu0
    %v752 = vadd.f32 %v667, %v751
    %v753 = vpop.f32.mrb[0].mxu0
    %v754 = vpop.f32.mrb[0].mxu0
    %v755 = vadd.f32 %v667, %v754
    %v756 = vpop.f32.mrb[0].mxu0
    %757 = vmatprep.mubr.bf16.mxu0 0
    %758 = vmatmul.mubr.bf16.gmra.mrb[0].mxu0 %v631
    %v759 = vpop.f32.mrb[0].mxu0
    %v760 = vadd.f32 %v667, %v759
    %v761 = vpop.f32.mrb[0].mxu0
    %v762 = vpop.f32.mrb[0].mxu0
    %v763 = vadd.f32 %v667, %v762
    %v764 = vpop.f32.mrb[0].mxu0
    %765 = vmatprep.mubr.bf16.mxu0 0
    %766 = vmatmul.mubr.bf16.gmra.mrb[0].mxu0 %v632
    %v767 = vpop.f32.mrb[0].mxu0
    %v768 = vadd.f32 %v667, %v767
    %v769 = vpop.f32.mrb[0].mxu0
    %v770 = vpop.f32.mrb[0].mxu0
    %v771 = vadd.f32 %v667, %v770
    %v772 = vpop.f32.mrb[0].mxu0
    %773 = vmatprep.mubr.bf16.mxu0 0
    %774 = vmatmul.mubr.bf16.gmra.mrb[0].mxu0 %v633
    %v775 = vpop.f32.mrb[0].mxu0
    %v776 = vadd.f32 %v667, %v775
    %v777 = vpop.f32.mrb[0].mxu0
    %v778 = vpop.f32.mrb[0].mxu0
    %v779 = vadd.f32 %v667, %v778
    %v780 = vpop.f32.mrb[0].mxu0
    %781 = vmatprep.mubr.bf16.mxu0 0
    %782 = vmatmul.mubr.bf16.gmra.mrb[0].mxu0 %v634
    %v783 = vpop.f32.mrb[0].mxu0
    %v784 = vadd.f32 %v667, %v783
    %v785 = vpop.f32.mrb[0].mxu0
    %v786 = vpop.f32.mrb[0].mxu0
    %v787 = vadd.f32 %v667, %v786
    %v788 = vpop.f32.mrb[0].mxu0
    %789 = vmatprep.mubr.bf16.mxu0 0
    %790 = vmatmul.mubr.bf16.gmra.mrb[0].mxu0 %v635
    %v791 = vpop.f32.mrb[0].mxu0
    %v792 = vadd.f32 %v667, %v791
    %v793 = vpop.f32.mrb[0].mxu0
    %v794 = vpop.f32.mrb[0].mxu0
    %v795 = vadd.f32 %v667, %v794
    %v796 = vpop.f32.mrb[0].mxu0
    %797 = vmatprep.mubr.bf16.mxu0 0
    %798 = vmatmul.mubr.bf16.gmra.mrb[0].mxu0 %v636
    %v799 = vpop.f32.mrb[0].mxu0
    %v800 = vadd.f32 %v667, %v799
    %v801 = vpop.f32.mrb[0].mxu0
    %v802 = vpop.f32.mrb[0].mxu0
    %v803 = vadd.f32 %v667, %v802
    %v804 = vpop.f32.mrb[0].mxu0
    %805 = vmatprep.mubr.bf16.mxu0 0
    %806 = vmatmul.mubr.bf16.gmra.mrb[0].mxu0 %v637
    %v807 = vpop.f32.mrb[0].mxu0
    %v808 = vadd.f32 %v667, %v807
    %v809 = vpop.f32.mrb[0].mxu0
    %v810 = vpop.f32.mrb[0].mxu0
    %v811 = vadd.f32 %v667, %v810
    %v812 = vpop.f32.mrb[0].mxu0
    %813 = vmatprep.mubr.bf16.mxu0 0
    %814 = vmatmul.mubr.bf16.gmra.mrb[0].mxu0 %v638
    %v815 = vpop.f32.mrb[0].mxu0
    %v816 = vadd.f32 %v667, %v815
    %v817 = vpop.f32.mrb[0].mxu0
    %v818 = vpop.f32.mrb[0].mxu0
    %v819 = vadd.f32 %v667, %v818
    %v820 = vpop.f32.mrb[0].mxu0
    %821 = vmatprep.mubr.bf16.mxu0 0
    %822 = vmatmul.mubr.bf16.gmra.mrb[0].mxu0 %v639
    %v823 = vpop.f32.mrb[0].mxu0
    %v824 = vadd.f32 %v667, %v823
    %v825 = vpop.f32.mrb[0].mxu0
    %v826 = vpop.f32.mrb[0].mxu0
    %v827 = vadd.f32 %v667, %v826
    %v828 = vpop.f32.mrb[0].mxu0
    %829 = vmatprep.mubr.bf16.mxu0 0
    %830 = vmatmul.mubr.bf16.gmra.mrb[0].mxu0 %v640
    %v831 = vpop.f32.mrb[0].mxu0
    %v832 = vadd.f32 %v667, %v831
    %v833 = vpop.f32.mrb[0].mxu0
    %v834 = vpop.f32.mrb[0].mxu0
    %v835 = vadd.f32 %v667, %v834
    %v836 = vpop.f32.mrb[0].mxu0
    %837 = vmatprep.mubr.bf16.mxu0 0
    %838 = vmatmul.mubr.bf16.gmra.mrb[0].mxu0 %v641
    %v839 = vpop.f32.mrb[0].mxu0
    %v840 = vadd.f32 %v667, %v839
    %v841 = vpop.f32.mrb[0].mxu0
    %v842 = vpop.f32.mrb[0].mxu0
    %v843 = vadd.f32 %v667, %v842
    %v844 = vpop.f32.mrb[0].mxu0
    %845 = vmatprep.mubr.bf16.mxu0 0
    %846 = vmatmul.mubr.bf16.gmra.mrb[0].mxu0 %v642
    %v847 = vpop.f32.mrb[0].mxu0
    %v848 = vadd.f32 %v667, %v847
    %v849 = vpop.f32.mrb[0].mxu0
    %v850 = vpop.f32.mrb[0].mxu0
    %v851 = vadd.f32 %v667, %v850
    %v852 = vpop.f32.mrb[0].mxu0
    %853 = vmatprep.mubr.bf16.mxu0 0
    %854 = vmatmul.mubr.bf16.gmra.mrb[0].mxu0 %v643
    %v855 = vpop.f32.mrb[0].mxu0
    %v856 = vadd.f32 %v667, %v855
    %v857 = vpop.f32.mrb[0].mxu0
    %v858 = vpop.f32.mrb[0].mxu0
    %v859 = vadd.f32 %v667, %v858
    %v860 = vpop.f32.mrb[0].mxu0
    %861 = vmatprep.mubr.bf16.mxu0 0
    %862 = vmatmul.mubr.bf16.gmra.mrb[0].mxu0 %v644
    %v863 = vpop.f32.mrb[0].mxu0
    %v864 = vadd.f32 %v667, %v863
    %v865 = vpop.f32.mrb[0].mxu0
    %v866 = vpop.f32.mrb[0].mxu0
    %v867 = vadd.f32 %v667, %v866
    %v868 = vpop.f32.mrb[0].mxu0
    %869 = vmatprep.mubr.bf16.mxu0 0
    %870 = vmatmul.mubr.bf16.gmra.mrb[0].mxu0 %v645
    %v871 = vpop.f32.mrb[0].mxu0
    %v872 = vadd.f32 %v667, %v871
    %v873 = vpop.f32.mrb[0].mxu0
    %v874 = vpop.f32.mrb[0].mxu0
    %v875 = vadd.f32 %v667, %v874
    %v876 = vpop.f32.mrb[0].mxu0
    %877 = vdwg.mxu0
    %s878 = sld [smem:[#allocation3]]
    %vm879 = vcmp.gt.f32.partialorder %v752, 0.0
    %vm880 = vcmp.gt.f32.partialorder %v755, 0.0
    %vm881 = vcmp.gt.f32.partialorder %v760, 0.0
    %vm882 = vcmp.gt.f32.partialorder %v763, 0.0
    %vm883 = vcmp.gt.f32.partialorder %v768, 0.0
    %vm884 = vcmp.gt.f32.partialorder %v771, 0.0
    %vm885 = vcmp.gt.f32.partialorder %v776, 0.0
    %vm886 = vcmp.gt.f32.partialorder %v779, 0.0
    %vm887 = vcmp.gt.f32.partialorder %v784, 0.0
    %vm888 = vcmp.gt.f32.partialorder %v787, 0.0
    %vm889 = vcmp.gt.f32.partialorder %v792, 0.0
    %vm890 = vcmp.gt.f32.partialorder %v795, 0.0
    %vm891 = vcmp.gt.f32.partialorder %v800, 0.0
    %vm892 = vcmp.gt.f32.partialorder %v803, 0.0
    %vm893 = vcmp.gt.f32.partialorder %v808, 0.0
    %vm894 = vcmp.gt.f32.partialorder %v811, 0.0
    %vm895 = vcmp.gt.f32.partialorder %v816, 0.0
    %vm896 = vcmp.gt.f32.partialorder %v819, 0.0
    %vm897 = vcmp.gt.f32.partialorder %v824, 0.0
    %vm898 = vcmp.gt.f32.partialorder %v827, 0.0
    %vm899 = vcmp.gt.f32.partialorder %v832, 0.0
    %vm900 = vcmp.gt.f32.partialorder %v835, 0.0
    %vm901 = vcmp.gt.f32.partialorder %v840, 0.0
    %vm902 = vcmp.gt.f32.partialorder %v843, 0.0
    %vm903 = vcmp.gt.f32.partialorder %v848, 0.0
    %vm904 = vcmp.gt.f32.partialorder %v851, 0.0
    %vm905 = vcmp.gt.f32.partialorder %v856, 0.0
    %vm906 = vcmp.gt.f32.partialorder %v859, 0.0
    %vm907 = vcmp.gt.f32.partialorder %v864, 0.0
    %vm908 = vcmp.gt.f32.partialorder %v867, 0.0
    %vm909 = vcmp.gt.f32.partialorder %v872, 0.0
    %vm910 = vcmp.gt.f32.partialorder %v875, 0.0
    %v911 = vstv %s878
    %v912 = vmul.f32 %v911, %v752
    %v913 = vmul.f32 %v911, %v755
    %v914 = vmul.f32 %v911, %v760
    %v915 = vmul.f32 %v911, %v763
    %v916 = vmul.f32 %v911, %v768
    %v917 = vmul.f32 %v911, %v771
    %v918 = vmul.f32 %v911, %v776
    %v919 = vmul.f32 %v911, %v779
    %v920 = vmul.f32 %v911, %v784
    %v921 = vmul.f32 %v911, %v787
    %v922 = vmul.f32 %v911, %v792
    %v923 = vmul.f32 %v911, %v795
    %v924 = vmul.f32 %v911, %v800
    %v925 = vmul.f32 %v911, %v803
    %v926 = vmul.f32 %v911, %v808
    %v927 = vmul.f32 %v911, %v811
    %v928 = vmul.f32 %v911, %v816
    %v929 = vmul.f32 %v911, %v819
    %v930 = vmul.f32 %v911, %v824
    %v931 = vmul.f32 %v911, %v827
    %v932 = vmul.f32 %v911, %v832
    %v933 = vmul.f32 %v911, %v835
    %v934 = vmul.f32 %v911, %v840
    %v935 = vmul.f32 %v911, %v843
    %v936 = vmul.f32 %v911, %v848
    %v937 = vmul.f32 %v911, %v851
    %v938 = vmul.f32 %v911, %v856
    %v939 = vmul.f32 %v911, %v859
    %v940 = vmul.f32 %v911, %v864
    %v941 = vmul.f32 %v911, %v867
    %v942 = vmul.f32 %v911, %v872
    %v943 = vmul.f32 %v911, %v875
    %v944 = vsel %vm879, %v752, %v912
    %v945 = vsel %vm880, %v755, %v913
    %v946 = vsel %vm881, %v760, %v914
    %v947 = vsel %vm882, %v763, %v915
    %v948 = vsel %vm883, %v768, %v916
    %v949 = vsel %vm884, %v771, %v917
    %v950 = vsel %vm885, %v776, %v918
    %v951 = vsel %vm886, %v779, %v919
    %v952 = vsel %vm887, %v784, %v920
    %v953 = vsel %vm888, %v787, %v921
    %v954 = vsel %vm889, %v792, %v922
    %v955 = vsel %vm890, %v795, %v923
    %v956 = vsel %vm891, %v800, %v924
    %v957 = vsel %vm892, %v803, %v925
    %v958 = vsel %vm893, %v808, %v926
    %v959 = vsel %vm894, %v811, %v927
    %v960 = vsel %vm895, %v816, %v928
    %v961 = vsel %vm896, %v819, %v929
    %v962 = vsel %vm897, %v824, %v930
    %v963 = vsel %vm898, %v827, %v931
    %v964 = vsel %vm899, %v832, %v932
    %v965 = vsel %vm900, %v835, %v933
    %v966 = vsel %vm901, %v840, %v934
    %v967 = vsel %vm902, %v843, %v935
    %v968 = vsel %vm903, %v848, %v936
    %v969 = vsel %vm904, %v851, %v937
    %v970 = vsel %vm905, %v856, %v938
    %v971 = vsel %vm906, %v859, %v939
    %v972 = vsel %vm907, %v864, %v940
    %v973 = vsel %vm908, %v867, %v941
    %v974 = vsel %vm909, %v872, %v942
    %v975 = vsel %vm910, %v875, %v943
    %v976 = vpack.c.bf16 %v945, %v944
    %v977 = vpack.c.bf16 %v947, %v946
    %v978 = vpack.c.bf16 %v949, %v948
    %v979 = vpack.c.bf16 %v951, %v950
    %v980 = vpack.c.bf16 %v953, %v952
    %v981 = vpack.c.bf16 %v955, %v954
    %v982 = vpack.c.bf16 %v957, %v956
    %v983 = vpack.c.bf16 %v959, %v958
    %v984 = vpack.c.bf16 %v961, %v960
    %v985 = vpack.c.bf16 %v963, %v962
    %v986 = vpack.c.bf16 %v965, %v964
    %v987 = vpack.c.bf16 %v967, %v966
    %v988 = vpack.c.bf16 %v969, %v968
    %v989 = vpack.c.bf16 %v971, %v970
    %v990 = vpack.c.bf16 %v973, %v972
    %v991 = vpack.c.bf16 %v975, %v974
    %v1008 = vunpack.c.l.b16 %v976
    %v1009 = vunpack.c.h.b16 %v976
    %v1010 = vunpack.c.l.b16 %v977
    %v1011 = vunpack.c.h.b16 %v977
    %v1012 = vunpack.c.l.b16 %v978
    %v1013 = vunpack.c.h.b16 %v978
    %v1014 = vunpack.c.l.b16 %v979
    %v1015 = vunpack.c.h.b16 %v979
    %v1016 = vunpack.c.l.b16 %v980
    %v1017 = vunpack.c.h.b16 %v980
    %v1018 = vunpack.c.l.b16 %v981
    %v1019 = vunpack.c.h.b16 %v981
    %v1020 = vunpack.c.l.b16 %v982
    %v1021 = vunpack.c.h.b16 %v982
    %v1022 = vunpack.c.l.b16 %v983
    %v1023 = vunpack.c.h.b16 %v983
    %v1024 = vunpack.c.l.b16 %v984
    %v1025 = vunpack.c.h.b16 %v984
    %v1026 = vunpack.c.l.b16 %v985
    %v1027 = vunpack.c.h.b16 %v985
    %v1028 = vunpack.c.l.b16 %v986
    %v1029 = vunpack.c.h.b16 %v986
    %v1030 = vunpack.c.l.b16 %v987
    %v1031 = vunpack.c.h.b16 %v987
    %v1032 = vunpack.c.l.b16 %v988
    %v1033 = vunpack.c.h.b16 %v988
    %v1034 = vunpack.c.l.b16 %v989
    %v1035 = vunpack.c.h.b16 %v989
    %v1036 = vunpack.c.l.b16 %v990
    %v1037 = vunpack.c.h.b16 %v990
    %v1038 = vunpack.c.l.b16 %v991
    %v1039 = vunpack.c.h.b16 %v991
    %v1040 = vpack.c.b16 %v1008, %v1008
    %v1041 = vpack.c.b16 %v1009, %v1009
    %v1042 = vpack.c.b16 %v1010, %v1010
    %v1043 = vpack.c.b16 %v1011, %v1011
    %v1044 = vpack.c.b16 %v1012, %v1012
    %v1045 = vpack.c.b16 %v1013, %v1013
    %v1046 = vpack.c.b16 %v1014, %v1014
    %v1047 = vpack.c.b16 %v1015, %v1015
    %v1048 = vpack.c.b16 %v1016, %v1016
    %v1049 = vpack.c.b16 %v1017, %v1017
    %v1050 = vpack.c.b16 %v1018, %v1018
    %v1051 = vpack.c.b16 %v1019, %v1019
    %v1052 = vpack.c.b16 %v1020, %v1020
    %v1053 = vpack.c.b16 %v1021, %v1021
    %v1054 = vpack.c.b16 %v1022, %v1022
    %v1055 = vpack.c.b16 %v1023, %v1023
    %v1056 = vpack.c.b16 %v1024, %v1024
    %v1057 = vpack.c.b16 %v1025, %v1025
    %v1058 = vpack.c.b16 %v1026, %v1026
    %v1059 = vpack.c.b16 %v1027, %v1027
    %v1060 = vpack.c.b16 %v1028, %v1028
    %v1061 = vpack.c.b16 %v1029, %v1029
    %v1062 = vpack.c.b16 %v1030, %v1030
    %v1063 = vpack.c.b16 %v1031, %v1031
    %v1064 = vpack.c.b16 %v1032, %v1032
    %v1065 = vpack.c.b16 %v1033, %v1033
    %v1066 = vpack.c.b16 %v1034, %v1034
    %v1067 = vpack.c.b16 %v1035, %v1035
    %v1068 = vpack.c.b16 %v1036, %v1036
    %v1069 = vpack.c.b16 %v1037, %v1037
    %v1070 = vpack.c.b16 %v1038, %v1038
    %v1071 = vpack.c.b16 %v1039, %v1039
    %1104 = vst [vmem:[%s6] sm:$0xf] %v1040
    %1105 = vst [vmem:[%s6 + $0x4] sm:$0xf] %v1041
    %1106 = vst [vmem:[%s6 + $0x8] sm:$0xf] %v1042
    %1107 = vst [vmem:[%s6 + $0xc] sm:$0xf] %v1043
    %1108 = vst [vmem:[%s6 + $0x10] sm:$0xf] %v1044
    %1109 = vst [vmem:[%s6 + $0x14] sm:$0xf] %v1045
    %1110 = vst [vmem:[%s6 + $0x18] sm:$0xf] %v1046
    %1111 = vst [vmem:[%s6 + $0x1c] sm:$0xf] %v1047
    %1112 = vst [vmem:[%s6 + $0x20] sm:$0xf] %v1048
    %1113 = vst [vmem:[%s6 + $0x24] sm:$0xf] %v1049
    %1114 = vst [vmem:[%s6 + $0x28] sm:$0xf] %v1050
    %1115 = vst [vmem:[%s6 + $0x2c] sm:$0xf] %v1051
    %1116 = vst [vmem:[%s6 + $0x30] sm:$0xf] %v1052
    %1117 = vst [vmem:[%s6 + $0x34] sm:$0xf] %v1053
    %1118 = vst [vmem:[%s6 + $0x38] sm:$0xf] %v1054
    %1119 = vst [vmem:[%s6 + $0x3c] sm:$0xf] %v1055
    %1120 = vst [vmem:[%s6 + $0x40] sm:$0xf] %v1056
    %1121 = vst [vmem:[%s6 + $0x44] sm:$0xf] %v1057
    %1122 = vst [vmem:[%s6 + $0x48] sm:$0xf] %v1058
    %1123 = vst [vmem:[%s6 + $0x4c] sm:$0xf] %v1059
    %1124 = vst [vmem:[%s6 + $0x50] sm:$0xf] %v1060
    %1125 = vst [vmem:[%s6 + $0x54] sm:$0xf] %v1061
    %1126 = vst [vmem:[%s6 + $0x58] sm:$0xf] %v1062
    %1127 = vst [vmem:[%s6 + $0x5c] sm:$0xf] %v1063
    %1128 = vst [vmem:[%s6 + $0x60] sm:$0xf] %v1064
    %1129 = vst [vmem:[%s6 + $0x64] sm:$0xf] %v1065
    %1130 = vst [vmem:[%s6 + $0x68] sm:$0xf] %v1066
    %1131 = vst [vmem:[%s6 + $0x6c] sm:$0xf] %v1067
    %1132 = vst [vmem:[%s6 + $0x70] sm:$0xf] %v1068
    %1133 = vst [vmem:[%s6 + $0x74] sm:$0xf] %v1069
    %1134 = vst [vmem:[%s6 + $0x78] sm:$0xf] %v1070
    %1135 = vst [vmem:[%s6 + $0x7c] sm:$0xf] %v1071
  $region33: #{predictor_unisage_forward.10} parent=0 // pred_fallthru
    _
  // Predicated region
  $region34: #{predictor_unisage_forward.10} parent=0 // pred_check
    _
  $region35: #{predictor_unisage_forward.10} parent=0 // pred_check_branch
    %1137 = sbr.rel (0) target = $region37
  $region36: #{predictor_unisage_forward.10} parent=0 // pred_region
    _
  $region37: #{predictor_unisage_forward.10} parent=0 // pred_fallthru
    _
  // Predicated region
  $region38: #{predictor_unisage_forward.10} parent=0 // pred_check
    _
  $region39: #{predictor_unisage_forward.10} parent=0 // pred_check_branch
    %1139 = sbr.rel (0) target = $region41
  $region40: #{predictor_unisage_forward.10} parent=0 // pred_region
    _
  $region41: #{predictor_unisage_forward.10} parent=0 // pred_fallthru
    _

</llo_original>
